<compile_context>
chip_gen: v7x
topology: tpu7x:2x2x1
jax: 0.10.0
libtpu: 0.0.40
codegen_flags: <defaults>
</compile_context>

<pallas_src>
import functools

import jax
import jax.numpy as jnp
import numpy as np
from jax import lax
from jax.experimental import pallas as pl
from jax.experimental.pallas import tpu as pltpu

BN_EPS = 1e-5


# ------------------------------- kernels ----------------------------------- #

def _make_layer_kernel(transposed, has_in_affine, is_final, out_dtype):
    """One (transposed-)conv layer on a single image.

    Y = sum_{k=0..2} S_k @ relu(A*scale + shift) @ M_k, where the W taps /
    stride / padding / channel mixing live in M and the H taps / stride /
    padding in the 0/1 matrices S.  ConvTranspose is expressed in scatter form
    (no zero-dilated input is ever materialized).

    BN layers:   outputs Y (pre-BN, f32) plus per-lane sum / sum-of-squares
                 rows; the cross-image reduction happens outside and the
                 affine + ReLU is fused into the next layer's kernel.
    Final layer: outputs sigmoid(Y + bias).
    """

    def kernel(*refs):
        i = 0
        a_ref = refs[i]; i += 1          # (1, Hi, Wi*Ci)     f32
        s_ref = refs[i]; i += 1          # (3, Ho, Hi)        bf16
        m_ref = refs[i]; i += 1          # (3, Wi*Ci, Wo*Co)  bf16
        if has_in_affine:
            scale_ref = refs[i]; i += 1  # (1, Wi*Ci) f32
            shift_ref = refs[i]; i += 1  # (1, Wi*Ci) f32
        if is_final:
            bias_ref = refs[i]; i += 1   # (1, Wo*Co) f32
            y_ref = refs[i]              # (1, Ho, Wo*Co)
        else:
            y_ref = refs[i]; i += 1      # (1, Ho, Wo*Co)
            stats_ref = refs[i]          # (1, 8, Wo*Co) f32

        a = a_ref[0].astype(jnp.float32)
        if has_in_affine:
            # Previous layer's BatchNorm affine + ReLU, fused here (f32 math).
            a = jnp.maximum(a * scale_ref[...] + shift_ref[...], 0.0)
        a16 = a.astype(jnp.bfloat16)

        acc = None
        for k in range(3):               # 3 H-taps
            if transposed:
                # Upsampling: A @ M_k first -> smaller intermediate.
                t = jnp.dot(a16, m_ref[k], preferred_element_type=jnp.float32)
                yk = jnp.dot(s_ref[k], t.astype(jnp.bfloat16),
                             preferred_element_type=jnp.float32)
            else:
                # Downsampling: S_k @ A first -> smaller intermediate.
                t = jnp.dot(s_ref[k], a16, preferred_element_type=jnp.float32)
                yk = jnp.dot(t.astype(jnp.bfloat16), m_ref[k],
                             preferred_element_type=jnp.float32)
            acc = yk if acc is None else acc + yk

        if is_final:
            y_ref[0] = jax.nn.sigmoid(acc + bias_ref[...]).astype(out_dtype)
        else:
            y_ref[0] = acc.astype(out_dtype)
            # Per-image BN partial statistics, one pass over acc (f32).
            lane_sum = jnp.sum(acc, axis=0, keepdims=True)        # (1, Wo*Co)
            lane_sq = jnp.sum(acc * acc, axis=0, keepdims=True)   # (1, Wo*Co)
            row = lax.broadcasted_iota(jnp.int32, (8, acc.shape[1]), 0)
            stats_ref[0] = jnp.where(row == 0, lane_sum,
                                     jnp.where(row == 1, lane_sq, 0.0))

    return kernel


# --------------------------- host-side builders ----------------------------- #

def _sandwich_mats(w, hin, hout, transposed):
    """Per-image H-tap matrices S (3, Ho, Hi) and W/channel mixing matrices
    M (3, Wi*Ci, Wo*Co) for 3x3 stride-2 pad-1 conv / convT (output_padding=1).
    Returned in bf16 (MXU operands)."""
    if transposed:
        cin, cout = int(w.shape[0]), int(w.shape[1])
        wk = jnp.transpose(w, (2, 3, 0, 1))            # (ki, kj, cin, cout)
    else:
        cout, cin = int(w.shape[0]), int(w.shape[1])
        wk = jnp.transpose(w, (2, 3, 1, 0))            # (ki, kj, cin, cout)
    win, wout = hin, hout

    s = np.zeros((3, hout, hin), np.float32)
    t = np.zeros((win, wout, 3), np.float32)
    for k in range(3):
        if transposed:                                  # out = 2*in + k - 1
            for hi in range(hin):
                ho = 2 * hi + k - 1
                if 0 <= ho < hout:
                    s[k, ho, hi] = 1.0
        else:                                           # in = 2*out + k - 1
            for ho in range(hout):
                hi = 2 * ho + k - 1
                if 0 <= hi < hin:
                    s[k, ho, hi] = 1.0
    for kj in range(3):
        if transposed:
            for wi in range(win):
                wo = 2 * wi + kj - 1
                if 0 <= wo < wout:
                    t[wi, wo, kj] = 1.0
        else:
            for wo in range(wout):
                wi = 2 * wo + kj - 1
                if 0 <= wi < win:
                    t[wi, wo, kj] = 1.0

    # M_k[(wi,ci),(wo,co)] = sum_kj T[wi,wo,kj] * W[k,kj,ci,co]
    m = jnp.einsum('iok,xkcd->xicod', t, wk).reshape(3, win * cin, wout * cout)
    return jnp.asarray(s, jnp.bfloat16), m.astype(jnp.bfloat16)


def _bn_scale_shift(stats, gamma, beta, n, hout, cout):
    """Cross-image reduction of per-image BN partials (tiny, plain JAX) and
    folding of BatchNorm into a per-lane scale/shift for the next kernel."""
    lane_sum = stats[:, 0, :].reshape(n, hout, cout).sum(axis=(0, 1))
    lane_sq = stats[:, 1, :].reshape(n, hout, cout).sum(axis=(0, 1))
    cnt = float(n * hout * hout)                        # N * Ho * Wo (square)
    mean = lane_sum / cnt
    var = jnp.maximum(lane_sq / cnt - mean * mean, 0.0)  # single-pass variance
    scale = gamma * lax.rsqrt(var + BN_EPS)
    shift = beta - mean * scale
    # Pack over the next layer's (wi, ci) lane layout (wi-major).
    return (jnp.tile(scale, hout).reshape(1, hout * cout),
            jnp.tile(shift, hout).reshape(1, hout * cout))


def _nbytes(shape, dtype):
    return int(np.prod(shape)) * np.dtype(dtype).itemsize


def _conv_layer(a, s, m, scale_p, shift_p, bias_p, *, transposed, n, hin, hout,
                k_in, k_out, emit_stats):
    has_affine = scale_p is not None
    kernel = _make_layer_kernel(transposed, has_affine, not emit_stats,
                                jnp.float32)

    inputs = [a, s, m]
    in_specs = [
        pl.BlockSpec((1, hin, k_in), lambda b: (b, 0, 0)),
        pl.BlockSpec((3, hout, hin), lambda b: (0, 0, 0)),
        pl.BlockSpec((3, k_in, k_out), lambda b: (0, 0, 0)),
    ]
    blocks = [((1, hin, k_in), a.dtype), ((3, hout, hin), jnp.bfloat16),
              ((3, k_in, k_out), jnp.bfloat16)]
    if has_affine:
        inputs += [scale_p, shift_p]
        in_specs += [pl.BlockSpec((1, k_in), lambda b: (0, 0)),
                     pl.BlockSpec((1, k_in), lambda b: (0, 0))]
        blocks += [((1, k_in), jnp.float32)] * 2
    if emit_stats:
        out_shape = (jax.ShapeDtypeStruct((n, hout, k_out), jnp.float32),
                     jax.ShapeDtypeStruct((n, 8, k_out), jnp.float32))
        out_specs = (pl.BlockSpec((1, hout, k_out), lambda b: (b, 0, 0)),
                     pl.BlockSpec((1, 8, k_out), lambda b: (b, 0, 0)))
        blocks += [((1, hout, k_out), jnp.float32), ((1, 8, k_out), jnp.float32)]
    else:
        inputs.append(bias_p)
        in_specs.append(pl.BlockSpec((1, k_out), lambda b: (0, 0)))
        out_shape = jax.ShapeDtypeStruct((n, hout, k_out), jnp.float32)
        out_specs = pl.BlockSpec((1, hout, k_out), lambda b: (b, 0, 0))
        blocks += [((1, k_out), jnp.float32), ((1, hout, k_out), jnp.float32)]

    # Double-buffered blocks + headroom for in-kernel temporaries; stays well
    # under the 64 MiB/TC VMEM of v7x.
    block_bytes = sum(_nbytes(shp, dt) for shp, dt in blocks)
    vmem_limit = int(min(max(4 * block_bytes + (2 << 20), 8 << 20), 48 << 20))

    return pl.pallas_call(
        kernel,
        out_shape=out_shape,
        grid=(n,),
        in_specs=in_specs,
        out_specs=out_specs,
        compiler_params=pltpu.CompilerParams(
            dimension_semantics=("parallel",),   # batch axis -> both TCs on v7x
            vmem_limit_bytes=vmem_limit),
    )(*inputs)


# ------------------------------ Model forward ------------------------------ #

def autoencoder_forward(params, x):
    n, cin, h, w = x.shape
    assert cin == 1 and h == w and h % 8 == 0
    defs = (
        # (weight key, is_transposed, H_in, H_out, bn key or None)
        ("e1_w", False, h,      h // 2, "bn_e1"),
        ("e2_w", False, h // 2, h // 4, "bn_e2"),
        ("e3_w", False, h // 4, h // 8, "bn_e3"),
        ("d1_w", True,  h // 8, h // 4, "bn_d1"),
        ("d2_w", True,  h // 4, h // 2, "bn_d2"),
        ("d3_w", True,  h // 2, h,      None),
    )

    # Boundary layout change: NCHW -> (N, H, W*C) (rows = H, lanes = (w, c)).
    a = x.transpose(0, 2, 3, 1).reshape(n, h, w * cin).astype(jnp.float32)

    scale_p = shift_p = None
    hout = cout = None
    for wkey, transposed, hin, hout, bnkey in defs:
        wgt = params[wkey]
        if transposed:
            cin_l, cout = int(wgt.shape[0]), int(wgt.shape[1])
        else:
            cout, cin_l = int(wgt.shape[0]), int(wgt.shape[1])
        s, m = _sandwich_mats(wgt, hin, hout, transposed)
        k_in, k_out = hin * cin_l, hout * cout
        if bnkey is not None:
            # NOTE: conv bias intentionally dropped -- exactly cancelled by the
            # training-mode BatchNorm mean subtraction.
            a, stats = _conv_layer(a, s, m, scale_p, shift_p, None,
                                   transposed=transposed, n=n, hin=hin,
                                   hout=hout, k_in=k_in, k_out=k_out,
                                   emit_stats=True)
            scale_p, shift_p = _bn_scale_shift(
                stats, params[bnkey + "_g"], params[bnkey + "_b"],
                n, hout, cout)
        else:
            bias_p = jnp.tile(params[wkey.replace("_w", "_b")],
                              hout).reshape(1, k_out)
            a = _conv_layer(a, s, m, scale_p, shift_p, bias_p,
                            transposed=transposed, n=n, hin=hin, hout=hout,
                            k_in=k_in, k_out=k_out, emit_stats=False)

    # Boundary conversion back to NCHW.
    return a.reshape(n, hout, hout, cout).transpose(0, 3, 1, 2)


# ------------------------------ Parameter init ----------------------------- #

def init_params(key):
    ks = jax.random.split(key, 24)
    ki = iter(range(24))

    def uni(k, shape, fan_in):
        bound = 1.0 / (fan_in ** 0.5)
        return jax.random.uniform(k, shape, jnp.float32, -bound, bound)

    p = {}
    # Encoder conv weights: (Cout, Cin, 3, 3)
    p["e1_w"] = uni(ks[next(ki)], (16, 1, 3, 3), 1 * 9)
    p["e1_b"] = uni(ks[next(ki)], (16,), 1 * 9)
    p["e2_w"] = uni(ks[next(ki)], (32, 16, 3, 3), 16 * 9)
    p["e2_b"] = uni(ks[next(ki)], (32,), 16 * 9)
    p["e3_w"] = uni(ks[next(ki)], (64, 32, 3, 3), 32 * 9)
    p["e3_b"] = uni(ks[next(ki)], (64,), 32 * 9)
    # Decoder ConvTranspose weights: (Cin, Cout, 3, 3)
    p["d1_w"] = uni(ks[next(ki)], (64, 32, 3, 3), 32 * 9)
    p["d1_b"] = uni(ks[next(ki)], (32,), 32 * 9)
    p["d2_w"] = uni(ks[next(ki)], (32, 16, 3, 3), 16 * 9)
    p["d2_b"] = uni(ks[next(ki)], (16,), 16 * 9)
    p["d3_w"] = uni(ks[next(ki)], (16, 1, 3, 3), 1 * 9)
    p["d3_b"] = uni(ks[next(ki)], (1,), 1 * 9)
    # BatchNorm affine params (deterministic, slightly perturbed from 1/0).
    for name, c in (("bn_e1", 16), ("bn_e2", 32), ("bn_e3", 64),
                    ("bn_d1", 32), ("bn_d2", 16)):
        p[name + "_g"] = 1.0 + 0.1 * jax.random.normal(ks[next(ki)], (c,), jnp.float32)
        p[name + "_b"] = 0.1 * jax.random.normal(ks[next(ki)], (c,), jnp.float32)
    return p


# ---------------------------------- main ------------------------------------ #

if __name__ == "__main__":
    key = jax.random.PRNGKey(0)
    pkey, xkey = jax.random.split(key)
    params = init_params(pkey)

    # Small MNIST-like input: batch=2, 1 channel, 16x16 spatial (NCHW).
    x = jax.random.uniform(xkey, (2, 1, 16, 16), jnp.float32)

    fwd = jax.jit(functools.partial(autoencoder_forward, params))
    y = fwd(x)
    jax.block_until_ready(y)

    assert y.shape == (2, 1, 16, 16), y.shape
    assert y.dtype == jnp.float32
    assert bool(jnp.all((y >= 0.0) & (y <= 1.0)))  # sigmoid output range
    print("KERNEL_OK")
</pallas_src>

<mosaic_0001>
module attributes {stable_mosaic.version = 11 : i64} {
  func.func @kernel(%arg0: i32, %arg1: memref<1x16x16xf32, #tpu.memory_space<vmem>>, %arg2: memref<3x8x16xbf16, #tpu.memory_space<vmem>>, %arg3: memref<3x16x128xbf16, #tpu.memory_space<vmem>>, %arg4: memref<1x8x128xf32, #tpu.memory_space<vmem>>, %arg5: memref<1x8x128xf32, #tpu.memory_space<vmem>>) attributes {dimension_semantics = [#tpu.dimension_semantics<parallel>], iteration_bounds = array<i64: 2>, scalar_prefetch = 0 : i64, scratch_operands = 0 : i64, tpu.core_type = #tpu.core_type<tc>, window_params = [{transform_indices = @transform_0, window_bounds = array<i64: 1, 16, 16>}, {pipeline_mode = #tpu.pipeline_mode<synchronous>, transform_indices = @transform_1, window_bounds = array<i64: 3, 8, 16>}, {pipeline_mode = #tpu.pipeline_mode<synchronous>, transform_indices = @transform_2, window_bounds = array<i64: 3, 16, 128>}, {transform_indices = @transform_3, window_bounds = array<i64: 1, 8, 128>}, {transform_indices = @transform_4, window_bounds = array<i64: 1, 8, 128>}]} {
    %c0 = arith.constant 0 : index
    %c0_0 = arith.constant 0 : index
    %c0_1 = arith.constant 0 : index
    %0 = vector.load %arg1[%c0, %c0_0, %c0_1] : memref<1x16x16xf32, #tpu.memory_space<vmem>>, vector<1x16x16xf32>
    %1 = vector.shape_cast %0 : vector<1x16x16xf32> to vector<16x16xf32>
    %2 = arith.truncf %1 : vector<16x16xf32> to vector<16x16xbf16>
    %c0_2 = arith.constant 0 : index
    %c0_3 = arith.constant 0 : index
    %c0_4 = arith.constant 0 : index
    %3 = vector.load %arg2[%c0_2, %c0_3, %c0_4] : memref<3x8x16xbf16, #tpu.memory_space<vmem>>, vector<1x8x16xbf16>
    %4 = vector.shape_cast %3 : vector<1x8x16xbf16> to vector<8x16xbf16>
    %cst = arith.constant dense<0.000000e+00> : vector<8x16xf32>
    %5 = tpu.matmul %4, %2, %cst {dimension_numbers = #tpu.dot_dimension_numbers<[1], [0], [0], [1], [0, 0, 1, 1], [], []>} : vector<8x16xbf16>, vector<16x16xbf16>, vector<8x16xf32> -> vector<8x16xf32>
    %6 = arith.truncf %5 : vector<8x16xf32> to vector<8x16xbf16>
    %c0_5 = arith.constant 0 : index
    %c0_6 = arith.constant 0 : index
    %c0_7 = arith.constant 0 : index
    %7 = vector.load %arg3[%c0_5, %c0_6, %c0_7] : memref<3x16x128xbf16, #tpu.memory_space<vmem>>, vector<1x16x128xbf16>
    %8 = vector.shape_cast %7 : vector<1x16x128xbf16> to vector<16x128xbf16>
    %cst_8 = arith.constant dense<0.000000e+00> : vector<8x128xf32>
    %9 = tpu.matmul %6, %8, %cst_8 {dimension_numbers = #tpu.dot_dimension_numbers<[1], [0], [0], [1], [0, 0, 1, 1], [], []>} : vector<8x16xbf16>, vector<16x128xbf16>, vector<8x128xf32> -> vector<8x128xf32>
    %c1 = arith.constant 1 : index
    %c0_9 = arith.constant 0 : index
    %c0_10 = arith.constant 0 : index
    %10 = vector.load %arg2[%c1, %c0_9, %c0_10] : memref<3x8x16xbf16, #tpu.memory_space<vmem>>, vector<1x8x16xbf16>
    %11 = vector.shape_cast %10 : vector<1x8x16xbf16> to vector<8x16xbf16>
    %cst_11 = arith.constant dense<0.000000e+00> : vector<8x16xf32>
    %12 = tpu.matmul %11, %2, %cst_11 {dimension_numbers = #tpu.dot_dimension_numbers<[1], [0], [0], [1], [0, 0, 1, 1], [], []>} : vector<8x16xbf16>, vector<16x16xbf16>, vector<8x16xf32> -> vector<8x16xf32>
    %13 = arith.truncf %12 : vector<8x16xf32> to vector<8x16xbf16>
    %c1_12 = arith.constant 1 : index
    %c0_13 = arith.constant 0 : index
    %c0_14 = arith.constant 0 : index
    %14 = vector.load %arg3[%c1_12, %c0_13, %c0_14] : memref<3x16x128xbf16, #tpu.memory_space<vmem>>, vector<1x16x128xbf16>
    %15 = vector.shape_cast %14 : vector<1x16x128xbf16> to vector<16x128xbf16>
    %cst_15 = arith.constant dense<0.000000e+00> : vector<8x128xf32>
    %16 = tpu.matmul %13, %15, %cst_15 {dimension_numbers = #tpu.dot_dimension_numbers<[1], [0], [0], [1], [0, 0, 1, 1], [], []>} : vector<8x16xbf16>, vector<16x128xbf16>, vector<8x128xf32> -> vector<8x128xf32>
    %17 = arith.addf %9, %16 : vector<8x128xf32>
    %c2 = arith.constant 2 : index
    %c0_16 = arith.constant 0 : index
    %c0_17 = arith.constant 0 : index
    %18 = vector.load %arg2[%c2, %c0_16, %c0_17] : memref<3x8x16xbf16, #tpu.memory_space<vmem>>, vector<1x8x16xbf16>
    %19 = vector.shape_cast %18 : vector<1x8x16xbf16> to vector<8x16xbf16>
    %cst_18 = arith.constant dense<0.000000e+00> : vector<8x16xf32>
    %20 = tpu.matmul %19, %2, %cst_18 {dimension_numbers = #tpu.dot_dimension_numbers<[1], [0], [0], [1], [0, 0, 1, 1], [], []>} : vector<8x16xbf16>, vector<16x16xbf16>, vector<8x16xf32> -> vector<8x16xf32>
    %21 = arith.truncf %20 : vector<8x16xf32> to vector<8x16xbf16>
    %c2_19 = arith.constant 2 : index
    %c0_20 = arith.constant 0 : index
    %c0_21 = arith.constant 0 : index
    %22 = vector.load %arg3[%c2_19, %c0_20, %c0_21] : memref<3x16x128xbf16, #tpu.memory_space<vmem>>, vector<1x16x128xbf16>
    %23 = vector.shape_cast %22 : vector<1x16x128xbf16> to vector<16x128xbf16>
    %cst_22 = arith.constant dense<0.000000e+00> : vector<8x128xf32>
    %24 = tpu.matmul %21, %23, %cst_22 {dimension_numbers = #tpu.dot_dimension_numbers<[1], [0], [0], [1], [0, 0, 1, 1], [], []>} : vector<8x16xbf16>, vector<16x128xbf16>, vector<8x128xf32> -> vector<8x128xf32>
    %25 = arith.addf %17, %24 : vector<8x128xf32>
    %c0_23 = arith.constant 0 : index
    %c0_24 = arith.constant 0 : index
    %c0_25 = arith.constant 0 : index
    %26 = vector.load %arg4[%c0_23, %c0_24, %c0_25] : memref<1x8x128xf32, #tpu.memory_space<vmem>>, vector<1x8x128xf32>
    %27 = vector.shape_cast %26 : vector<1x8x128xf32> to vector<8x128xf32>
    %28 = vector.shape_cast %25 : vector<8x128xf32> to vector<1x8x128xf32>
    tpu.vector_store %arg4[%c0_23, %c0_24, %c0_25], %28 {strides = array<i32>} : memref<1x8x128xf32, #tpu.memory_space<vmem>>, vector<1x8x128xf32>,
    %cst_26 = arith.constant dense<0.000000e+00> : vector<128xf32>
    %29 = vector.multi_reduction <add>, %25, %cst_26 [0] : vector<8x128xf32> to vector<128xf32>
    %30 = vector.shape_cast %29 : vector<128xf32> to vector<1x128xf32>
    %31 = arith.mulf %25, %25 : vector<8x128xf32>
    %cst_27 = arith.constant dense<0.000000e+00> : vector<128xf32>
    %32 = vector.multi_reduction <add>, %31, %cst_27 [0] : vector<8x128xf32> to vector<128xf32>
    %33 = vector.shape_cast %32 : vector<128xf32> to vector<1x128xf32>
    %34 = tpu.iota {dimensions = array<i32: 0>} : vector<8x128xi32>
    %c0_i32 = arith.constant 0 : i32
    %35 = vector.broadcast %c0_i32 : i32 to vector<8x128xi32>
    %36 = arith.cmpi eq, %34, %35 : vector<8x128xi32>
    %c1_i32 = arith.constant 1 : i32
    %37 = vector.broadcast %c1_i32 : i32 to vector<8x128xi32>
    %38 = arith.cmpi eq, %34, %37 : vector<8x128xi32>
    %cst_28 = arith.constant 0.000000e+00 : f32
    %39 = vector.shape_cast %33 : vector<1x128xf32> to vector<1x128xf32>
    %40 = vector.broadcast %39 : vector<1x128xf32> to vector<8x128xf32>
    %41 = vector.broadcast %cst_28 : f32 to vector<8x128xf32>
    %42 = arith.select %38, %40, %41 : vector<8x128xi1>, vector<8x128xf32>
    %43 = vector.shape_cast %30 : vector<1x128xf32> to vector<1x128xf32>
    %44 = vector.broadcast %43 : vector<1x128xf32> to vector<8x128xf32>
    %45 = arith.select %36, %44, %42 : vector<8x128xi1>, vector<8x128xf32>
    %c0_29 = arith.constant 0 : index
    %c0_30 = arith.constant 0 : index
    %c0_31 = arith.constant 0 : index
    %46 = vector.load %arg5[%c0_29, %c0_30, %c0_31] : memref<1x8x128xf32, #tpu.memory_space<vmem>>, vector<1x8x128xf32>
    %47 = vector.shape_cast %46 : vector<1x8x128xf32> to vector<8x128xf32>
    %48 = vector.shape_cast %45 : vector<8x128xf32> to vector<1x8x128xf32>
    tpu.vector_store %arg5[%c0_29, %c0_30, %c0_31], %48 {strides = array<i32>} : memref<1x8x128xf32, #tpu.memory_space<vmem>>, vector<1x8x128xf32>,
    return
  }
  func.func @transform_0(%arg0: i32) -> (i32, i32, i32) {
    %c0_i32 = arith.constant 0 : i32
    %c0_i32_0 = arith.constant 0 : i32
    %c0_i32_1 = arith.constant 0 : i32
    return %arg0, %c0_i32, %c0_i32_0 : i32, i32, i32
  }
  func.func @transform_1(%arg0: i32) -> (i32, i32, i32) {
    %c0_i32 = arith.constant 0 : i32
    %c0_i32_0 = arith.constant 0 : i32
    %c0_i32_1 = arith.constant 0 : i32
    %c0_i32_2 = arith.constant 0 : i32
    return %c0_i32, %c0_i32_0, %c0_i32_1 : i32, i32, i32
  }
  func.func @transform_2(%arg0: i32) -> (i32, i32, i32) {
    %c0_i32 = arith.constant 0 : i32
    %c0_i32_0 = arith.constant 0 : i32
    %c0_i32_1 = arith.constant 0 : i32
    %c0_i32_2 = arith.constant 0 : i32
    return %c0_i32, %c0_i32_0, %c0_i32_1 : i32, i32, i32
  }
  func.func @transform_3(%arg0: i32) -> (i32, i32, i32) {
    %c0_i32 = arith.constant 0 : i32
    %c0_i32_0 = arith.constant 0 : i32
    %c0_i32_1 = arith.constant 0 : i32
    return %arg0, %c0_i32, %c0_i32_0 : i32, i32, i32
  }
  func.func @transform_4(%arg0: i32) -> (i32, i32, i32) {
    %c0_i32 = arith.constant 0 : i32
    %c0_i32_0 = arith.constant 0 : i32
    %c0_i32_1 = arith.constant 0 : i32
    return %arg0, %c0_i32, %c0_i32_0 : i32, i32, i32
  }
}

module attributes {stable_mosaic.version = 11 : i64} {
  func.func @kernel(%arg0: i32, %arg1: memref<1x8x128xf32, #tpu.memory_space<vmem>>, %arg2: memref<3x4x8xbf16, #tpu.memory_space<vmem>>, %arg3: memref<3x128x128xbf16, #tpu.memory_space<vmem>>, %arg4: memref<1x128xf32, #tpu.memory_space<vmem>>, %arg5: memref<1x128xf32, #tpu.memory_space<vmem>>, %arg6: memref<1x4x128xf32, #tpu.memory_space<vmem>>, %arg7: memref<1x8x128xf32, #tpu.memory_space<vmem>>) attributes {dimension_semantics = [#tpu.dimension_semantics<parallel>], iteration_bounds = array<i64: 2>, scalar_prefetch = 0 : i64, scratch_operands = 0 : i64, tpu.core_type = #tpu.core_type<tc>, window_params = [{transform_indices = @transform_0, window_bounds = array<i64: 1, 8, 128>}, {pipeline_mode = #tpu.pipeline_mode<synchronous>, transform_indices = @transform_1, window_bounds = array<i64: 3, 4, 8>}, {pipeline_mode = #tpu.pipeline_mode<synchronous>, transform_indices = @transform_2, window_bounds = array<i64: 3, 128, 128>}, {pipeline_mode = #tpu.pipeline_mode<synchronous>, transform_indices = @transform_3, window_bounds = array<i64: 1, 128>}, {pipeline_mode = #tpu.pipeline_mode<synchronous>, transform_indices = @transform_4, window_bounds = array<i64: 1, 128>}, {transform_indices = @transform_5, window_bounds = array<i64: 1, 4, 128>}, {transform_indices = @transform_6, window_bounds = array<i64: 1, 8, 128>}]} {
    %c0 = arith.constant 0 : index
    %c0_0 = arith.constant 0 : index
    %c0_1 = arith.constant 0 : index
    %0 = vector.load %arg1[%c0, %c0_0, %c0_1] : memref<1x8x128xf32, #tpu.memory_space<vmem>>, vector<1x8x128xf32>
    %1 = vector.shape_cast %0 : vector<1x8x128xf32> to vector<8x128xf32>
    %c0_2 = arith.constant 0 : index
    %c0_3 = arith.constant 0 : index
    %2 = vector.load %arg4[%c0_2, %c0_3] : memref<1x128xf32, #tpu.memory_space<vmem>>, vector<1x128xf32>
    %3 = vector.broadcast %2 : vector<1x128xf32> to vector<8x128xf32>
    %4 = arith.mulf %1, %3 : vector<8x128xf32>
    %c0_4 = arith.constant 0 : index
    %c0_5 = arith.constant 0 : index
    %5 = vector.load %arg5[%c0_4, %c0_5] : memref<1x128xf32, #tpu.memory_space<vmem>>, vector<1x128xf32>
    %6 = vector.broadcast %5 : vector<1x128xf32> to vector<8x128xf32>
    %7 = arith.addf %4, %6 : vector<8x128xf32>
    %cst = arith.constant 0.000000e+00 : f32
    %8 = vector.broadcast %cst : f32 to vector<8x128xf32>
    %9 = arith.maximumf %7, %8 : vector<8x128xf32>
    %10 = arith.truncf %9 : vector<8x128xf32> to vector<8x128xbf16>
    %c0_6 = arith.constant 0 : index
    %c0_7 = arith.constant 0 : index
    %c0_8 = arith.constant 0 : index
    %11 = vector.load %arg2[%c0_6, %c0_7, %c0_8] : memref<3x4x8xbf16, #tpu.memory_space<vmem>>, vector<1x4x8xbf16>
    %12 = vector.shape_cast %11 : vector<1x4x8xbf16> to vector<4x8xbf16>
    %cst_9 = arith.constant dense<0.000000e+00> : vector<4x128xf32>
    %13 = tpu.matmul %12, %10, %cst_9 {dimension_numbers = #tpu.dot_dimension_numbers<[1], [0], [0], [1], [0, 0, 1, 1], [], []>} : vector<4x8xbf16>, vector<8x128xbf16>, vector<4x128xf32> -> vector<4x128xf32>
    %14 = arith.truncf %13 : vector<4x128xf32> to vector<4x128xbf16>
    %c0_10 = arith.constant 0 : index
    %c0_11 = arith.constant 0 : index
    %c0_12 = arith.constant 0 : index
    %15 = vector.load %arg3[%c0_10, %c0_11, %c0_12] : memref<3x128x128xbf16, #tpu.memory_space<vmem>>, vector<1x128x128xbf16>
    %16 = vector.shape_cast %15 : vector<1x128x128xbf16> to vector<128x128xbf16>
    %cst_13 = arith.constant dense<0.000000e+00> : vector<4x128xf32>
    %17 = tpu.matmul %14, %16, %cst_13 {dimension_numbers = #tpu.dot_dimension_numbers<[1], [0], [0], [1], [0, 0, 1, 1], [], []>} : vector<4x128xbf16>, vector<128x128xbf16>, vector<4x128xf32> -> vector<4x128xf32>
    %c1 = arith.constant 1 : index
    %c0_14 = arith.constant 0 : index
    %c0_15 = arith.constant 0 : index
    %18 = vector.load %arg2[%c1, %c0_14, %c0_15] : memref<3x4x8xbf16, #tpu.memory_space<vmem>>, vector<1x4x8xbf16>
    %19 = vector.shape_cast %18 : vector<1x4x8xbf16> to vector<4x8xbf16>
    %cst_16 = arith.constant dense<0.000000e+00> : vector<4x128xf32>
    %20 = tpu.matmul %19, %10, %cst_16 {dimension_numbers = #tpu.dot_dimension_numbers<[1], [0], [0], [1], [0, 0, 1, 1], [], []>} : vector<4x8xbf16>, vector<8x128xbf16>, vector<4x128xf32> -> vector<4x128xf32>
    %21 = arith.truncf %20 : vector<4x128xf32> to vector<4x128xbf16>
    %c1_17 = arith.constant 1 : index
    %c0_18 = arith.constant 0 : index
    %c0_19 = arith.constant 0 : index
    %22 = vector.load %arg3[%c1_17, %c0_18, %c0_19] : memref<3x128x128xbf16, #tpu.memory_space<vmem>>, vector<1x128x128xbf16>
    %23 = vector.shape_cast %22 : vector<1x128x128xbf16> to vector<128x128xbf16>
    %cst_20 = arith.constant dense<0.000000e+00> : vector<4x128xf32>
    %24 = tpu.matmul %21, %23, %cst_20 {dimension_numbers = #tpu.dot_dimension_numbers<[1], [0], [0], [1], [0, 0, 1, 1], [], []>} : vector<4x128xbf16>, vector<128x128xbf16>, vector<4x128xf32> -> vector<4x128xf32>
    %25 = arith.addf %17, %24 : vector<4x128xf32>
    %c2 = arith.constant 2 : index
    %c0_21 = arith.constant 0 : index
    %c0_22 = arith.constant 0 : index
    %26 = vector.load %arg2[%c2, %c0_21, %c0_22] : memref<3x4x8xbf16, #tpu.memory_space<vmem>>, vector<1x4x8xbf16>
    %27 = vector.shape_cast %26 : vector<1x4x8xbf16> to vector<4x8xbf16>
    %cst_23 = arith.constant dense<0.000000e+00> : vector<4x128xf32>
    %28 = tpu.matmul %27, %10, %cst_23 {dimension_numbers = #tpu.dot_dimension_numbers<[1], [0], [0], [1], [0, 0, 1, 1], [], []>} : vector<4x8xbf16>, vector<8x128xbf16>, vector<4x128xf32> -> vector<4x128xf32>
    %29 = arith.truncf %28 : vector<4x128xf32> to vector<4x128xbf16>
    %c2_24 = arith.constant 2 : index
    %c0_25 = arith.constant 0 : index
    %c0_26 = arith.constant 0 : index
    %30 = vector.load %arg3[%c2_24, %c0_25, %c0_26] : memref<3x128x128xbf16, #tpu.memory_space<vmem>>, vector<1x128x128xbf16>
    %31 = vector.shape_cast %30 : vector<1x128x128xbf16> to vector<128x128xbf16>
    %cst_27 = arith.constant dense<0.000000e+00> : vector<4x128xf32>
    %32 = tpu.matmul %29, %31, %cst_27 {dimension_numbers = #tpu.dot_dimension_numbers<[1], [0], [0], [1], [0, 0, 1, 1], [], []>} : vector<4x128xbf16>, vector<128x128xbf16>, vector<4x128xf32> -> vector<4x128xf32>
    %33 = arith.addf %25, %32 : vector<4x128xf32>
    %c0_28 = arith.constant 0 : index
    %c0_29 = arith.constant 0 : index
    %c0_30 = arith.constant 0 : index
    %34 = vector.load %arg6[%c0_28, %c0_29, %c0_30] : memref<1x4x128xf32, #tpu.memory_space<vmem>>, vector<1x4x128xf32>
    %35 = vector.shape_cast %34 : vector<1x4x128xf32> to vector<4x128xf32>
    %36 = vector.shape_cast %33 : vector<4x128xf32> to vector<1x4x128xf32>
    tpu.vector_store %arg6[%c0_28, %c0_29, %c0_30], %36 {strides = array<i32>} : memref<1x4x128xf32, #tpu.memory_space<vmem>>, vector<1x4x128xf32>,
    %cst_31 = arith.constant dense<0.000000e+00> : vector<128xf32>
    %37 = vector.multi_reduction <add>, %33, %cst_31 [0] : vector<4x128xf32> to vector<128xf32>
    %38 = vector.shape_cast %37 : vector<128xf32> to vector<1x128xf32>
    %39 = arith.mulf %33, %33 : vector<4x128xf32>
    %cst_32 = arith.constant dense<0.000000e+00> : vector<128xf32>
    %40 = vector.multi_reduction <add>, %39, %cst_32 [0] : vector<4x128xf32> to vector<128xf32>
    %41 = vector.shape_cast %40 : vector<128xf32> to vector<1x128xf32>
    %42 = tpu.iota {dimensions = array<i32: 0>} : vector<8x128xi32>
    %c0_i32 = arith.constant 0 : i32
    %43 = vector.broadcast %c0_i32 : i32 to vector<8x128xi32>
    %44 = arith.cmpi eq, %42, %43 : vector<8x128xi32>
    %c1_i32 = arith.constant 1 : i32
    %45 = vector.broadcast %c1_i32 : i32 to vector<8x128xi32>
    %46 = arith.cmpi eq, %42, %45 : vector<8x128xi32>
    %cst_33 = arith.constant 0.000000e+00 : f32
    %47 = vector.shape_cast %41 : vector<1x128xf32> to vector<1x128xf32>
    %48 = vector.broadcast %47 : vector<1x128xf32> to vector<8x128xf32>
    %49 = vector.broadcast %cst_33 : f32 to vector<8x128xf32>
    %50 = arith.select %46, %48, %49 : vector<8x128xi1>, vector<8x128xf32>
    %51 = vector.shape_cast %38 : vector<1x128xf32> to vector<1x128xf32>
    %52 = vector.broadcast %51 : vector<1x128xf32> to vector<8x128xf32>
    %53 = arith.select %44, %52, %50 : vector<8x128xi1>, vector<8x128xf32>
    %c0_34 = arith.constant 0 : index
    %c0_35 = arith.constant 0 : index
    %c0_36 = arith.constant 0 : index
    %54 = vector.load %arg7[%c0_34, %c0_35, %c0_36] : memref<1x8x128xf32, #tpu.memory_space<vmem>>, vector<1x8x128xf32>
    %55 = vector.shape_cast %54 : vector<1x8x128xf32> to vector<8x128xf32>
    %56 = vector.shape_cast %53 : vector<8x128xf32> to vector<1x8x128xf32>
    tpu.vector_store %arg7[%c0_34, %c0_35, %c0_36], %56 {strides = array<i32>} : memref<1x8x128xf32, #tpu.memory_space<vmem>>, vector<1x8x128xf32>,
    return
  }
  func.func @transform_0(%arg0: i32) -> (i32, i32, i32) {
    %c0_i32 = arith.constant 0 : i32
    %c0_i32_0 = arith.constant 0 : i32
    %c0_i32_1 = arith.constant 0 : i32
    return %arg0, %c0_i32, %c0_i32_0 : i32, i32, i32
  }
  func.func @transform_1(%arg0: i32) -> (i32, i32, i32) {
    %c0_i32 = arith.constant 0 : i32
    %c0_i32_0 = arith.constant 0 : i32
    %c0_i32_1 = arith.constant 0 : i32
    %c0_i32_2 = arith.constant 0 : i32
    return %c0_i32, %c0_i32_0, %c0_i32_1 : i32, i32, i32
  }
  func.func @transform_2(%arg0: i32) -> (i32, i32, i32) {
    %c0_i32 = arith.constant 0 : i32
    %c0_i32_0 = arith.constant 0 : i32
    %c0_i32_1 = arith.constant 0 : i32
    %c0_i32_2 = arith.constant 0 : i32
    return %c0_i32, %c0_i32_0, %c0_i32_1 : i32, i32, i32
  }
  func.func @transform_3(%arg0: i32) -> (i32, i32) {
    %c0_i32 = arith.constant 0 : i32
    %c0_i32_0 = arith.constant 0 : i32
    %c0_i32_1 = arith.constant 0 : i32
    return %c0_i32, %c0_i32_0 : i32, i32
  }
  func.func @transform_4(%arg0: i32) -> (i32, i32) {
    %c0_i32 = arith.constant 0 : i32
    %c0_i32_0 = arith.constant 0 : i32
    %c0_i32_1 = arith.constant 0 : i32
    return %c0_i32, %c0_i32_0 : i32, i32
  }
  func.func @transform_5(%arg0: i32) -> (i32, i32, i32) {
    %c0_i32 = arith.constant 0 : i32
    %c0_i32_0 = arith.constant 0 : i32
    %c0_i32_1 = arith.constant 0 : i32
    return %arg0, %c0_i32, %c0_i32_0 : i32, i32, i32
  }
  func.func @transform_6(%arg0: i32) -> (i32, i32, i32) {
    %c0_i32 = arith.constant 0 : i32
    %c0_i32_0 = arith.constant 0 : i32
    %c0_i32_1 = arith.constant 0 : i32
    return %arg0, %c0_i32, %c0_i32_0 : i32, i32, i32
  }
}

module attributes {stable_mosaic.version = 11 : i64} {
  func.func @kernel(%arg0: i32, %arg1: memref<1x4x128xf32, #tpu.memory_space<vmem>>, %arg2: memref<3x2x4xbf16, #tpu.memory_space<vmem>>, %arg3: memref<3x128x128xbf16, #tpu.memory_space<vmem>>, %arg4: memref<1x128xf32, #tpu.memory_space<vmem>>, %arg5: memref<1x128xf32, #tpu.memory_space<vmem>>, %arg6: memref<1x2x128xf32, #tpu.memory_space<vmem>>, %arg7: memref<1x8x128xf32, #tpu.memory_space<vmem>>) attributes {dimension_semantics = [#tpu.dimension_semantics<parallel>], iteration_bounds = array<i64: 2>, scalar_prefetch = 0 : i64, scratch_operands = 0 : i64, tpu.core_type = #tpu.core_type<tc>, window_params = [{transform_indices = @transform_0, window_bounds = array<i64: 1, 4, 128>}, {pipeline_mode = #tpu.pipeline_mode<synchronous>, transform_indices = @transform_1, window_bounds = array<i64: 3, 2, 4>}, {pipeline_mode = #tpu.pipeline_mode<synchronous>, transform_indices = @transform_2, window_bounds = array<i64: 3, 128, 128>}, {pipeline_mode = #tpu.pipeline_mode<synchronous>, transform_indices = @transform_3, window_bounds = array<i64: 1, 128>}, {pipeline_mode = #tpu.pipeline_mode<synchronous>, transform_indices = @transform_4, window_bounds = array<i64: 1, 128>}, {transform_indices = @transform_5, window_bounds = array<i64: 1, 2, 128>}, {transform_indices = @transform_6, window_bounds = array<i64: 1, 8, 128>}]} {
    %c0 = arith.constant 0 : index
    %c0_0 = arith.constant 0 : index
    %c0_1 = arith.constant 0 : index
    %0 = vector.load %arg1[%c0, %c0_0, %c0_1] : memref<1x4x128xf32, #tpu.memory_space<vmem>>, vector<1x4x128xf32>
    %1 = vector.shape_cast %0 : vector<1x4x128xf32> to vector<4x128xf32>
    %c0_2 = arith.constant 0 : index
    %c0_3 = arith.constant 0 : index
    %2 = vector.load %arg4[%c0_2, %c0_3] : memref<1x128xf32, #tpu.memory_space<vmem>>, vector<1x128xf32>
    %3 = vector.broadcast %2 : vector<1x128xf32> to vector<4x128xf32>
    %4 = arith.mulf %1, %3 : vector<4x128xf32>
    %c0_4 = arith.constant 0 : index
    %c0_5 = arith.constant 0 : index
    %5 = vector.load %arg5[%c0_4, %c0_5] : memref<1x128xf32, #tpu.memory_space<vmem>>, vector<1x128xf32>
    %6 = vector.broadcast %5 : vector<1x128xf32> to vector<4x128xf32>
    %7 = arith.addf %4, %6 : vector<4x128xf32>
    %cst = arith.constant 0.000000e+00 : f32
    %8 = vector.broadcast %cst : f32 to vector<4x128xf32>
    %9 = arith.maximumf %7, %8 : vector<4x128xf32>
    %10 = arith.truncf %9 : vector<4x128xf32> to vector<4x128xbf16>
    %c0_6 = arith.constant 0 : index
    %c0_7 = arith.constant 0 : index
    %c0_8 = arith.constant 0 : index
    %11 = vector.load %arg2[%c0_6, %c0_7, %c0_8] : memref<3x2x4xbf16, #tpu.memory_space<vmem>>, vector<1x2x4xbf16>
    %12 = vector.shape_cast %11 : vector<1x2x4xbf16> to vector<2x4xbf16>
    %cst_9 = arith.constant dense<0.000000e+00> : vector<2x128xf32>
    %13 = tpu.matmul %12, %10, %cst_9 {dimension_numbers = #tpu.dot_dimension_numbers<[1], [0], [0], [1], [0, 0, 1, 1], [], []>} : vector<2x4xbf16>, vector<4x128xbf16>, vector<2x128xf32> -> vector<2x128xf32>
    %14 = arith.truncf %13 : vector<2x128xf32> to vector<2x128xbf16>
    %c0_10 = arith.constant 0 : index
    %c0_11 = arith.constant 0 : index
    %c0_12 = arith.constant 0 : index
    %15 = vector.load %arg3[%c0_10, %c0_11, %c0_12] : memref<3x128x128xbf16, #tpu.memory_space<vmem>>, vector<1x128x128xbf16>
    %16 = vector.shape_cast %15 : vector<1x128x128xbf16> to vector<128x128xbf16>
    %cst_13 = arith.constant dense<0.000000e+00> : vector<2x128xf32>
    %17 = tpu.matmul %14, %16, %cst_13 {dimension_numbers = #tpu.dot_dimension_numbers<[1], [0], [0], [1], [0, 0, 1, 1], [], []>} : vector<2x128xbf16>, vector<128x128xbf16>, vector<2x128xf32> -> vector<2x128xf32>
    %c1 = arith.constant 1 : index
    %c0_14 = arith.constant 0 : index
    %c0_15 = arith.constant 0 : index
    %18 = vector.load %arg2[%c1, %c0_14, %c0_15] : memref<3x2x4xbf16, #tpu.memory_space<vmem>>, vector<1x2x4xbf16>
    %19 = vector.shape_cast %18 : vector<1x2x4xbf16> to vector<2x4xbf16>
    %cst_16 = arith.constant dense<0.000000e+00> : vector<2x128xf32>
    %20 = tpu.matmul %19, %10, %cst_16 {dimension_numbers = #tpu.dot_dimension_numbers<[1], [0], [0], [1], [0, 0, 1, 1], [], []>} : vector<2x4xbf16>, vector<4x128xbf16>, vector<2x128xf32> -> vector<2x128xf32>
    %21 = arith.truncf %20 : vector<2x128xf32> to vector<2x128xbf16>
    %c1_17 = arith.constant 1 : index
    %c0_18 = arith.constant 0 : index
    %c0_19 = arith.constant 0 : index
    %22 = vector.load %arg3[%c1_17, %c0_18, %c0_19] : memref<3x128x128xbf16, #tpu.memory_space<vmem>>, vector<1x128x128xbf16>
    %23 = vector.shape_cast %22 : vector<1x128x128xbf16> to vector<128x128xbf16>
    %cst_20 = arith.constant dense<0.000000e+00> : vector<2x128xf32>
    %24 = tpu.matmul %21, %23, %cst_20 {dimension_numbers = #tpu.dot_dimension_numbers<[1], [0], [0], [1], [0, 0, 1, 1], [], []>} : vector<2x128xbf16>, vector<128x128xbf16>, vector<2x128xf32> -> vector<2x128xf32>
    %25 = arith.addf %17, %24 : vector<2x128xf32>
    %c2 = arith.constant 2 : index
    %c0_21 = arith.constant 0 : index
    %c0_22 = arith.constant 0 : index
    %26 = vector.load %arg2[%c2, %c0_21, %c0_22] : memref<3x2x4xbf16, #tpu.memory_space<vmem>>, vector<1x2x4xbf16>
    %27 = vector.shape_cast %26 : vector<1x2x4xbf16> to vector<2x4xbf16>
    %cst_23 = arith.constant dense<0.000000e+00> : vector<2x128xf32>
    %28 = tpu.matmul %27, %10, %cst_23 {dimension_numbers = #tpu.dot_dimension_numbers<[1], [0], [0], [1], [0, 0, 1, 1], [], []>} : vector<2x4xbf16>, vector<4x128xbf16>, vector<2x128xf32> -> vector<2x128xf32>
    %29 = arith.truncf %28 : vector<2x128xf32> to vector<2x128xbf16>
    %c2_24 = arith.constant 2 : index
    %c0_25 = arith.constant 0 : index
    %c0_26 = arith.constant 0 : index
    %30 = vector.load %arg3[%c2_24, %c0_25, %c0_26] : memref<3x128x128xbf16, #tpu.memory_space<vmem>>, vector<1x128x128xbf16>
    %31 = vector.shape_cast %30 : vector<1x128x128xbf16> to vector<128x128xbf16>
    %cst_27 = arith.constant dense<0.000000e+00> : vector<2x128xf32>
    %32 = tpu.matmul %29, %31, %cst_27 {dimension_numbers = #tpu.dot_dimension_numbers<[1], [0], [0], [1], [0, 0, 1, 1], [], []>} : vector<2x128xbf16>, vector<128x128xbf16>, vector<2x128xf32> -> vector<2x128xf32>
    %33 = arith.addf %25, %32 : vector<2x128xf32>
    %c0_28 = arith.constant 0 : index
    %c0_29 = arith.constant 0 : index
    %c0_30 = arith.constant 0 : index
    %34 = vector.load %arg6[%c0_28, %c0_29, %c0_30] : memref<1x2x128xf32, #tpu.memory_space<vmem>>, vector<1x2x128xf32>
    %35 = vector.shape_cast %34 : vector<1x2x128xf32> to vector<2x128xf32>
    %36 = vector.shape_cast %33 : vector<2x128xf32> to vector<1x2x128xf32>
    tpu.vector_store %arg6[%c0_28, %c0_29, %c0_30], %36 {strides = array<i32>} : memref<1x2x128xf32, #tpu.memory_space<vmem>>, vector<1x2x128xf32>,
    %cst_31 = arith.constant dense<0.000000e+00> : vector<128xf32>
    %37 = vector.multi_reduction <add>, %33, %cst_31 [0] : vector<2x128xf32> to vector<128xf32>
    %38 = vector.shape_cast %37 : vector<128xf32> to vector<1x128xf32>
    %39 = arith.mulf %33, %33 : vector<2x128xf32>
    %cst_32 = arith.constant dense<0.000000e+00> : vector<128xf32>
    %40 = vector.multi_reduction <add>, %39, %cst_32 [0] : vector<2x128xf32> to vector<128xf32>
    %41 = vector.shape_cast %40 : vector<128xf32> to vector<1x128xf32>
    %42 = tpu.iota {dimensions = array<i32: 0>} : vector<8x128xi32>
    %c0_i32 = arith.constant 0 : i32
    %43 = vector.broadcast %c0_i32 : i32 to vector<8x128xi32>
    %44 = arith.cmpi eq, %42, %43 : vector<8x128xi32>
    %c1_i32 = arith.constant 1 : i32
    %45 = vector.broadcast %c1_i32 : i32 to vector<8x128xi32>
    %46 = arith.cmpi eq, %42, %45 : vector<8x128xi32>
    %cst_33 = arith.constant 0.000000e+00 : f32
    %47 = vector.shape_cast %41 : vector<1x128xf32> to vector<1x128xf32>
    %48 = vector.broadcast %47 : vector<1x128xf32> to vector<8x128xf32>
    %49 = vector.broadcast %cst_33 : f32 to vector<8x128xf32>
    %50 = arith.select %46, %48, %49 : vector<8x128xi1>, vector<8x128xf32>
    %51 = vector.shape_cast %38 : vector<1x128xf32> to vector<1x128xf32>
    %52 = vector.broadcast %51 : vector<1x128xf32> to vector<8x128xf32>
    %53 = arith.select %44, %52, %50 : vector<8x128xi1>, vector<8x128xf32>
    %c0_34 = arith.constant 0 : index
    %c0_35 = arith.constant 0 : index
    %c0_36 = arith.constant 0 : index
    %54 = vector.load %arg7[%c0_34, %c0_35, %c0_36] : memref<1x8x128xf32, #tpu.memory_space<vmem>>, vector<1x8x128xf32>
    %55 = vector.shape_cast %54 : vector<1x8x128xf32> to vector<8x128xf32>
    %56 = vector.shape_cast %53 : vector<8x128xf32> to vector<1x8x128xf32>
    tpu.vector_store %arg7[%c0_34, %c0_35, %c0_36], %56 {strides = array<i32>} : memref<1x8x128xf32, #tpu.memory_space<vmem>>, vector<1x8x128xf32>,
    return
  }
  func.func @transform_0(%arg0: i32) -> (i32, i32, i32) {
    %c0_i32 = arith.constant 0 : i32
    %c0_i32_0 = arith.constant 0 : i32
    %c0_i32_1 = arith.constant 0 : i32
    return %arg0, %c0_i32, %c0_i32_0 : i32, i32, i32
  }
  func.func @transform_1(%arg0: i32) -> (i32, i32, i32) {
    %c0_i32 = arith.constant 0 : i32
    %c0_i32_0 = arith.constant 0 : i32
    %c0_i32_1 = arith.constant 0 : i32
    %c0_i32_2 = arith.constant 0 : i32
    return %c0_i32, %c0_i32_0, %c0_i32_1 : i32, i32, i32
  }
  func.func @transform_2(%arg0: i32) -> (i32, i32, i32) {
    %c0_i32 = arith.constant 0 : i32
    %c0_i32_0 = arith.constant 0 : i32
    %c0_i32_1 = arith.constant 0 : i32
    %c0_i32_2 = arith.constant 0 : i32
    return %c0_i32, %c0_i32_0, %c0_i32_1 : i32, i32, i32
  }
  func.func @transform_3(%arg0: i32) -> (i32, i32) {
    %c0_i32 = arith.constant 0 : i32
    %c0_i32_0 = arith.constant 0 : i32
    %c0_i32_1 = arith.constant 0 : i32
    return %c0_i32, %c0_i32_0 : i32, i32
  }
  func.func @transform_4(%arg0: i32) -> (i32, i32) {
    %c0_i32 = arith.constant 0 : i32
    %c0_i32_0 = arith.constant 0 : i32
    %c0_i32_1 = arith.constant 0 : i32
    return %c0_i32, %c0_i32_0 : i32, i32
  }
  func.func @transform_5(%arg0: i32) -> (i32, i32, i32) {
    %c0_i32 = arith.constant 0 : i32
    %c0_i32_0 = arith.constant 0 : i32
    %c0_i32_1 = arith.constant 0 : i32
    return %arg0, %c0_i32, %c0_i32_0 : i32, i32, i32
  }
  func.func @transform_6(%arg0: i32) -> (i32, i32, i32) {
    %c0_i32 = arith.constant 0 : i32
    %c0_i32_0 = arith.constant 0 : i32
    %c0_i32_1 = arith.constant 0 : i32
    return %arg0, %c0_i32, %c0_i32_0 : i32, i32, i32
  }
}

module attributes {stable_mosaic.version = 11 : i64} {
  func.func @kernel(%arg0: i32, %arg1: memref<1x2x128xf32, #tpu.memory_space<vmem>>, %arg2: memref<3x4x2xbf16, #tpu.memory_space<vmem>>, %arg3: memref<3x128x128xbf16, #tpu.memory_space<vmem>>, %arg4: memref<1x128xf32, #tpu.memory_space<vmem>>, %arg5: memref<1x128xf32, #tpu.memory_space<vmem>>, %arg6: memref<1x4x128xf32, #tpu.memory_space<vmem>>, %arg7: memref<1x8x128xf32, #tpu.memory_space<vmem>>) attributes {dimension_semantics = [#tpu.dimension_semantics<parallel>], iteration_bounds = array<i64: 2>, scalar_prefetch = 0 : i64, scratch_operands = 0 : i64, tpu.core_type = #tpu.core_type<tc>, window_params = [{transform_indices = @transform_0, window_bounds = array<i64: 1, 2, 128>}, {pipeline_mode = #tpu.pipeline_mode<synchronous>, transform_indices = @transform_1, window_bounds = array<i64: 3, 4, 2>}, {pipeline_mode = #tpu.pipeline_mode<synchronous>, transform_indices = @transform_2, window_bounds = array<i64: 3, 128, 128>}, {pipeline_mode = #tpu.pipeline_mode<synchronous>, transform_indices = @transform_3, window_bounds = array<i64: 1, 128>}, {pipeline_mode = #tpu.pipeline_mode<synchronous>, transform_indices = @transform_4, window_bounds = array<i64: 1, 128>}, {transform_indices = @transform_5, window_bounds = array<i64: 1, 4, 128>}, {transform_indices = @transform_6, window_bounds = array<i64: 1, 8, 128>}]} {
    %c0 = arith.constant 0 : index
    %c0_0 = arith.constant 0 : index
    %c0_1 = arith.constant 0 : index
    %0 = vector.load %arg1[%c0, %c0_0, %c0_1] : memref<1x2x128xf32, #tpu.memory_space<vmem>>, vector<1x2x128xf32>
    %1 = vector.shape_cast %0 : vector<1x2x128xf32> to vector<2x128xf32>
    %c0_2 = arith.constant 0 : index
    %c0_3 = arith.constant 0 : index
    %2 = vector.load %arg4[%c0_2, %c0_3] : memref<1x128xf32, #tpu.memory_space<vmem>>, vector<1x128xf32>
    %3 = vector.broadcast %2 : vector<1x128xf32> to vector<2x128xf32>
    %4 = arith.mulf %1, %3 : vector<2x128xf32>
    %c0_4 = arith.constant 0 : index
    %c0_5 = arith.constant 0 : index
    %5 = vector.load %arg5[%c0_4, %c0_5] : memref<1x128xf32, #tpu.memory_space<vmem>>, vector<1x128xf32>
    %6 = vector.broadcast %5 : vector<1x128xf32> to vector<2x128xf32>
    %7 = arith.addf %4, %6 : vector<2x128xf32>
    %cst = arith.constant 0.000000e+00 : f32
    %8 = vector.broadcast %cst : f32 to vector<2x128xf32>
    %9 = arith.maximumf %7, %8 : vector<2x128xf32>
    %10 = arith.truncf %9 : vector<2x128xf32> to vector<2x128xbf16>
    %c0_6 = arith.constant 0 : index
    %c0_7 = arith.constant 0 : index
    %c0_8 = arith.constant 0 : index
    %11 = vector.load %arg3[%c0_6, %c0_7, %c0_8] : memref<3x128x128xbf16, #tpu.memory_space<vmem>>, vector<1x128x128xbf16>
    %12 = vector.shape_cast %11 : vector<1x128x128xbf16> to vector<128x128xbf16>
    %cst_9 = arith.constant dense<0.000000e+00> : vector<2x128xf32>
    %13 = tpu.matmul %10, %12, %cst_9 {dimension_numbers = #tpu.dot_dimension_numbers<[1], [0], [0], [1], [0, 0, 1, 1], [], []>} : vector<2x128xbf16>, vector<128x128xbf16>, vector<2x128xf32> -> vector<2x128xf32>
    %c0_10 = arith.constant 0 : index
    %c0_11 = arith.constant 0 : index
    %c0_12 = arith.constant 0 : index
    %14 = vector.load %arg2[%c0_10, %c0_11, %c0_12] : memref<3x4x2xbf16, #tpu.memory_space<vmem>>, vector<1x4x2xbf16>
    %15 = vector.shape_cast %14 : vector<1x4x2xbf16> to vector<4x2xbf16>
    %16 = arith.truncf %13 : vector<2x128xf32> to vector<2x128xbf16>
    %cst_13 = arith.constant dense<0.000000e+00> : vector<4x128xf32>
    %17 = tpu.matmul %15, %16, %cst_13 {dimension_numbers = #tpu.dot_dimension_numbers<[1], [0], [0], [1], [0, 0, 1, 1], [], []>} : vector<4x2xbf16>, vector<2x128xbf16>, vector<4x128xf32> -> vector<4x128xf32>
    %c1 = arith.constant 1 : index
    %c0_14 = arith.constant 0 : index
    %c0_15 = arith.constant 0 : index
    %18 = vector.load %arg3[%c1, %c0_14, %c0_15] : memref<3x128x128xbf16, #tpu.memory_space<vmem>>, vector<1x128x128xbf16>
    %19 = vector.shape_cast %18 : vector<1x128x128xbf16> to vector<128x128xbf16>
    %cst_16 = arith.constant dense<0.000000e+00> : vector<2x128xf32>
    %20 = tpu.matmul %10, %19, %cst_16 {dimension_numbers = #tpu.dot_dimension_numbers<[1], [0], [0], [1], [0, 0, 1, 1], [], []>} : vector<2x128xbf16>, vector<128x128xbf16>, vector<2x128xf32> -> vector<2x128xf32>
    %c1_17 = arith.constant 1 : index
    %c0_18 = arith.constant 0 : index
    %c0_19 = arith.constant 0 : index
    %21 = vector.load %arg2[%c1_17, %c0_18, %c0_19] : memref<3x4x2xbf16, #tpu.memory_space<vmem>>, vector<1x4x2xbf16>
    %22 = vector.shape_cast %21 : vector<1x4x2xbf16> to vector<4x2xbf16>
    %23 = arith.truncf %20 : vector<2x128xf32> to vector<2x128xbf16>
    %cst_20 = arith.constant dense<0.000000e+00> : vector<4x128xf32>
    %24 = tpu.matmul %22, %23, %cst_20 {dimension_numbers = #tpu.dot_dimension_numbers<[1], [0], [0], [1], [0, 0, 1, 1], [], []>} : vector<4x2xbf16>, vector<2x128xbf16>, vector<4x128xf32> -> vector<4x128xf32>
    %25 = arith.addf %17, %24 : vector<4x128xf32>
    %c2 = arith.constant 2 : index
    %c0_21 = arith.constant 0 : index
    %c0_22 = arith.constant 0 : index
    %26 = vector.load %arg3[%c2, %c0_21, %c0_22] : memref<3x128x128xbf16, #tpu.memory_space<vmem>>, vector<1x128x128xbf16>
    %27 = vector.shape_cast %26 : vector<1x128x128xbf16> to vector<128x128xbf16>
    %cst_23 = arith.constant dense<0.000000e+00> : vector<2x128xf32>
    %28 = tpu.matmul %10, %27, %cst_23 {dimension_numbers = #tpu.dot_dimension_numbers<[1], [0], [0], [1], [0, 0, 1, 1], [], []>} : vector<2x128xbf16>, vector<128x128xbf16>, vector<2x128xf32> -> vector<2x128xf32>
    %c2_24 = arith.constant 2 : index
    %c0_25 = arith.constant 0 : index
    %c0_26 = arith.constant 0 : index
    %29 = vector.load %arg2[%c2_24, %c0_25, %c0_26] : memref<3x4x2xbf16, #tpu.memory_space<vmem>>, vector<1x4x2xbf16>
    %30 = vector.shape_cast %29 : vector<1x4x2xbf16> to vector<4x2xbf16>
    %31 = arith.truncf %28 : vector<2x128xf32> to vector<2x128xbf16>
    %cst_27 = arith.constant dense<0.000000e+00> : vector<4x128xf32>
    %32 = tpu.matmul %30, %31, %cst_27 {dimension_numbers = #tpu.dot_dimension_numbers<[1], [0], [0], [1], [0, 0, 1, 1], [], []>} : vector<4x2xbf16>, vector<2x128xbf16>, vector<4x128xf32> -> vector<4x128xf32>
    %33 = arith.addf %25, %32 : vector<4x128xf32>
    %c0_28 = arith.constant 0 : index
    %c0_29 = arith.constant 0 : index
    %c0_30 = arith.constant 0 : index
    %34 = vector.load %arg6[%c0_28, %c0_29, %c0_30] : memref<1x4x128xf32, #tpu.memory_space<vmem>>, vector<1x4x128xf32>
    %35 = vector.shape_cast %34 : vector<1x4x128xf32> to vector<4x128xf32>
    %36 = vector.shape_cast %33 : vector<4x128xf32> to vector<1x4x128xf32>
    tpu.vector_store %arg6[%c0_28, %c0_29, %c0_30], %36 {strides = array<i32>} : memref<1x4x128xf32, #tpu.memory_space<vmem>>, vector<1x4x128xf32>,
    %cst_31 = arith.constant dense<0.000000e+00> : vector<128xf32>
    %37 = vector.multi_reduction <add>, %33, %cst_31 [0] : vector<4x128xf32> to vector<128xf32>
    %38 = vector.shape_cast %37 : vector<128xf32> to vector<1x128xf32>
    %39 = arith.mulf %33, %33 : vector<4x128xf32>
    %cst_32 = arith.constant dense<0.000000e+00> : vector<128xf32>
    %40 = vector.multi_reduction <add>, %39, %cst_32 [0] : vector<4x128xf32> to vector<128xf32>
    %41 = vector.shape_cast %40 : vector<128xf32> to vector<1x128xf32>
    %42 = tpu.iota {dimensions = array<i32: 0>} : vector<8x128xi32>
    %c0_i32 = arith.constant 0 : i32
    %43 = vector.broadcast %c0_i32 : i32 to vector<8x128xi32>
    %44 = arith.cmpi eq, %42, %43 : vector<8x128xi32>
    %c1_i32 = arith.constant 1 : i32
    %45 = vector.broadcast %c1_i32 : i32 to vector<8x128xi32>
    %46 = arith.cmpi eq, %42, %45 : vector<8x128xi32>
    %cst_33 = arith.constant 0.000000e+00 : f32
    %47 = vector.shape_cast %41 : vector<1x128xf32> to vector<1x128xf32>
    %48 = vector.broadcast %47 : vector<1x128xf32> to vector<8x128xf32>
    %49 = vector.broadcast %cst_33 : f32 to vector<8x128xf32>
    %50 = arith.select %46, %48, %49 : vector<8x128xi1>, vector<8x128xf32>
    %51 = vector.shape_cast %38 : vector<1x128xf32> to vector<1x128xf32>
    %52 = vector.broadcast %51 : vector<1x128xf32> to vector<8x128xf32>
    %53 = arith.select %44, %52, %50 : vector<8x128xi1>, vector<8x128xf32>
    %c0_34 = arith.constant 0 : index
    %c0_35 = arith.constant 0 : index
    %c0_36 = arith.constant 0 : index
    %54 = vector.load %arg7[%c0_34, %c0_35, %c0_36] : memref<1x8x128xf32, #tpu.memory_space<vmem>>, vector<1x8x128xf32>
    %55 = vector.shape_cast %54 : vector<1x8x128xf32> to vector<8x128xf32>
    %56 = vector.shape_cast %53 : vector<8x128xf32> to vector<1x8x128xf32>
    tpu.vector_store %arg7[%c0_34, %c0_35, %c0_36], %56 {strides = array<i32>} : memref<1x8x128xf32, #tpu.memory_space<vmem>>, vector<1x8x128xf32>,
    return
  }
  func.func @transform_0(%arg0: i32) -> (i32, i32, i32) {
    %c0_i32 = arith.constant 0 : i32
    %c0_i32_0 = arith.constant 0 : i32
    %c0_i32_1 = arith.constant 0 : i32
    return %arg0, %c0_i32, %c0_i32_0 : i32, i32, i32
  }
  func.func @transform_1(%arg0: i32) -> (i32, i32, i32) {
    %c0_i32 = arith.constant 0 : i32
    %c0_i32_0 = arith.constant 0 : i32
    %c0_i32_1 = arith.constant 0 : i32
    %c0_i32_2 = arith.constant 0 : i32
    return %c0_i32, %c0_i32_0, %c0_i32_1 : i32, i32, i32
  }
  func.func @transform_2(%arg0: i32) -> (i32, i32, i32) {
    %c0_i32 = arith.constant 0 : i32
    %c0_i32_0 = arith.constant 0 : i32
    %c0_i32_1 = arith.constant 0 : i32
    %c0_i32_2 = arith.constant 0 : i32
    return %c0_i32, %c0_i32_0, %c0_i32_1 : i32, i32, i32
  }
  func.func @transform_3(%arg0: i32) -> (i32, i32) {
    %c0_i32 = arith.constant 0 : i32
    %c0_i32_0 = arith.constant 0 : i32
    %c0_i32_1 = arith.constant 0 : i32
    return %c0_i32, %c0_i32_0 : i32, i32
  }
  func.func @transform_4(%arg0: i32) -> (i32, i32) {
    %c0_i32 = arith.constant 0 : i32
    %c0_i32_0 = arith.constant 0 : i32
    %c0_i32_1 = arith.constant 0 : i32
    return %c0_i32, %c0_i32_0 : i32, i32
  }
  func.func @transform_5(%arg0: i32) -> (i32, i32, i32) {
    %c0_i32 = arith.constant 0 : i32
    %c0_i32_0 = arith.constant 0 : i32
    %c0_i32_1 = arith.constant 0 : i32
    return %arg0, %c0_i32, %c0_i32_0 : i32, i32, i32
  }
  func.func @transform_6(%arg0: i32) -> (i32, i32, i32) {
    %c0_i32 = arith.constant 0 : i32
    %c0_i32_0 = arith.constant 0 : i32
    %c0_i32_1 = arith.constant 0 : i32
    return %arg0, %c0_i32, %c0_i32_0 : i32, i32, i32
  }
}

module attributes {stable_mosaic.version = 11 : i64} {
  func.func @kernel(%arg0: i32, %arg1: memref<1x4x128xf32, #tpu.memory_space<vmem>>, %arg2: memref<3x8x4xbf16, #tpu.memory_space<vmem>>, %arg3: memref<3x128x128xbf16, #tpu.memory_space<vmem>>, %arg4: memref<1x128xf32, #tpu.memory_space<vmem>>, %arg5: memref<1x128xf32, #tpu.memory_space<vmem>>, %arg6: memref<1x8x128xf32, #tpu.memory_space<vmem>>, %arg7: memref<1x8x128xf32, #tpu.memory_space<vmem>>) attributes {dimension_semantics = [#tpu.dimension_semantics<parallel>], iteration_bounds = array<i64: 2>, scalar_prefetch = 0 : i64, scratch_operands = 0 : i64, tpu.core_type = #tpu.core_type<tc>, window_params = [{transform_indices = @transform_0, window_bounds = array<i64: 1, 4, 128>}, {pipeline_mode = #tpu.pipeline_mode<synchronous>, transform_indices = @transform_1, window_bounds = array<i64: 3, 8, 4>}, {pipeline_mode = #tpu.pipeline_mode<synchronous>, transform_indices = @transform_2, window_bounds = array<i64: 3, 128, 128>}, {pipeline_mode = #tpu.pipeline_mode<synchronous>, transform_indices = @transform_3, window_bounds = array<i64: 1, 128>}, {pipeline_mode = #tpu.pipeline_mode<synchronous>, transform_indices = @transform_4, window_bounds = array<i64: 1, 128>}, {transform_indices = @transform_5, window_bounds = array<i64: 1, 8, 128>}, {transform_indices = @transform_6, window_bounds = array<i64: 1, 8, 128>}]} {
    %c0 = arith.constant 0 : index
    %c0_0 = arith.constant 0 : index
    %c0_1 = arith.constant 0 : index
    %0 = vector.load %arg1[%c0, %c0_0, %c0_1] : memref<1x4x128xf32, #tpu.memory_space<vmem>>, vector<1x4x128xf32>
    %1 = vector.shape_cast %0 : vector<1x4x128xf32> to vector<4x128xf32>
    %c0_2 = arith.constant 0 : index
    %c0_3 = arith.constant 0 : index
    %2 = vector.load %arg4[%c0_2, %c0_3] : memref<1x128xf32, #tpu.memory_space<vmem>>, vector<1x128xf32>
    %3 = vector.broadcast %2 : vector<1x128xf32> to vector<4x128xf32>
    %4 = arith.mulf %1, %3 : vector<4x128xf32>
    %c0_4 = arith.constant 0 : index
    %c0_5 = arith.constant 0 : index
    %5 = vector.load %arg5[%c0_4, %c0_5] : memref<1x128xf32, #tpu.memory_space<vmem>>, vector<1x128xf32>
    %6 = vector.broadcast %5 : vector<1x128xf32> to vector<4x128xf32>
    %7 = arith.addf %4, %6 : vector<4x128xf32>
    %cst = arith.constant 0.000000e+00 : f32
    %8 = vector.broadcast %cst : f32 to vector<4x128xf32>
    %9 = arith.maximumf %7, %8 : vector<4x128xf32>
    %10 = arith.truncf %9 : vector<4x128xf32> to vector<4x128xbf16>
    %c0_6 = arith.constant 0 : index
    %c0_7 = arith.constant 0 : index
    %c0_8 = arith.constant 0 : index
    %11 = vector.load %arg3[%c0_6, %c0_7, %c0_8] : memref<3x128x128xbf16, #tpu.memory_space<vmem>>, vector<1x128x128xbf16>
    %12 = vector.shape_cast %11 : vector<1x128x128xbf16> to vector<128x128xbf16>
    %cst_9 = arith.constant dense<0.000000e+00> : vector<4x128xf32>
    %13 = tpu.matmul %10, %12, %cst_9 {dimension_numbers = #tpu.dot_dimension_numbers<[1], [0], [0], [1], [0, 0, 1, 1], [], []>} : vector<4x128xbf16>, vector<128x128xbf16>, vector<4x128xf32> -> vector<4x128xf32>
    %c0_10 = arith.constant 0 : index
    %c0_11 = arith.constant 0 : index
    %c0_12 = arith.constant 0 : index
    %14 = vector.load %arg2[%c0_10, %c0_11, %c0_12] : memref<3x8x4xbf16, #tpu.memory_space<vmem>>, vector<1x8x4xbf16>
    %15 = vector.shape_cast %14 : vector<1x8x4xbf16> to vector<8x4xbf16>
    %16 = arith.truncf %13 : vector<4x128xf32> to vector<4x128xbf16>
    %cst_13 = arith.constant dense<0.000000e+00> : vector<8x128xf32>
    %17 = tpu.matmul %15, %16, %cst_13 {dimension_numbers = #tpu.dot_dimension_numbers<[1], [0], [0], [1], [0, 0, 1, 1], [], []>} : vector<8x4xbf16>, vector<4x128xbf16>, vector<8x128xf32> -> vector<8x128xf32>
    %c1 = arith.constant 1 : index
    %c0_14 = arith.constant 0 : index
    %c0_15 = arith.constant 0 : index
    %18 = vector.load %arg3[%c1, %c0_14, %c0_15] : memref<3x128x128xbf16, #tpu.memory_space<vmem>>, vector<1x128x128xbf16>
    %19 = vector.shape_cast %18 : vector<1x128x128xbf16> to vector<128x128xbf16>
    %cst_16 = arith.constant dense<0.000000e+00> : vector<4x128xf32>
    %20 = tpu.matmul %10, %19, %cst_16 {dimension_numbers = #tpu.dot_dimension_numbers<[1], [0], [0], [1], [0, 0, 1, 1], [], []>} : vector<4x128xbf16>, vector<128x128xbf16>, vector<4x128xf32> -> vector<4x128xf32>
    %c1_17 = arith.constant 1 : index
    %c0_18 = arith.constant 0 : index
    %c0_19 = arith.constant 0 : index
    %21 = vector.load %arg2[%c1_17, %c0_18, %c0_19] : memref<3x8x4xbf16, #tpu.memory_space<vmem>>, vector<1x8x4xbf16>
    %22 = vector.shape_cast %21 : vector<1x8x4xbf16> to vector<8x4xbf16>
    %23 = arith.truncf %20 : vector<4x128xf32> to vector<4x128xbf16>
    %cst_20 = arith.constant dense<0.000000e+00> : vector<8x128xf32>
    %24 = tpu.matmul %22, %23, %cst_20 {dimension_numbers = #tpu.dot_dimension_numbers<[1], [0], [0], [1], [0, 0, 1, 1], [], []>} : vector<8x4xbf16>, vector<4x128xbf16>, vector<8x128xf32> -> vector<8x128xf32>
    %25 = arith.addf %17, %24 : vector<8x128xf32>
    %c2 = arith.constant 2 : index
    %c0_21 = arith.constant 0 : index
    %c0_22 = arith.constant 0 : index
    %26 = vector.load %arg3[%c2, %c0_21, %c0_22] : memref<3x128x128xbf16, #tpu.memory_space<vmem>>, vector<1x128x128xbf16>
    %27 = vector.shape_cast %26 : vector<1x128x128xbf16> to vector<128x128xbf16>
    %cst_23 = arith.constant dense<0.000000e+00> : vector<4x128xf32>
    %28 = tpu.matmul %10, %27, %cst_23 {dimension_numbers = #tpu.dot_dimension_numbers<[1], [0], [0], [1], [0, 0, 1, 1], [], []>} : vector<4x128xbf16>, vector<128x128xbf16>, vector<4x128xf32> -> vector<4x128xf32>
    %c2_24 = arith.constant 2 : index
    %c0_25 = arith.constant 0 : index
    %c0_26 = arith.constant 0 : index
    %29 = vector.load %arg2[%c2_24, %c0_25, %c0_26] : memref<3x8x4xbf16, #tpu.memory_space<vmem>>, vector<1x8x4xbf16>
    %30 = vector.shape_cast %29 : vector<1x8x4xbf16> to vector<8x4xbf16>
    %31 = arith.truncf %28 : vector<4x128xf32> to vector<4x128xbf16>
    %cst_27 = arith.constant dense<0.000000e+00> : vector<8x128xf32>
    %32 = tpu.matmul %30, %31, %cst_27 {dimension_numbers = #tpu.dot_dimension_numbers<[1], [0], [0], [1], [0, 0, 1, 1], [], []>} : vector<8x4xbf16>, vector<4x128xbf16>, vector<8x128xf32> -> vector<8x128xf32>
    %33 = arith.addf %25, %32 : vector<8x128xf32>
    %c0_28 = arith.constant 0 : index
    %c0_29 = arith.constant 0 : index
    %c0_30 = arith.constant 0 : index
    %34 = vector.load %arg6[%c0_28, %c0_29, %c0_30] : memref<1x8x128xf32, #tpu.memory_space<vmem>>, vector<1x8x128xf32>
    %35 = vector.shape_cast %34 : vector<1x8x128xf32> to vector<8x128xf32>
    %36 = vector.shape_cast %33 : vector<8x128xf32> to vector<1x8x128xf32>
    tpu.vector_store %arg6[%c0_28, %c0_29, %c0_30], %36 {strides = array<i32>} : memref<1x8x128xf32, #tpu.memory_space<vmem>>, vector<1x8x128xf32>,
    %cst_31 = arith.constant dense<0.000000e+00> : vector<128xf32>
    %37 = vector.multi_reduction <add>, %33, %cst_31 [0] : vector<8x128xf32> to vector<128xf32>
    %38 = vector.shape_cast %37 : vector<128xf32> to vector<1x128xf32>
    %39 = arith.mulf %33, %33 : vector<8x128xf32>
    %cst_32 = arith.constant dense<0.000000e+00> : vector<128xf32>
    %40 = vector.multi_reduction <add>, %39, %cst_32 [0] : vector<8x128xf32> to vector<128xf32>
    %41 = vector.shape_cast %40 : vector<128xf32> to vector<1x128xf32>
    %42 = tpu.iota {dimensions = array<i32: 0>} : vector<8x128xi32>
    %c0_i32 = arith.constant 0 : i32
    %43 = vector.broadcast %c0_i32 : i32 to vector<8x128xi32>
    %44 = arith.cmpi eq, %42, %43 : vector<8x128xi32>
    %c1_i32 = arith.constant 1 : i32
    %45 = vector.broadcast %c1_i32 : i32 to vector<8x128xi32>
    %46 = arith.cmpi eq, %42, %45 : vector<8x128xi32>
    %cst_33 = arith.constant 0.000000e+00 : f32
    %47 = vector.shape_cast %41 : vector<1x128xf32> to vector<1x128xf32>
    %48 = vector.broadcast %47 : vector<1x128xf32> to vector<8x128xf32>
    %49 = vector.broadcast %cst_33 : f32 to vector<8x128xf32>
    %50 = arith.select %46, %48, %49 : vector<8x128xi1>, vector<8x128xf32>
    %51 = vector.shape_cast %38 : vector<1x128xf32> to vector<1x128xf32>
    %52 = vector.broadcast %51 : vector<1x128xf32> to vector<8x128xf32>
    %53 = arith.select %44, %52, %50 : vector<8x128xi1>, vector<8x128xf32>
    %c0_34 = arith.constant 0 : index
    %c0_35 = arith.constant 0 : index
    %c0_36 = arith.constant 0 : index
    %54 = vector.load %arg7[%c0_34, %c0_35, %c0_36] : memref<1x8x128xf32, #tpu.memory_space<vmem>>, vector<1x8x128xf32>
    %55 = vector.shape_cast %54 : vector<1x8x128xf32> to vector<8x128xf32>
    %56 = vector.shape_cast %53 : vector<8x128xf32> to vector<1x8x128xf32>
    tpu.vector_store %arg7[%c0_34, %c0_35, %c0_36], %56 {strides = array<i32>} : memref<1x8x128xf32, #tpu.memory_space<vmem>>, vector<1x8x128xf32>,
    return
  }
  func.func @transform_0(%arg0: i32) -> (i32, i32, i32) {
    %c0_i32 = arith.constant 0 : i32
    %c0_i32_0 = arith.constant 0 : i32
    %c0_i32_1 = arith.constant 0 : i32
    return %arg0, %c0_i32, %c0_i32_0 : i32, i32, i32
  }
  func.func @transform_1(%arg0: i32) -> (i32, i32, i32) {
    %c0_i32 = arith.constant 0 : i32
    %c0_i32_0 = arith.constant 0 : i32
    %c0_i32_1 = arith.constant 0 : i32
    %c0_i32_2 = arith.constant 0 : i32
    return %c0_i32, %c0_i32_0, %c0_i32_1 : i32, i32, i32
  }
  func.func @transform_2(%arg0: i32) -> (i32, i32, i32) {
    %c0_i32 = arith.constant 0 : i32
    %c0_i32_0 = arith.constant 0 : i32
    %c0_i32_1 = arith.constant 0 : i32
    %c0_i32_2 = arith.constant 0 : i32
    return %c0_i32, %c0_i32_0, %c0_i32_1 : i32, i32, i32
  }
  func.func @transform_3(%arg0: i32) -> (i32, i32) {
    %c0_i32 = arith.constant 0 : i32
    %c0_i32_0 = arith.constant 0 : i32
    %c0_i32_1 = arith.constant 0 : i32
    return %c0_i32, %c0_i32_0 : i32, i32
  }
  func.func @transform_4(%arg0: i32) -> (i32, i32) {
    %c0_i32 = arith.constant 0 : i32
    %c0_i32_0 = arith.constant 0 : i32
    %c0_i32_1 = arith.constant 0 : i32
    return %c0_i32, %c0_i32_0 : i32, i32
  }
  func.func @transform_5(%arg0: i32) -> (i32, i32, i32) {
    %c0_i32 = arith.constant 0 : i32
    %c0_i32_0 = arith.constant 0 : i32
    %c0_i32_1 = arith.constant 0 : i32
    return %arg0, %c0_i32, %c0_i32_0 : i32, i32, i32
  }
  func.func @transform_6(%arg0: i32) -> (i32, i32, i32) {
    %c0_i32 = arith.constant 0 : i32
    %c0_i32_0 = arith.constant 0 : i32
    %c0_i32_1 = arith.constant 0 : i32
    return %arg0, %c0_i32, %c0_i32_0 : i32, i32, i32
  }
}

module attributes {stable_mosaic.version = 11 : i64} {
  func.func @kernel(%arg0: i32, %arg1: memref<1x8x128xf32, #tpu.memory_space<vmem>>, %arg2: memref<3x16x8xbf16, #tpu.memory_space<vmem>>, %arg3: memref<3x128x16xbf16, #tpu.memory_space<vmem>>, %arg4: memref<1x128xf32, #tpu.memory_space<vmem>>, %arg5: memref<1x128xf32, #tpu.memory_space<vmem>>, %arg6: memref<1x16xf32, #tpu.memory_space<vmem>>, %arg7: memref<1x16x16xf32, #tpu.memory_space<vmem>>) attributes {dimension_semantics = [#tpu.dimension_semantics<parallel>], iteration_bounds = array<i64: 2>, scalar_prefetch = 0 : i64, scratch_operands = 0 : i64, tpu.core_type = #tpu.core_type<tc>, window_params = [{transform_indices = @transform_0, window_bounds = array<i64: 1, 8, 128>}, {pipeline_mode = #tpu.pipeline_mode<synchronous>, transform_indices = @transform_1, window_bounds = array<i64: 3, 16, 8>}, {pipeline_mode = #tpu.pipeline_mode<synchronous>, transform_indices = @transform_2, window_bounds = array<i64: 3, 128, 16>}, {pipeline_mode = #tpu.pipeline_mode<synchronous>, transform_indices = @transform_3, window_bounds = array<i64: 1, 128>}, {pipeline_mode = #tpu.pipeline_mode<synchronous>, transform_indices = @transform_4, window_bounds = array<i64: 1, 128>}, {pipeline_mode = #tpu.pipeline_mode<synchronous>, transform_indices = @transform_5, window_bounds = array<i64: 1, 16>}, {transform_indices = @transform_6, window_bounds = array<i64: 1, 16, 16>}]} {
    %c0 = arith.constant 0 : index
    %c0_0 = arith.constant 0 : index
    %c0_1 = arith.constant 0 : index
    %0 = vector.load %arg1[%c0, %c0_0, %c0_1] : memref<1x8x128xf32, #tpu.memory_space<vmem>>, vector<1x8x128xf32>
    %1 = vector.shape_cast %0 : vector<1x8x128xf32> to vector<8x128xf32>
    %c0_2 = arith.constant 0 : index
    %c0_3 = arith.constant 0 : index
    %2 = vector.load %arg4[%c0_2, %c0_3] : memref<1x128xf32, #tpu.memory_space<vmem>>, vector<1x128xf32>
    %3 = vector.broadcast %2 : vector<1x128xf32> to vector<8x128xf32>
    %4 = arith.mulf %1, %3 : vector<8x128xf32>
    %c0_4 = arith.constant 0 : index
    %c0_5 = arith.constant 0 : index
    %5 = vector.load %arg5[%c0_4, %c0_5] : memref<1x128xf32, #tpu.memory_space<vmem>>, vector<1x128xf32>
    %6 = vector.broadcast %5 : vector<1x128xf32> to vector<8x128xf32>
    %7 = arith.addf %4, %6 : vector<8x128xf32>
    %cst = arith.constant 0.000000e+00 : f32
    %8 = vector.broadcast %cst : f32 to vector<8x128xf32>
    %9 = arith.maximumf %7, %8 : vector<8x128xf32>
    %10 = arith.truncf %9 : vector<8x128xf32> to vector<8x128xbf16>
    %c0_6 = arith.constant 0 : index
    %c0_7 = arith.constant 0 : index
    %c0_8 = arith.constant 0 : index
    %11 = vector.load %arg3[%c0_6, %c0_7, %c0_8] : memref<3x128x16xbf16, #tpu.memory_space<vmem>>, vector<1x128x16xbf16>
    %12 = vector.shape_cast %11 : vector<1x128x16xbf16> to vector<128x16xbf16>
    %cst_9 = arith.constant dense<0.000000e+00> : vector<8x16xf32>
    %13 = tpu.matmul %10, %12, %cst_9 {dimension_numbers = #tpu.dot_dimension_numbers<[1], [0], [0], [1], [0, 0, 1, 1], [], []>} : vector<8x128xbf16>, vector<128x16xbf16>, vector<8x16xf32> -> vector<8x16xf32>
    %c0_10 = arith.constant 0 : index
    %c0_11 = arith.constant 0 : index
    %c0_12 = arith.constant 0 : index
    %14 = vector.load %arg2[%c0_10, %c0_11, %c0_12] : memref<3x16x8xbf16, #tpu.memory_space<vmem>>, vector<1x16x8xbf16>
    %15 = vector.shape_cast %14 : vector<1x16x8xbf16> to vector<16x8xbf16>
    %16 = arith.truncf %13 : vector<8x16xf32> to vector<8x16xbf16>
    %cst_13 = arith.constant dense<0.000000e+00> : vector<16x16xf32>
    %17 = tpu.matmul %15, %16, %cst_13 {dimension_numbers = #tpu.dot_dimension_numbers<[1], [0], [0], [1], [0, 0, 1, 1], [], []>} : vector<16x8xbf16>, vector<8x16xbf16>, vector<16x16xf32> -> vector<16x16xf32>
    %c1 = arith.constant 1 : index
    %c0_14 = arith.constant 0 : index
    %c0_15 = arith.constant 0 : index
    %18 = vector.load %arg3[%c1, %c0_14, %c0_15] : memref<3x128x16xbf16, #tpu.memory_space<vmem>>, vector<1x128x16xbf16>
    %19 = vector.shape_cast %18 : vector<1x128x16xbf16> to vector<128x16xbf16>
    %cst_16 = arith.constant dense<0.000000e+00> : vector<8x16xf32>
    %20 = tpu.matmul %10, %19, %cst_16 {dimension_numbers = #tpu.dot_dimension_numbers<[1], [0], [0], [1], [0, 0, 1, 1], [], []>} : vector<8x128xbf16>, vector<128x16xbf16>, vector<8x16xf32> -> vector<8x16xf32>
    %c1_17 = arith.constant 1 : index
    %c0_18 = arith.constant 0 : index
    %c0_19 = arith.constant 0 : index
    %21 = vector.load %arg2[%c1_17, %c0_18, %c0_19] : memref<3x16x8xbf16, #tpu.memory_space<vmem>>, vector<1x16x8xbf16>
    %22 = vector.shape_cast %21 : vector<1x16x8xbf16> to vector<16x8xbf16>
    %23 = arith.truncf %20 : vector<8x16xf32> to vector<8x16xbf16>
    %cst_20 = arith.constant dense<0.000000e+00> : vector<16x16xf32>
    %24 = tpu.matmul %22, %23, %cst_20 {dimension_numbers = #tpu.dot_dimension_numbers<[1], [0], [0], [1], [0, 0, 1, 1], [], []>} : vector<16x8xbf16>, vector<8x16xbf16>, vector<16x16xf32> -> vector<16x16xf32>
    %25 = arith.addf %17, %24 : vector<16x16xf32>
    %c2 = arith.constant 2 : index
    %c0_21 = arith.constant 0 : index
    %c0_22 = arith.constant 0 : index
    %26 = vector.load %arg3[%c2, %c0_21, %c0_22] : memref<3x128x16xbf16, #tpu.memory_space<vmem>>, vector<1x128x16xbf16>
    %27 = vector.shape_cast %26 : vector<1x128x16xbf16> to vector<128x16xbf16>
    %cst_23 = arith.constant dense<0.000000e+00> : vector<8x16xf32>
    %28 = tpu.matmul %10, %27, %cst_23 {dimension_numbers = #tpu.dot_dimension_numbers<[1], [0], [0], [1], [0, 0, 1, 1], [], []>} : vector<8x128xbf16>, vector<128x16xbf16>, vector<8x16xf32> -> vector<8x16xf32>
    %c2_24 = arith.constant 2 : index
    %c0_25 = arith.constant 0 : index
    %c0_26 = arith.constant 0 : index
    %29 = vector.load %arg2[%c2_24, %c0_25, %c0_26] : memref<3x16x8xbf16, #tpu.memory_space<vmem>>, vector<1x16x8xbf16>
    %30 = vector.shape_cast %29 : vector<1x16x8xbf16> to vector<16x8xbf16>
    %31 = arith.truncf %28 : vector<8x16xf32> to vector<8x16xbf16>
    %cst_27 = arith.constant dense<0.000000e+00> : vector<16x16xf32>
    %32 = tpu.matmul %30, %31, %cst_27 {dimension_numbers = #tpu.dot_dimension_numbers<[1], [0], [0], [1], [0, 0, 1, 1], [], []>} : vector<16x8xbf16>, vector<8x16xbf16>, vector<16x16xf32> -> vector<16x16xf32>
    %33 = arith.addf %25, %32 : vector<16x16xf32>
    %c0_28 = arith.constant 0 : index
    %c0_29 = arith.constant 0 : index
    %34 = vector.load %arg6[%c0_28, %c0_29] : memref<1x16xf32, #tpu.memory_space<vmem>>, vector<1x16xf32>
    %35 = vector.broadcast %34 : vector<1x16xf32> to vector<16x16xf32>
    %36 = arith.addf %33, %35 : vector<16x16xf32>
    %37 = arith.negf %36 : vector<16x16xf32>
    %38 = math.exp %37 : vector<16x16xf32>
    %cst_30 = arith.constant 1.000000e+00 : f32
    %39 = vector.broadcast %cst_30 : f32 to vector<16x16xf32>
    %40 = arith.addf %39, %38 : vector<16x16xf32>
    %41 = arith.divf %39, %40 : vector<16x16xf32>
    %c0_31 = arith.constant 0 : index
    %c0_32 = arith.constant 0 : index
    %c0_33 = arith.constant 0 : index
    %42 = vector.load %arg7[%c0_31, %c0_32, %c0_33] : memref<1x16x16xf32, #tpu.memory_space<vmem>>, vector<1x16x16xf32>
    %43 = vector.shape_cast %42 : vector<1x16x16xf32> to vector<16x16xf32>
    %44 = vector.shape_cast %41 : vector<16x16xf32> to vector<1x16x16xf32>
    tpu.vector_store %arg7[%c0_31, %c0_32, %c0_33], %44 {strides = array<i32>} : memref<1x16x16xf32, #tpu.memory_space<vmem>>, vector<1x16x16xf32>,
    return
  }
  func.func @transform_0(%arg0: i32) -> (i32, i32, i32) {
    %c0_i32 = arith.constant 0 : i32
    %c0_i32_0 = arith.constant 0 : i32
    %c0_i32_1 = arith.constant 0 : i32
    return %arg0, %c0_i32, %c0_i32_0 : i32, i32, i32
  }
  func.func @transform_1(%arg0: i32) -> (i32, i32, i32) {
    %c0_i32 = arith.constant 0 : i32
    %c0_i32_0 = arith.constant 0 : i32
    %c0_i32_1 = arith.constant 0 : i32
    %c0_i32_2 = arith.constant 0 : i32
    return %c0_i32, %c0_i32_0, %c0_i32_1 : i32, i32, i32
  }
  func.func @transform_2(%arg0: i32) -> (i32, i32, i32) {
    %c0_i32 = arith.constant 0 : i32
    %c0_i32_0 = arith.constant 0 : i32
    %c0_i32_1 = arith.constant 0 : i32
    %c0_i32_2 = arith.constant 0 : i32
    return %c0_i32, %c0_i32_0, %c0_i32_1 : i32, i32, i32
  }
  func.func @transform_3(%arg0: i32) -> (i32, i32) {
    %c0_i32 = arith.constant 0 : i32
    %c0_i32_0 = arith.constant 0 : i32
    %c0_i32_1 = arith.constant 0 : i32
    return %c0_i32, %c0_i32_0 : i32, i32
  }
  func.func @transform_4(%arg0: i32) -> (i32, i32) {
    %c0_i32 = arith.constant 0 : i32
    %c0_i32_0 = arith.constant 0 : i32
    %c0_i32_1 = arith.constant 0 : i32
    return %c0_i32, %c0_i32_0 : i32, i32
  }
  func.func @transform_5(%arg0: i32) -> (i32, i32) {
    %c0_i32 = arith.constant 0 : i32
    %c0_i32_0 = arith.constant 0 : i32
    %c0_i32_1 = arith.constant 0 : i32
    return %c0_i32, %c0_i32_0 : i32, i32
  }
  func.func @transform_6(%arg0: i32) -> (i32, i32, i32) {
    %c0_i32 = arith.constant 0 : i32
    %c0_i32_0 = arith.constant 0 : i32
    %c0_i32_1 = arith.constant 0 : i32
    return %arg0, %c0_i32, %c0_i32_0 : i32, i32, i32
  }
}

</mosaic_0001>

<llo_original>
// kernel: tile.59
$region0: #{tile.59}
  %s0 = inlined_call_operand.vmem [shape: f32[8,16], index: 0, kind: input, shape index: {}]
  %s1 = inlined_call_operand.vmem [shape: f32[1,128], index: 1, kind: output, shape index: {}]
  $region1: #{tile.59} parent=0
    #allocation0 [shape = 'u8[4096]{0}', space=vmem, size = 0x1000, scoped, tag = 'scoped mem for output reshape']
    %v2 = vld [vmem:[%s0] sm:$0x1]
    %vm3 = vcmask 130048
    %4 = vst.msk [vmem:[#allocation0] sm:$0x1] %vm3, %v2
    %s5 = scalar_lea.vmem %s0, 7
    %v6 = vld [vmem:[%s5] sm:$0x1]
    %7 = vrot.lane.b32.xlu0 %v6, 112
    %v8 = vpop.permute.xlu0 %7
    %vm9 = vcmask 1048448
    %10 = vst.msk [vmem:[#allocation0] sm:$0x1] %vm9, %v8
    %s11 = scalar_lea.vmem %s0, 6
    %v12 = vld [vmem:[%s11] sm:$0x1]
    %13 = vrot.lane.b32.xlu0 %v12, 96
    %v14 = vpop.permute.xlu0 %13
    %vm15 = vcmask 917248
    %16 = vst.msk [vmem:[#allocation0] sm:$0x1] %vm15, %v14
    %s17 = scalar_lea.vmem %s0, 5
    %v18 = vld [vmem:[%s17] sm:$0x1]
    %19 = vrot.lane.b32.xlu0 %v18, 80
    %v20 = vpop.permute.xlu0 %19
    %vm21 = vcmask 786048
    %22 = vst.msk [vmem:[#allocation0] sm:$0x1] %vm21, %v20
    %s23 = scalar_lea.vmem %s0, 4
    %v24 = vld [vmem:[%s23] sm:$0x1]
    %25 = vrot.lane.b32.xlu0 %v24, 64
    %v26 = vpop.permute.xlu0 %25
    %vm27 = vcmask 654848
    %28 = vst.msk [vmem:[#allocation0] sm:$0x1] %vm27, %v26
    %s29 = scalar_lea.vmem %s0, 3
    %v30 = vld [vmem:[%s29] sm:$0x1]
    %31 = vrot.lane.b32.xlu0 %v30, 48
    %v32 = vpop.permute.xlu0 %31
    %vm33 = vcmask 523648
    %34 = vst.msk [vmem:[#allocation0] sm:$0x1] %vm33, %v32
    %s35 = scalar_lea.vmem %s0, 2
    %v36 = vld [vmem:[%s35] sm:$0x1]
    %37 = vrot.lane.b32.xlu0 %v36, 32
    %v38 = vpop.permute.xlu0 %37
    %vm39 = vcmask 392448
    %40 = vst.msk [vmem:[#allocation0] sm:$0x1] %vm39, %v38
    %s41 = scalar_lea.vmem %s0, 1
    %v42 = vld [vmem:[%s41] sm:$0x1]
    %43 = vrot.lane.b32.xlu0 %v42, 16
    %v44 = vpop.permute.xlu0 %43
    %vm45 = vcmask 261248
    %46 = vst.msk [vmem:[#allocation0] sm:$0x1] %vm45, %v44
    %s48 = sshllo.u32 0, 1
    %v50 = vld [vmem:[#allocation0] sm:%s48]
    %s51 = sshllo.u32 0, 1
    %52 = vst [vmem:[%s1] sm:%s51] %v50

// kernel: tile.58
$region0: #{tile.58}
  #allocation0 [shape = 's32[1]{0}', space=sflag, size = 0x4, scoped, tag = 'scoped memory for tile.58']
  %s0 = inlined_call_operand.vmem [shape: f32[16], index: 0, kind: input, shape index: {}]
  %s1 = inlined_call_operand.vmem [shape: f32[8,16], index: 1, kind: output, shape index: {}]
  // Predicated region
  $region2: #{tile.58} parent=0 // pred_check
    _
  $region3: #{tile.58} parent=0 // pred_check_branch
    %3 = sbr.rel (0) target = $region5
  $region4: #{tile.58} parent=0 // pred_region
    _
  $region5: #{tile.58} parent=0 // pred_fallthru
    _
  %v4 = vld [vmem:[%s0] ss:$0 sm:$0xff]
  %5 = vst [vmem:[%s1] sm:$0xff] %v4

// kernel: tile.68
$region0: #{tile.68}
  #allocation0 [shape = 's32[1]{0}', space=sflag, size = 0x4, scoped, tag = 'scoped memory for tile.68']
  %s0 = inlined_call_operand.vmem [shape: f32[32], index: 0, kind: input, shape index: {}]
  %s1 = inlined_call_operand.vmem [shape: f32[4,32], index: 1, kind: output, shape index: {}]
  // Predicated region
  $region2: #{tile.68} parent=0 // pred_check
    _
  $region3: #{tile.68} parent=0 // pred_check_branch
    %3 = sbr.rel (0) target = $region5
  $region4: #{tile.68} parent=0 // pred_region
    _
  $region5: #{tile.68} parent=0 // pred_fallthru
    _
  %v4 = vld [vmem:[%s0] ss:$0 sm:$0xff]
  %5 = vst [vmem:[%s1] sm:$0xf] %v4

// kernel: tile.69
$region0: #{tile.69}
  %s0 = inlined_call_operand.vmem [shape: f32[4,32], index: 0, kind: input, shape index: {}]
  %s1 = inlined_call_operand.vmem [shape: f32[1,128], index: 1, kind: output, shape index: {}]
  $region1: #{tile.69} parent=0
    #allocation0 [shape = 'u8[4096]{0}', space=vmem, size = 0x1000, scoped, tag = 'scoped mem for output reshape']
    #allocation1 [shape = 'u8[4096]{0}', space=vmem, size = 0x1000, scoped, tag = 'scoped mem for input reshape']
    %s3 = sshllo.u32 0, 4
    %v4 = vld [vmem:[%s0] sm:%s3]
    %5 = vst [vmem:[#allocation1] sm:%s3] %v4
    %v6 = vld [vmem:[#allocation1] sm:$0x1]
    %vm7 = vcmask 261120
    %8 = vst.msk [vmem:[#allocation0] sm:$0x1] %vm7, %v6
    %s9 = scalar_lea.vmem [#allocation1], 3
    %v10 = vld [vmem:[%s9] sm:$0x1]
    %11 = vrot.lane.b32.xlu0 %v10, 96
    %v12 = vpop.permute.xlu0 %11
    %vm13 = vcmask 1048320
    %14 = vst.msk [vmem:[#allocation0] sm:$0x1] %vm13, %v12
    %s15 = scalar_lea.vmem [#allocation1], 2
    %v16 = vld [vmem:[%s15] sm:$0x1]
    %17 = vrot.lane.b32.xlu0 %v16, 64
    %v18 = vpop.permute.xlu0 %17
    %vm19 = vcmask 785920
    %20 = vst.msk [vmem:[#allocation0] sm:$0x1] %vm19, %v18
    %s21 = scalar_lea.vmem [#allocation1], 1
    %v22 = vld [vmem:[%s21] sm:$0x1]
    %23 = vrot.lane.b32.xlu0 %v22, 32
    %v24 = vpop.permute.xlu0 %23
    %vm25 = vcmask 523520
    %26 = vst.msk [vmem:[#allocation0] sm:$0x1] %vm25, %v24
    %s28 = sshllo.u32 0, 1
    %v30 = vld [vmem:[#allocation0] sm:%s28]
    %s31 = sshllo.u32 0, 1
    %32 = vst [vmem:[%s1] sm:%s31] %v30

// kernel: tile.78
$region0: #{tile.78}
  #allocation0 [shape = 's32[1]{0}', space=sflag, size = 0x4, scoped, tag = 'scoped memory for tile.78']
  %s0 = inlined_call_operand.vmem [shape: f32[64], index: 0, kind: input, shape index: {}]
  %s1 = inlined_call_operand.vmem [shape: f32[2,64], index: 1, kind: output, shape index: {}]
  // Predicated region
  $region2: #{tile.78} parent=0 // pred_check
    _
  $region3: #{tile.78} parent=0 // pred_check_branch
    %3 = sbr.rel (0) target = $region5
  $region4: #{tile.78} parent=0 // pred_region
    _
  $region5: #{tile.78} parent=0 // pred_fallthru
    _
  %v4 = vld [vmem:[%s0] ss:$0 sm:$0xff]
  %5 = vst [vmem:[%s1] sm:$0x3] %v4

// kernel: tile.79
$region0: #{tile.79}
  %s0 = inlined_call_operand.vmem [shape: f32[2,64], index: 0, kind: input, shape index: {}]
  %s1 = inlined_call_operand.vmem [shape: f32[1,128], index: 1, kind: output, shape index: {}]
  $region1: #{tile.79} parent=0
    #allocation0 [shape = 'u8[4096]{0}', space=vmem, size = 0x1000, scoped, tag = 'scoped mem for output reshape']
    #allocation1 [shape = 'u8[4096]{0}', space=vmem, size = 0x1000, scoped, tag = 'scoped mem for input reshape']
    %s3 = sshllo.u32 0, 2
    %v4 = vld [vmem:[%s0] sm:%s3]
    %5 = vst [vmem:[#allocation1] sm:%s3] %v4
    %v6 = vld [vmem:[#allocation1] sm:$0x1]
    %vm7 = vcmask 523264
    %8 = vst.msk [vmem:[#allocation0] sm:$0x1] %vm7, %v6
    %s9 = scalar_lea.vmem [#allocation1], 1
    %v10 = vld [vmem:[%s9] sm:$0x1]
    %11 = vrot.lane.b32.xlu0 %v10, 64
    %v12 = vpop.permute.xlu0 %11
    %vm13 = vcmask 1048064
    %14 = vst.msk [vmem:[#allocation0] sm:$0x1] %vm13, %v12
    %s16 = sshllo.u32 0, 1
    %v18 = vld [vmem:[#allocation0] sm:%s16]
    %s19 = sshllo.u32 0, 1
    %20 = vst [vmem:[%s1] sm:%s19] %v18

// kernel: autoencoder_forward.6
$region0: #{autoencoder_forward.6}
  #allocation0 [shape = 'u32[]', space=smem, size = 0x4, offset = 0x4, fixed_abs, tag = 'smem constant byte address 0x4 - core index']
  #allocation1 [shape = 'u32[144,128]{1,0:T(1,128)}', space=vmem, size = 0x12000, scoped, tag = 'internal scratch']
  %s0 = inlined_call_operand.hbm [shape: f32[2,16,16], index: 0, kind: input, shape index: {}]
  %s1 = inlined_call_operand.hbm [shape: bf16[3,8,16], index: 1, kind: input, shape index: {}]
  %s2 = inlined_call_operand.hbm [shape: bf16[3,16,128], index: 2, kind: input, shape index: {}]
  %s3 = inlined_call_operand.vmem [shape: f32[2,8,128], index: 3, kind: output, shape index: {0}]
  %s4 = inlined_call_operand.vmem [shape: f32[2,8,128], index: 4, kind: output, shape index: {1}]
  %5 = xla_tuple %s3, %s4
  %s6 = sld [smem:[#allocation0]]
  $region65: #{autoencoder_forward.6} parent=0
    _
  %s8 = ssub.s32 1, %s6
  %s9 = scalar_select 0, %s8, %s6
  $region1: #{autoencoder_forward.6} parent=0
    #allocation2 [shape = 'u8[16384]{0}', space=vmem, size = 0x4000, scoped, tag = 'input window, operand 0']
    #allocation3 [shape = 's32[2]{0}', space=sflag, size = 0x8, scoped, tag = 'scoped memory for autoencoder_forward.6']
    #allocation4 [shape = 'u8[6144]{0}', space=vmem, size = 0x1800, scoped, tag = 'input window, operand 1, single buffered']
    #allocation5 [shape = 's32[1]{0}', space=sflag, size = 0x4, scoped, tag = 'scoped memory for autoencoder_forward.6']
    #allocation6 [shape = 'u8[12288]{0}', space=vmem, size = 0x3000, scoped, tag = 'input window, operand 2, single buffered']
    %10 = vsyncpa [#allocation3], 0
    %s11 = scalar_lea.sflag [#allocation3], 1
    %12 = vsyncpa %s11, 0
    %13 = vsyncpa [#allocation5], 0
    loop: start=0, step=1, limit=4
    $region2: #{autoencoder_forward.6} parent=1 // loop_pre_header
      _
    $region3: #{autoencoder_forward.6} parent=1 // loop_header
      %s15 = sphi 0, %s19
      %p16 = scmp.ge.s32.totalorder %s15, 4
      %s25 = sphi 0, %s27
      %s28 = sphi 0, %s25
      %s29 = sphi 0, %s28
      %s45 = sphi 0, %s29
      %s49 = sphi 0, %s49
      %s51 = sphi 0, %s49
      %s52 = sphi 0, %s51
      %s66 = sphi 0, %s52
      %s70 = sphi 0, %s70
      %s72 = sphi 0, %s70
      %s73 = sphi 0, %s72
      %s87 = sphi 0, %s73
      %s93 = sphi 0, %s95
      %s96 = sphi 0, %s93
      %s97 = sphi 0, %s96
      %s113 = sphi 0, %s97
      %s119 = sphi 0, %s121
      %s122 = sphi 0, %s119
      %s123 = sphi 0, %s122
      %s139 = sphi 0, %s123
    $region4: #{autoencoder_forward.6} parent=1 // loop_header_branch
      %18 = sbr.rel (%p16) target = $region8
    $region5: #{autoencoder_forward.6} parent=1 // loop_body
      %s20 = ssub.s32 %s15, 1
      %s21 = ssub.s32 %s15, 2
      %s22 = sadd.s32 %s15, 1
      %s23 = ssub.s32 %s15, %s22
      %p24 = scmp.eq.s32.totalorder %s23, 0
      %s26 = sadd.s32 %s25, 1
      %s27 = scalar_select %p24, %s25, %s26
      %p30 = pneg %p24
      %p31 = scmp.eq.s32.totalorder %s15, 1
      %p32 = por %p30, %p31
      %p33 = scmp.ne.s32.totalorder %s25, %s28
      %p34 = scmp.eq.s32.totalorder %s15, 0
      %p35 = por %p33, %p34
      %p36 = scmp.ne.s32.totalorder %s25, %s28
      %p37 = scmp.eq.s32.totalorder %s20, 1
      %p38 = por %p36, %p37
      %p39 = scmp.ne.s32.totalorder %s28, %s29
      %p40 = scmp.eq.s32.totalorder %s20, 0
      %p41 = por %p39, %p40
      %p42 = scmp.ne.s32.totalorder %s28, %s29
      %p43 = scmp.eq.s32.totalorder %s21, 1
      %p44 = por %p42, %p43
      %p46 = scmp.ne.s32.totalorder %s29, %s45
      %p47 = scmp.eq.s32.totalorder %s21, 0
      %p48 = por %p46, %p47
      %s50 = sadd.s32 %s49, 1
      %p53 = scmp.eq.s32.totalorder %s15, 1
      %p54 = scmp.ne.s32.totalorder %s49, %s51
      %p55 = scmp.eq.s32.totalorder %s15, 0
      %p56 = por %p54, %p55
      %p57 = scmp.ne.s32.totalorder %s49, %s51
      %p58 = scmp.eq.s32.totalorder %s20, 1
      %p59 = por %p57, %p58
      %p60 = scmp.ne.s32.totalorder %s51, %s52
      %p61 = scmp.eq.s32.totalorder %s20, 0
      %p62 = por %p60, %p61
      %p63 = scmp.ne.s32.totalorder %s51, %s52
      %p64 = scmp.eq.s32.totalorder %s21, 1
      %p65 = por %p63, %p64
      %p67 = scmp.ne.s32.totalorder %s52, %s66
      %p68 = scmp.eq.s32.totalorder %s21, 0
      %p69 = por %p67, %p68
      %s71 = sadd.s32 %s70, 1
      %p74 = scmp.eq.s32.totalorder %s15, 1
      %p75 = scmp.ne.s32.totalorder %s70, %s72
      %p76 = scmp.eq.s32.totalorder %s15, 0
      %p77 = por %p75, %p76
      %p78 = scmp.ne.s32.totalorder %s70, %s72
      %p79 = scmp.eq.s32.totalorder %s20, 1
      %p80 = por %p78, %p79
      %p81 = scmp.ne.s32.totalorder %s72, %s73
      %p82 = scmp.eq.s32.totalorder %s20, 0
      %p83 = por %p81, %p82
      %p84 = scmp.ne.s32.totalorder %s72, %s73
      %p85 = scmp.eq.s32.totalorder %s21, 1
      %p86 = por %p84, %p85
      %p88 = scmp.ne.s32.totalorder %s73, %s87
      %p89 = scmp.eq.s32.totalorder %s21, 0
      %p90 = por %p88, %p89
      %s91 = ssub.s32 %s15, %s22
      %p92 = scmp.eq.s32.totalorder %s91, 0
      %s94 = sadd.s32 %s93, 1
      %s95 = scalar_select %p92, %s93, %s94
      %p98 = pneg %p92
      %p99 = scmp.eq.s32.totalorder %s15, 1
      %p100 = por %p98, %p99
      %p101 = scmp.ne.s32.totalorder %s93, %s96
      %p102 = scmp.eq.s32.totalorder %s15, 0
      %p103 = por %p101, %p102
      %p104 = scmp.ne.s32.totalorder %s93, %s96
      %p105 = scmp.eq.s32.totalorder %s20, 1
      %p106 = por %p104, %p105
      %p107 = scmp.ne.s32.totalorder %s96, %s97
      %p108 = scmp.eq.s32.totalorder %s20, 0
      %p109 = por %p107, %p108
      %p110 = scmp.ne.s32.totalorder %s96, %s97
      %p111 = scmp.eq.s32.totalorder %s21, 1
      %p112 = por %p110, %p111
      %p114 = scmp.ne.s32.totalorder %s97, %s113
      %p115 = scmp.eq.s32.totalorder %s21, 0
      %p116 = por %p114, %p115
      %s117 = ssub.s32 %s15, %s22
      %p118 = scmp.eq.s32.totalorder %s117, 0
      %s120 = sadd.s32 %s119, 1
      %s121 = scalar_select %p118, %s119, %s120
      %p124 = pneg %p118
      %p125 = scmp.eq.s32.totalorder %s15, 1
      %p126 = por %p124, %p125
      %p127 = scmp.ne.s32.totalorder %s119, %s122
      %p128 = scmp.eq.s32.totalorder %s15, 0
      %p129 = por %p127, %p128
      %p130 = scmp.ne.s32.totalorder %s119, %s122
      %p131 = scmp.eq.s32.totalorder %s20, 1
      %p132 = por %p130, %p131
      %p133 = scmp.ne.s32.totalorder %s122, %s123
      %p134 = scmp.eq.s32.totalorder %s20, 0
      %p135 = por %p133, %p134
      %p136 = scmp.ne.s32.totalorder %s122, %s123
      %p137 = scmp.eq.s32.totalorder %s21, 1
      %p138 = por %p136, %p137
      %p140 = scmp.ne.s32.totalorder %s123, %s139
      %p141 = scmp.eq.s32.totalorder %s21, 0
      %p142 = por %p140, %p141
      %p143 = scmp.le.s32.totalorder 1, %s15
      %p144 = scmp.lt.s32.totalorder %s15, 3
      %p145 = pnand %p143, %p144
      %p146 = pneg %p145
      // Predicated region
      $region9: #{autoencoder_forward.6} parent=5 // pred_check
        _
      $region10: #{autoencoder_forward.6} parent=5 // pred_check_branch
        %148 = sbr.rel (%p145) target = $region12
      $region11: #{autoencoder_forward.6} parent=5 // pred_region
        %s149 = ssub.s32 %s15, 1
        // Predicated region
        $region13: #{autoencoder_forward.6} parent=11 // pred_check
          %p150 = pneg %p62
        $region14: #{autoencoder_forward.6} parent=11 // pred_check_branch
          %152 = sbr.rel (%p150) target = $region16
        $region15: #{autoencoder_forward.6} parent=11 // pred_region
          %s154 = ssub.s32 192, 192
          %155 = vsyncadd [#allocation5], %s154
          %s156 = sshll.u32 [#allocation4], 4
          %s157 = int_to_ptr.vmem [resolvable:$true] %s156
          %162 = dma.hbm_to_vmem [thread:$0]  %s1, 192, %s157, [#allocation5], 64, 64, 4
        $region16: #{autoencoder_forward.6} parent=11 // pred_fallthru
          _
        // Predicated region
        $region17: #{autoencoder_forward.6} parent=11 // pred_check
          %p163 = pneg %p83
        $region18: #{autoencoder_forward.6} parent=11 // pred_check_branch
          %165 = sbr.rel (%p163) target = $region20
        $region19: #{autoencoder_forward.6} parent=11 // pred_region
          %s167 = ssub.s32 384, 384
          %168 = vsyncadd [#allocation5], %s167
          %s169 = sshll.u32 [#allocation6], 4
          %s170 = int_to_ptr.vmem [resolvable:$true] %s169
          %175 = dma.hbm_to_vmem [thread:$0]  %s2, 384, %s170, [#allocation5], 64, 64, 4
        $region20: #{autoencoder_forward.6} parent=11 // pred_fallthru
          _
      $region12: #{autoencoder_forward.6} parent=5 // pred_fallthru
        _
      %p176 = scmp.lt.s32.totalorder %s15, 2
      // Predicated region
      $region21: #{autoencoder_forward.6} parent=5 // pred_check
        %p177 = pneg %p176
      $region22: #{autoencoder_forward.6} parent=5 // pred_check_branch
        %179 = sbr.rel (%p177) target = $region24
      $region23: #{autoencoder_forward.6} parent=5 // pred_region
        // Predicated region
        $region25: #{autoencoder_forward.6} parent=23 // pred_check
          %p180 = pneg %p35
        $region26: #{autoencoder_forward.6} parent=23 // pred_check_branch
          %182 = sbr.rel (%p180) target = $region28
        $region27: #{autoencoder_forward.6} parent=23 // pred_region
          %s183 = sand.u32 %s25, 1
          %s184 = scalar_lea.sflag [#allocation3], %s183
          %s185 = sand.u32 %s25, 1
          %s186 = smul.addr %s185, 16
          %s187 = scalar_lea.vmem [#allocation2], %s186
          %s189 = ssub.s32 256, 256
          %190 = vsyncadd %s184, %s189
          %s191 = smul.addr %s15, 2
          %s192 = smul.addr %s191, 128
          %s193 = scalar_lea.hbm %s0, %s192
          %s194 = sshll.u32 %s187, 4
          %s195 = int_to_ptr.vmem [resolvable:$true] %s194
          %200 = dma.hbm_to_vmem [thread:$0]  %s193, 256, %s195, %s184, 128, 128, 8
        $region28: #{autoencoder_forward.6} parent=23 // pred_fallthru
          _
      $region24: #{autoencoder_forward.6} parent=5 // pred_fallthru
        _
      %p201 = scmp.le.s32.totalorder 1, %s15
      %p202 = scmp.lt.s32.totalorder %s15, 3
      %p203 = pnand %p201, %p202
      %p204 = pneg %p203
      // Predicated region
      $region29: #{autoencoder_forward.6} parent=5 // pred_check
        _
      $region30: #{autoencoder_forward.6} parent=5 // pred_check_branch
        %206 = sbr.rel (%p203) target = $region32
      $region31: #{autoencoder_forward.6} parent=5 // pred_region
        %s207 = ssub.s32 %s15, 1
        %s208 = sand.u32 %s28, 1
        %s209 = scalar_lea.sflag [#allocation3], %s208
        %s210 = sand.u32 %s28, 1
        %s211 = smul.addr %s210, 16
        %s212 = scalar_lea.vmem [#allocation2], %s211
        // Predicated region
        $region33: #{autoencoder_forward.6} parent=31 // pred_check
          %p213 = pneg %p41
        $region34: #{autoencoder_forward.6} parent=31 // pred_check_branch
          %215 = sbr.rel (%p213) target = $region36
        $region35: #{autoencoder_forward.6} parent=31 // pred_region
          %216 = dma.done %s209, 256
        $region36: #{autoencoder_forward.6} parent=31 // pred_fallthru
          _
        // Predicated region
        $region37: #{autoencoder_forward.6} parent=31 // pred_check
          %p217 = pneg %p62
        $region38: #{autoencoder_forward.6} parent=31 // pred_check_branch
          %219 = sbr.rel (%p217) target = $region40
        $region39: #{autoencoder_forward.6} parent=31 // pred_region
          %220 = dma.done [#allocation5], 192
        $region40: #{autoencoder_forward.6} parent=31 // pred_fallthru
          _
        // Predicated region
        $region41: #{autoencoder_forward.6} parent=31 // pred_check
          %p221 = pneg %p83
        $region42: #{autoencoder_forward.6} parent=31 // pred_check_branch
          %223 = sbr.rel (%p221) target = $region44
        $region43: #{autoencoder_forward.6} parent=31 // pred_region
          %224 = dma.done [#allocation5], 384
        $region44: #{autoencoder_forward.6} parent=31 // pred_fallthru
          _
        %s225 = sand.u32 %s28, 1
        %s226 = scalar_lea.sflag [#allocation3], %s225
        %s227 = sand.u32 %s28, 1
        %s228 = smul.addr %s227, 16
        %s229 = scalar_lea.vmem [#allocation2], %s228
        %p230 = pneg %p41
        %p231 = pneg %p38
        %p232 = pneg %p62
        %p233 = pneg %p59
        %p234 = pneg %p83
        %p235 = pneg %p80
        %p236 = pneg %p109
        %p237 = pneg %p106
        %p238 = scmp.lt.s32.totalorder %s20, 1
        %s239 = scalar_select %p238, %s20, 1
        %s240 = smul.addr %s239, 8
        %s241 = scalar_lea.vmem %s3, %s240
        %p242 = pneg %p135
        %p243 = pneg %p132
        %p244 = scmp.lt.s32.totalorder %s20, 1
        %s245 = scalar_select %p244, %s20, 1
        %s246 = smul.addr %s245, 8
        %s247 = scalar_lea.vmem %s4, %s246
        %p248 = scmp.lt.s32.totalorder %s20, 1
        %s249 = scalar_select %p248, %s20, 1
        %s250 = smul.addr %s249, 8
        %s251 = scalar_lea.vmem %s3, %s250
        %p252 = scmp.lt.s32.totalorder %s20, 1
        %s253 = scalar_select %p252, %s20, 1
        %s254 = smul.addr %s253, 8
        %s255 = scalar_lea.vmem %s4, %s254
        %v257 = vld [vmem:[%s212] sm:$0xff]
        %v258 = vld [vmem:[%s212 + $0x8] sm:$0xff]
        %v259 = vpack.c.bf16 %v258, %v257
        %v260 = vld [vmem:[#allocation4] sm:$0xf]
        %vm261 = vcmask 130048
        %v263 = vsel %vm261, %v260, 0
        %265 = vmatprep.subr.bf16.mxu0 0
        %266 = vmatpush1.bf16.msra.mxu0 %v259
        %267 = vmatprep.subr.bf16.mxu0 0
        %268 = vmatpush1.bf16.msra.mxu0 0
        %269 = vmatprep.subr.bf16.mxu0 0
        %270 = vmatpush1.bf16.msra.mxu0 0
        %271 = vmatprep.subr.bf16.mxu0 0
        %272 = vmatpush1.bf16.msra.mxu0 0
        %273 = vmatprep.subr.bf16.mxu0 0
        %274 = vmatpush1.bf16.msra.mxu0 0
        %275 = vmatprep.subr.bf16.mxu0 0
        %276 = vmatpush1.bf16.msra.mxu0 0
        %277 = vmatprep.subr.bf16.mxu0 0
        %278 = vmatpush1.bf16.msra.mxu0 0
        %279 = vmatprep.subr.bf16.mxu0 0
        %280 = vmatpush1.bf16.msra.mxu0 0
        %281 = vmatprep.subr.bf16.mxu0 0
        %282 = vmatpush1.bf16.msra.mxu0 0
        %283 = vmatprep.subr.bf16.mxu0 0
        %284 = vmatpush1.bf16.msra.mxu0 0
        %285 = vmatprep.subr.bf16.mxu0 0
        %286 = vmatpush1.bf16.msra.mxu0 0
        %287 = vmatprep.subr.bf16.mxu0 0
        %288 = vmatpush1.bf16.msra.mxu0 0
        %289 = vmatprep.subr.bf16.mxu0 0
        %290 = vmatpush1.bf16.msra.mxu0 0
        %291 = vmatprep.subr.bf16.mxu0 0
        %292 = vmatpush1.bf16.msra.mxu0 0
        %293 = vmatprep.subr.bf16.mxu0 0
        %294 = vmatpush1.bf16.msra.mxu0 0
        %295 = vmatprep.subr.bf16.mxu0 0
        %296 = vmatpush1.bf16.msra.mxu0 0
        %297 = vmatprep.mubr.bf16.mxu0 0
        %298 = vmatmul.mubr.bf16.gmra.mrb[0].mxu0 %v263
        %v299 = vpop.f32.mrb[0].mxu0
        %v300 = vadd.f32 0.0, %v299
        %v301 = vpop.f32.mrb[0].mxu0
        %v302 = vpop.f32.mrb[0].mxu0
        %v303 = vpop.f32.mrb[0].mxu0
        %304 = vdwg.mxu0
        %v305 = vpack.c.bf16 %v300, %v300
        %v306 = vld [vmem:[#allocation6] sm:$0xf]
        %v307 = vld [vmem:[#allocation6 + $0x4] sm:$0xf]
        %s308 = scalar_lea.vmem [#allocation4], 4
        %v309 = vld [vmem:[%s308] sm:$0xf]
        %v311 = vsel %vm261, %v309, 0
        %313 = vmatprep.subr.bf16.mxu0 0
        %314 = vmatpush1.bf16.msra.mxu0 %v259
        %315 = vmatprep.subr.bf16.mxu0 0
        %316 = vmatpush1.bf16.msra.mxu0 0
        %317 = vmatprep.subr.bf16.mxu0 0
        %318 = vmatpush1.bf16.msra.mxu0 0
        %319 = vmatprep.subr.bf16.mxu0 0
        %320 = vmatpush1.bf16.msra.mxu0 0
        %321 = vmatprep.subr.bf16.mxu0 0
        %322 = vmatpush1.bf16.msra.mxu0 0
        %323 = vmatprep.subr.bf16.mxu0 0
        %324 = vmatpush1.bf16.msra.mxu0 0
        %325 = vmatprep.subr.bf16.mxu0 0
        %326 = vmatpush1.bf16.msra.mxu0 0
        %327 = vmatprep.subr.bf16.mxu0 0
        %328 = vmatpush1.bf16.msra.mxu0 0
        %329 = vmatprep.subr.bf16.mxu0 0
        %330 = vmatpush1.bf16.msra.mxu0 0
        %331 = vmatprep.subr.bf16.mxu0 0
        %332 = vmatpush1.bf16.msra.mxu0 0
        %333 = vmatprep.subr.bf16.mxu0 0
        %334 = vmatpush1.bf16.msra.mxu0 0
        %335 = vmatprep.subr.bf16.mxu0 0
        %336 = vmatpush1.bf16.msra.mxu0 0
        %337 = vmatprep.subr.bf16.mxu0 0
        %338 = vmatpush1.bf16.msra.mxu0 0
        %339 = vmatprep.subr.bf16.mxu0 0
        %340 = vmatpush1.bf16.msra.mxu0 0
        %341 = vmatprep.subr.bf16.mxu0 0
        %342 = vmatpush1.bf16.msra.mxu0 0
        %343 = vmatprep.subr.bf16.mxu0 0
        %344 = vmatpush1.bf16.msra.mxu0 0
        %345 = vmatprep.mubr.bf16.mxu0 0
        %346 = vmatmul.mubr.bf16.gmra.mrb[0].mxu0 %v311
        %v347 = vpop.f32.mrb[0].mxu0
        %v348 = vadd.f32 0.0, %v347
        %v349 = vpop.f32.mrb[0].mxu0
        %v350 = vpop.f32.mrb[0].mxu0
        %v351 = vpop.f32.mrb[0].mxu0
        %352 = vdwg.mxu0
        %v353 = vpack.c.bf16 %v348, %v348
        %s354 = scalar_lea.vmem [#allocation6], 8
        %v355 = vld [vmem:[%s354] sm:$0xf]
        %v356 = vld [vmem:[%s354 + $0x4] sm:$0xf]
        %v359 = vunpack.c.l.b16 %v355
        %v360 = vunpack.c.l.b16 %v356
        %v361 = vpack.c.b16 %v360, %v359
        %v364 = vsel %vm261, %v353, 0
        %366 = vmatprep.subr.bf16.mxu0 0
        %367 = vmatpush1.bf16.msra.mxu0 %v361
        %368 = vmatprep.subr.bf16.mxu0 0
        %369 = vmatpush1.bf16.msra.mxu0 0
        %370 = vmatprep.subr.bf16.mxu0 0
        %371 = vmatpush1.bf16.msra.mxu0 0
        %372 = vmatprep.subr.bf16.mxu0 0
        %373 = vmatpush1.bf16.msra.mxu0 0
        %374 = vmatprep.subr.bf16.mxu0 0
        %375 = vmatpush1.bf16.msra.mxu0 0
        %376 = vmatprep.subr.bf16.mxu0 0
        %377 = vmatpush1.bf16.msra.mxu0 0
        %378 = vmatprep.subr.bf16.mxu0 0
        %379 = vmatpush1.bf16.msra.mxu0 0
        %380 = vmatprep.subr.bf16.mxu0 0
        %381 = vmatpush1.bf16.msra.mxu0 0
        %382 = vmatprep.subr.bf16.mxu0 0
        %383 = vmatpush1.bf16.msra.mxu0 0
        %384 = vmatprep.subr.bf16.mxu0 0
        %385 = vmatpush1.bf16.msra.mxu0 0
        %386 = vmatprep.subr.bf16.mxu0 0
        %387 = vmatpush1.bf16.msra.mxu0 0
        %388 = vmatprep.subr.bf16.mxu0 0
        %389 = vmatpush1.bf16.msra.mxu0 0
        %390 = vmatprep.subr.bf16.mxu0 0
        %391 = vmatpush1.bf16.msra.mxu0 0
        %392 = vmatprep.subr.bf16.mxu0 0
        %393 = vmatpush1.bf16.msra.mxu0 0
        %394 = vmatprep.subr.bf16.mxu0 0
        %395 = vmatpush1.bf16.msra.mxu0 0
        %396 = vmatprep.subr.bf16.mxu0 0
        %397 = vmatpush1.bf16.msra.mxu0 0
        %398 = vmatprep.mubr.bf16.mxu0 0
        %399 = vmatmul.mubr.bf16.gmra.mrb[0].mxu0 %v364
        %v400 = vpop.f32.mrb[0].mxu0
        %v401 = vadd.f32 0.0, %v400
        %v402 = vpop.f32.mrb[0].mxu0
        %v403 = vpop.f32.mrb[0].mxu0
        %v404 = vpop.f32.mrb[0].mxu0
        %405 = vdwg.mxu0
        %v408 = vunpack.c.l.b16 %v306
        %v409 = vunpack.c.l.b16 %v307
        %v410 = vpack.c.b16 %v409, %v408
        %v413 = vsel %vm261, %v305, 0
        %415 = vmatprep.subr.bf16.mxu0 0
        %416 = vmatpush1.bf16.msra.mxu0 %v410
        %417 = vmatprep.subr.bf16.mxu0 0
        %418 = vmatpush1.bf16.msra.mxu0 0
        %419 = vmatprep.subr.bf16.mxu0 0
        %420 = vmatpush1.bf16.msra.mxu0 0
        %421 = vmatprep.subr.bf16.mxu0 0
        %422 = vmatpush1.bf16.msra.mxu0 0
        %423 = vmatprep.subr.bf16.mxu0 0
        %424 = vmatpush1.bf16.msra.mxu0 0
        %425 = vmatprep.subr.bf16.mxu0 0
        %426 = vmatpush1.bf16.msra.mxu0 0
        %427 = vmatprep.subr.bf16.mxu0 0
        %428 = vmatpush1.bf16.msra.mxu0 0
        %429 = vmatprep.subr.bf16.mxu0 0
        %430 = vmatpush1.bf16.msra.mxu0 0
        %431 = vmatprep.subr.bf16.mxu0 0
        %432 = vmatpush1.bf16.msra.mxu0 0
        %433 = vmatprep.subr.bf16.mxu0 0
        %434 = vmatpush1.bf16.msra.mxu0 0
        %435 = vmatprep.subr.bf16.mxu0 0
        %436 = vmatpush1.bf16.msra.mxu0 0
        %437 = vmatprep.subr.bf16.mxu0 0
        %438 = vmatpush1.bf16.msra.mxu0 0
        %439 = vmatprep.subr.bf16.mxu0 0
        %440 = vmatpush1.bf16.msra.mxu0 0
        %441 = vmatprep.subr.bf16.mxu0 0
        %442 = vmatpush1.bf16.msra.mxu0 0
        %443 = vmatprep.subr.bf16.mxu0 0
        %444 = vmatpush1.bf16.msra.mxu0 0
        %445 = vmatprep.subr.bf16.mxu0 0
        %446 = vmatpush1.bf16.msra.mxu0 0
        %447 = vmatprep.mubr.bf16.mxu0 0
        %448 = vmatmul.mubr.bf16.gmra.mrb[0].mxu0 %v413
        %v449 = vpop.f32.mrb[0].mxu0
        %v450 = vadd.f32 %v401, %v449
        %v451 = vpop.f32.mrb[0].mxu0
        %v452 = vpop.f32.mrb[0].mxu0
        %v453 = vpop.f32.mrb[0].mxu0
        %454 = vdwg.mxu0
        %s455 = scalar_lea.vmem [#allocation4], 8
        %v456 = vld [vmem:[%s455] sm:$0xf]
        %v458 = vsel %vm261, %v456, 0
        %460 = vmatprep.subr.bf16.mxu0 0
        %461 = vmatpush1.bf16.msra.mxu0 %v259
        %462 = vmatprep.subr.bf16.mxu0 0
        %463 = vmatpush1.bf16.msra.mxu0 0
        %464 = vmatprep.subr.bf16.mxu0 0
        %465 = vmatpush1.bf16.msra.mxu0 0
        %466 = vmatprep.subr.bf16.mxu0 0
        %467 = vmatpush1.bf16.msra.mxu0 0
        %468 = vmatprep.subr.bf16.mxu0 0
        %469 = vmatpush1.bf16.msra.mxu0 0
        %470 = vmatprep.subr.bf16.mxu0 0
        %471 = vmatpush1.bf16.msra.mxu0 0
        %472 = vmatprep.subr.bf16.mxu0 0
        %473 = vmatpush1.bf16.msra.mxu0 0
        %474 = vmatprep.subr.bf16.mxu0 0
        %475 = vmatpush1.bf16.msra.mxu0 0
        %476 = vmatprep.subr.bf16.mxu0 0
        %477 = vmatpush1.bf16.msra.mxu0 0
        %478 = vmatprep.subr.bf16.mxu0 0
        %479 = vmatpush1.bf16.msra.mxu0 0
        %480 = vmatprep.subr.bf16.mxu0 0
        %481 = vmatpush1.bf16.msra.mxu0 0
        %482 = vmatprep.subr.bf16.mxu0 0
        %483 = vmatpush1.bf16.msra.mxu0 0
        %484 = vmatprep.subr.bf16.mxu0 0
        %485 = vmatpush1.bf16.msra.mxu0 0
        %486 = vmatprep.subr.bf16.mxu0 0
        %487 = vmatpush1.bf16.msra.mxu0 0
        %488 = vmatprep.subr.bf16.mxu0 0
        %489 = vmatpush1.bf16.msra.mxu0 0
        %490 = vmatprep.subr.bf16.mxu0 0
        %491 = vmatpush1.bf16.msra.mxu0 0
        %492 = vmatprep.mubr.bf16.mxu0 0
        %493 = vmatmul.mubr.bf16.gmra.mrb[0].mxu0 %v458
        %v494 = vpop.f32.mrb[0].mxu0
        %v495 = vadd.f32 0.0, %v494
        %v496 = vpop.f32.mrb[0].mxu0
        %v497 = vpop.f32.mrb[0].mxu0
        %v498 = vpop.f32.mrb[0].mxu0
        %499 = vdwg.mxu0
        %v500 = vpack.c.bf16 %v495, %v495
        %s501 = scalar_lea.vmem [#allocation6], 16
        %v502 = vld [vmem:[%s501] sm:$0xf]
        %v503 = vld [vmem:[%s501 + $0x4] sm:$0xf]
        %v506 = vunpack.c.l.b16 %v502
        %v507 = vunpack.c.l.b16 %v503
        %v508 = vpack.c.b16 %v507, %v506
        %v511 = vsel %vm261, %v500, 0
        %513 = vmatprep.subr.bf16.mxu0 0
        %514 = vmatpush1.bf16.msra.mxu0 %v508
        %515 = vmatprep.subr.bf16.mxu0 0
        %516 = vmatpush1.bf16.msra.mxu0 0
        %517 = vmatprep.subr.bf16.mxu0 0
        %518 = vmatpush1.bf16.msra.mxu0 0
        %519 = vmatprep.subr.bf16.mxu0 0
        %520 = vmatpush1.bf16.msra.mxu0 0
        %521 = vmatprep.subr.bf16.mxu0 0
        %522 = vmatpush1.bf16.msra.mxu0 0
        %523 = vmatprep.subr.bf16.mxu0 0
        %524 = vmatpush1.bf16.msra.mxu0 0
        %525 = vmatprep.subr.bf16.mxu0 0
        %526 = vmatpush1.bf16.msra.mxu0 0
        %527 = vmatprep.subr.bf16.mxu0 0
        %528 = vmatpush1.bf16.msra.mxu0 0
        %529 = vmatprep.subr.bf16.mxu0 0
        %530 = vmatpush1.bf16.msra.mxu0 0
        %531 = vmatprep.subr.bf16.mxu0 0
        %532 = vmatpush1.bf16.msra.mxu0 0
        %533 = vmatprep.subr.bf16.mxu0 0
        %534 = vmatpush1.bf16.msra.mxu0 0
        %535 = vmatprep.subr.bf16.mxu0 0
        %536 = vmatpush1.bf16.msra.mxu0 0
        %537 = vmatprep.subr.bf16.mxu0 0
        %538 = vmatpush1.bf16.msra.mxu0 0
        %539 = vmatprep.subr.bf16.mxu0 0
        %540 = vmatpush1.bf16.msra.mxu0 0
        %541 = vmatprep.subr.bf16.mxu0 0
        %542 = vmatpush1.bf16.msra.mxu0 0
        %543 = vmatprep.subr.bf16.mxu0 0
        %544 = vmatpush1.bf16.msra.mxu0 0
        %545 = vmatprep.mubr.bf16.mxu0 0
        %546 = vmatmul.mubr.bf16.gmra.mrb[0].mxu0 %v511
        %v547 = vpop.f32.mrb[0].mxu0
        %v548 = vadd.f32 0.0, %v547
        %v549 = vpop.f32.mrb[0].mxu0
        %v550 = vpop.f32.mrb[0].mxu0
        %v551 = vpop.f32.mrb[0].mxu0
        %552 = vdwg.mxu0
        %v553 = vadd.f32 %v450, %v548
        %554 = vst [vmem:[%s251] sm:$0xff] %v553
        %v555 = vrot.slane %v553, 4
        %v556 = vadd.f32 %v553, %v555
        %v557 = vrot.slane %v556, 2
        %v558 = vadd.f32 %v556, %v557
        %v559 = vrot.slane %v558, 1
        %v560 = vadd.f32 %v558, %v559
        %v561 = vmul.f32 %v553, %v553
        %v562 = vrot.slane %v561, 4
        %v563 = vadd.f32 %v561, %v562
        %v564 = vrot.slane %v563, 2
        %v565 = vadd.f32 %v563, %v564
        %v566 = vrot.slane %v565, 1
        %v567 = vadd.f32 %v565, %v566
        %v568 = vlaneseq
        %v569 = vshrl.u32 %v568, 7
        %vm570 = vcmp.eq.s32.totalorder %v569, 0
        %vm571 = vcmp.eq.s32.totalorder %v569, 1
        %v572 = vsel %vm571, %v567, 0.0
        %v573 = vsel %vm570, %v560, %v572
        %574 = vst [vmem:[%s255] sm:$0xff] %v573
        %p575 = scmp.lt.s32.totalorder %s20, 1
        %s576 = scalar_select %p575, %s20, 1
        %s577 = smul.addr %s576, 8
        %s578 = scalar_lea.vmem %s3, %s577
        %p579 = scmp.lt.s32.totalorder %s20, 1
        %s580 = scalar_select %p579, %s20, 1
        %s581 = smul.addr %s580, 8
        %s582 = scalar_lea.vmem %s4, %s581
        // Predicated region
        $region45: #{autoencoder_forward.6} parent=31 // pred_check
          %p583 = pneg %p106
        $region46: #{autoencoder_forward.6} parent=31 // pred_check_branch
          %585 = sbr.rel (%p583) target = $region48
        $region47: #{autoencoder_forward.6} parent=31 // pred_region
          _
        $region48: #{autoencoder_forward.6} parent=31 // pred_fallthru
          _
        // Predicated region
        $region49: #{autoencoder_forward.6} parent=31 // pred_check
          %p586 = pneg %p132
        $region50: #{autoencoder_forward.6} parent=31 // pred_check_branch
          %588 = sbr.rel (%p586) target = $region52
        $region51: #{autoencoder_forward.6} parent=31 // pred_region
          _
        $region52: #{autoencoder_forward.6} parent=31 // pred_fallthru
          _
      $region32: #{autoencoder_forward.6} parent=5 // pred_fallthru
        _
      %p589 = scmp.le.s32.totalorder 2, %s15
      // Predicated region
      $region53: #{autoencoder_forward.6} parent=5 // pred_check
        %p590 = pneg %p589
      $region54: #{autoencoder_forward.6} parent=5 // pred_check_branch
        %592 = sbr.rel (%p590) target = $region56
      $region55: #{autoencoder_forward.6} parent=5 // pred_region
        %s593 = ssub.s32 %s15, 2
        // Predicated region
        $region57: #{autoencoder_forward.6} parent=55 // pred_check
          %p594 = pneg %p112
        $region58: #{autoencoder_forward.6} parent=55 // pred_check_branch
          %596 = sbr.rel (%p594) target = $region60
        $region59: #{autoencoder_forward.6} parent=55 // pred_region
          %p597 = scmp.lt.s32.totalorder %s21, 1
          %s598 = scalar_select %p597, %s21, 1
          %s599 = smul.addr %s598, 8
          %s600 = scalar_lea.vmem %s3, %s599
        $region60: #{autoencoder_forward.6} parent=55 // pred_fallthru
          _
        // Predicated region
        $region61: #{autoencoder_forward.6} parent=55 // pred_check
          %p601 = pneg %p138
        $region62: #{autoencoder_forward.6} parent=55 // pred_check_branch
          %603 = sbr.rel (%p601) target = $region64
        $region63: #{autoencoder_forward.6} parent=55 // pred_region
          %p604 = scmp.lt.s32.totalorder %s21, 1
          %s605 = scalar_select %p604, %s21, 1
          %s606 = smul.addr %s605, 8
          %s607 = scalar_lea.vmem %s4, %s606
        $region64: #{autoencoder_forward.6} parent=55 // pred_fallthru
          _
      $region56: #{autoencoder_forward.6} parent=5 // pred_fallthru
        _
    $region6: #{autoencoder_forward.6} parent=1 // loop_footer
      %s19 = sadd.s32 1, %s15
    $region7: #{autoencoder_forward.6} parent=1 // loop_footer_branch
      %14 = sbr.rel target = $region3
    $region8: #{autoencoder_forward.6} parent=1 // loop_exit
      _
    %608 = vsyncpa [#allocation3], 1
    %s609 = scalar_lea.sflag [#allocation3], 1
    %610 = vsyncpa %s609, 1
    %611 = vsyncpa [#allocation5], 1

// kernel: autoencoder_forward.7
$region0: #{autoencoder_forward.7}
  #allocation0 [shape = 'u32[]', space=smem, size = 0x4, offset = 0x4, fixed_abs, tag = 'smem constant byte address 0x4 - core index']
  #allocation1 [shape = 'u32[144,128]{1,0:T(1,128)}', space=vmem, size = 0x12000, scoped, tag = 'internal scratch']
  %s0 = inlined_call_operand.vmem [shape: f32[2,8,128], index: 0, kind: input, shape index: {}]
  %s1 = inlined_call_operand.vmem [shape: bf16[3,4,8], index: 1, kind: input, shape index: {}]
  %s2 = inlined_call_operand.vmem [shape: bf16[3,128,128], index: 2, kind: input, shape index: {}]
  %s3 = inlined_call_operand.vmem [shape: f32[1,128], index: 3, kind: input, shape index: {}]
  %s4 = inlined_call_operand.vmem [shape: f32[1,128], index: 4, kind: input, shape index: {}]
  %s5 = inlined_call_operand.vmem [shape: f32[2,4,128], index: 5, kind: output, shape index: {0}]
  %s6 = inlined_call_operand.vmem [shape: f32[2,8,128], index: 6, kind: output, shape index: {1}]
  %7 = xla_tuple %s5, %s6
  %s8 = sld [smem:[#allocation0]]
  $region61: #{autoencoder_forward.7} parent=0
    _
  %s10 = ssub.s32 1, %s8
  %s11 = scalar_select 0, %s10, %s8
  loop: start=0, step=1, limit=4
  $region2: #{autoencoder_forward.7} parent=0 // loop_pre_header
    _
  $region3: #{autoencoder_forward.7} parent=0 // loop_header
    %s13 = sphi 0, %s17
    %p14 = scmp.ge.s32.totalorder %s13, 4
    %s23 = sphi 0, %s25
    %s26 = sphi 0, %s23
    %s27 = sphi 0, %s26
    %s43 = sphi 0, %s27
    %s47 = sphi 0, %s47
    %s49 = sphi 0, %s47
    %s50 = sphi 0, %s49
    %s64 = sphi 0, %s50
    %s68 = sphi 0, %s68
    %s70 = sphi 0, %s68
    %s71 = sphi 0, %s70
    %s85 = sphi 0, %s71
    %s89 = sphi 0, %s89
    %s91 = sphi 0, %s89
    %s92 = sphi 0, %s91
    %s106 = sphi 0, %s92
    %s110 = sphi 0, %s110
    %s112 = sphi 0, %s110
    %s113 = sphi 0, %s112
    %s127 = sphi 0, %s113
    %s133 = sphi 0, %s135
    %s136 = sphi 0, %s133
    %s137 = sphi 0, %s136
    %s153 = sphi 0, %s137
    %s159 = sphi 0, %s161
    %s162 = sphi 0, %s159
    %s163 = sphi 0, %s162
    %s179 = sphi 0, %s163
  $region4: #{autoencoder_forward.7} parent=0 // loop_header_branch
    %16 = sbr.rel (%p14) target = $region8
  $region5: #{autoencoder_forward.7} parent=0 // loop_body
    %s18 = ssub.s32 %s13, 1
    %s19 = ssub.s32 %s13, 2
    %s20 = sadd.s32 %s13, 1
    %s21 = ssub.s32 %s13, %s20
    %p22 = scmp.eq.s32.totalorder %s21, 0
    %s24 = sadd.s32 %s23, 1
    %s25 = scalar_select %p22, %s23, %s24
    %p28 = pneg %p22
    %p29 = scmp.eq.s32.totalorder %s13, 1
    %p30 = por %p28, %p29
    %p31 = scmp.ne.s32.totalorder %s23, %s26
    %p32 = scmp.eq.s32.totalorder %s13, 0
    %p33 = por %p31, %p32
    %p34 = scmp.ne.s32.totalorder %s23, %s26
    %p35 = scmp.eq.s32.totalorder %s18, 1
    %p36 = por %p34, %p35
    %p37 = scmp.ne.s32.totalorder %s26, %s27
    %p38 = scmp.eq.s32.totalorder %s18, 0
    %p39 = por %p37, %p38
    %p40 = scmp.ne.s32.totalorder %s26, %s27
    %p41 = scmp.eq.s32.totalorder %s19, 1
    %p42 = por %p40, %p41
    %p44 = scmp.ne.s32.totalorder %s27, %s43
    %p45 = scmp.eq.s32.totalorder %s19, 0
    %p46 = por %p44, %p45
    %s48 = sadd.s32 %s47, 1
    %p51 = scmp.eq.s32.totalorder %s13, 1
    %p52 = scmp.ne.s32.totalorder %s47, %s49
    %p53 = scmp.eq.s32.totalorder %s13, 0
    %p54 = por %p52, %p53
    %p55 = scmp.ne.s32.totalorder %s47, %s49
    %p56 = scmp.eq.s32.totalorder %s18, 1
    %p57 = por %p55, %p56
    %p58 = scmp.ne.s32.totalorder %s49, %s50
    %p59 = scmp.eq.s32.totalorder %s18, 0
    %p60 = por %p58, %p59
    %p61 = scmp.ne.s32.totalorder %s49, %s50
    %p62 = scmp.eq.s32.totalorder %s19, 1
    %p63 = por %p61, %p62
    %p65 = scmp.ne.s32.totalorder %s50, %s64
    %p66 = scmp.eq.s32.totalorder %s19, 0
    %p67 = por %p65, %p66
    %s69 = sadd.s32 %s68, 1
    %p72 = scmp.eq.s32.totalorder %s13, 1
    %p73 = scmp.ne.s32.totalorder %s68, %s70
    %p74 = scmp.eq.s32.totalorder %s13, 0
    %p75 = por %p73, %p74
    %p76 = scmp.ne.s32.totalorder %s68, %s70
    %p77 = scmp.eq.s32.totalorder %s18, 1
    %p78 = por %p76, %p77
    %p79 = scmp.ne.s32.totalorder %s70, %s71
    %p80 = scmp.eq.s32.totalorder %s18, 0
    %p81 = por %p79, %p80
    %p82 = scmp.ne.s32.totalorder %s70, %s71
    %p83 = scmp.eq.s32.totalorder %s19, 1
    %p84 = por %p82, %p83
    %p86 = scmp.ne.s32.totalorder %s71, %s85
    %p87 = scmp.eq.s32.totalorder %s19, 0
    %p88 = por %p86, %p87
    %s90 = sadd.s32 %s89, 1
    %p93 = scmp.eq.s32.totalorder %s13, 1
    %p94 = scmp.ne.s32.totalorder %s89, %s91
    %p95 = scmp.eq.s32.totalorder %s13, 0
    %p96 = por %p94, %p95
    %p97 = scmp.ne.s32.totalorder %s89, %s91
    %p98 = scmp.eq.s32.totalorder %s18, 1
    %p99 = por %p97, %p98
    %p100 = scmp.ne.s32.totalorder %s91, %s92
    %p101 = scmp.eq.s32.totalorder %s18, 0
    %p102 = por %p100, %p101
    %p103 = scmp.ne.s32.totalorder %s91, %s92
    %p104 = scmp.eq.s32.totalorder %s19, 1
    %p105 = por %p103, %p104
    %p107 = scmp.ne.s32.totalorder %s92, %s106
    %p108 = scmp.eq.s32.totalorder %s19, 0
    %p109 = por %p107, %p108
    %s111 = sadd.s32 %s110, 1
    %p114 = scmp.eq.s32.totalorder %s13, 1
    %p115 = scmp.ne.s32.totalorder %s110, %s112
    %p116 = scmp.eq.s32.totalorder %s13, 0
    %p117 = por %p115, %p116
    %p118 = scmp.ne.s32.totalorder %s110, %s112
    %p119 = scmp.eq.s32.totalorder %s18, 1
    %p120 = por %p118, %p119
    %p121 = scmp.ne.s32.totalorder %s112, %s113
    %p122 = scmp.eq.s32.totalorder %s18, 0
    %p123 = por %p121, %p122
    %p124 = scmp.ne.s32.totalorder %s112, %s113
    %p125 = scmp.eq.s32.totalorder %s19, 1
    %p126 = por %p124, %p125
    %p128 = scmp.ne.s32.totalorder %s113, %s127
    %p129 = scmp.eq.s32.totalorder %s19, 0
    %p130 = por %p128, %p129
    %s131 = ssub.s32 %s13, %s20
    %p132 = scmp.eq.s32.totalorder %s131, 0
    %s134 = sadd.s32 %s133, 1
    %s135 = scalar_select %p132, %s133, %s134
    %p138 = pneg %p132
    %p139 = scmp.eq.s32.totalorder %s13, 1
    %p140 = por %p138, %p139
    %p141 = scmp.ne.s32.totalorder %s133, %s136
    %p142 = scmp.eq.s32.totalorder %s13, 0
    %p143 = por %p141, %p142
    %p144 = scmp.ne.s32.totalorder %s133, %s136
    %p145 = scmp.eq.s32.totalorder %s18, 1
    %p146 = por %p144, %p145
    %p147 = scmp.ne.s32.totalorder %s136, %s137
    %p148 = scmp.eq.s32.totalorder %s18, 0
    %p149 = por %p147, %p148
    %p150 = scmp.ne.s32.totalorder %s136, %s137
    %p151 = scmp.eq.s32.totalorder %s19, 1
    %p152 = por %p150, %p151
    %p154 = scmp.ne.s32.totalorder %s137, %s153
    %p155 = scmp.eq.s32.totalorder %s19, 0
    %p156 = por %p154, %p155
    %s157 = ssub.s32 %s13, %s20
    %p158 = scmp.eq.s32.totalorder %s157, 0
    %s160 = sadd.s32 %s159, 1
    %s161 = scalar_select %p158, %s159, %s160
    %p164 = pneg %p158
    %p165 = scmp.eq.s32.totalorder %s13, 1
    %p166 = por %p164, %p165
    %p167 = scmp.ne.s32.totalorder %s159, %s162
    %p168 = scmp.eq.s32.totalorder %s13, 0
    %p169 = por %p167, %p168
    %p170 = scmp.ne.s32.totalorder %s159, %s162
    %p171 = scmp.eq.s32.totalorder %s18, 1
    %p172 = por %p170, %p171
    %p173 = scmp.ne.s32.totalorder %s162, %s163
    %p174 = scmp.eq.s32.totalorder %s18, 0
    %p175 = por %p173, %p174
    %p176 = scmp.ne.s32.totalorder %s162, %s163
    %p177 = scmp.eq.s32.totalorder %s19, 1
    %p178 = por %p176, %p177
    %p180 = scmp.ne.s32.totalorder %s163, %s179
    %p181 = scmp.eq.s32.totalorder %s19, 0
    %p182 = por %p180, %p181
    %p183 = scmp.le.s32.totalorder 1, %s13
    %p184 = scmp.lt.s32.totalorder %s13, 3
    %p185 = pnand %p183, %p184
    %p186 = pneg %p185
    // Predicated region
    $region9: #{autoencoder_forward.7} parent=5 // pred_check
      _
    $region10: #{autoencoder_forward.7} parent=5 // pred_check_branch
      %188 = sbr.rel (%p185) target = $region12
    $region11: #{autoencoder_forward.7} parent=5 // pred_region
      %s189 = ssub.s32 %s13, 1
      // Predicated region
      $region13: #{autoencoder_forward.7} parent=11 // pred_check
        %p190 = pneg %p60
      $region14: #{autoencoder_forward.7} parent=11 // pred_check_branch
        %192 = sbr.rel (%p190) target = $region16
      $region15: #{autoencoder_forward.7} parent=11 // pred_region
        _
      $region16: #{autoencoder_forward.7} parent=11 // pred_fallthru
        _
      // Predicated region
      $region17: #{autoencoder_forward.7} parent=11 // pred_check
        %p193 = pneg %p81
      $region18: #{autoencoder_forward.7} parent=11 // pred_check_branch
        %195 = sbr.rel (%p193) target = $region20
      $region19: #{autoencoder_forward.7} parent=11 // pred_region
        _
      $region20: #{autoencoder_forward.7} parent=11 // pred_fallthru
        _
      // Predicated region
      $region21: #{autoencoder_forward.7} parent=11 // pred_check
        %p196 = pneg %p102
      $region22: #{autoencoder_forward.7} parent=11 // pred_check_branch
        %198 = sbr.rel (%p196) target = $region24
      $region23: #{autoencoder_forward.7} parent=11 // pred_region
        _
      $region24: #{autoencoder_forward.7} parent=11 // pred_fallthru
        _
      // Predicated region
      $region25: #{autoencoder_forward.7} parent=11 // pred_check
        %p199 = pneg %p123
      $region26: #{autoencoder_forward.7} parent=11 // pred_check_branch
        %201 = sbr.rel (%p199) target = $region28
      $region27: #{autoencoder_forward.7} parent=11 // pred_region
        _
      $region28: #{autoencoder_forward.7} parent=11 // pred_fallthru
        _
    $region12: #{autoencoder_forward.7} parent=5 // pred_fallthru
      _
    %p202 = scmp.lt.s32.totalorder %s13, 2
    // Predicated region
    $region29: #{autoencoder_forward.7} parent=5 // pred_check
      %p203 = pneg %p202
    $region30: #{autoencoder_forward.7} parent=5 // pred_check_branch
      %205 = sbr.rel (%p203) target = $region32
    $region31: #{autoencoder_forward.7} parent=5 // pred_region
      // Predicated region
      $region33: #{autoencoder_forward.7} parent=31 // pred_check
        %p206 = pneg %p33
      $region34: #{autoencoder_forward.7} parent=31 // pred_check_branch
        %208 = sbr.rel (%p206) target = $region36
      $region35: #{autoencoder_forward.7} parent=31 // pred_region
        %p209 = scmp.lt.s32.totalorder %s13, 1
        %s210 = scalar_select %p209, %s13, 1
        %s211 = smul.addr %s210, 8
        %s212 = scalar_lea.vmem %s0, %s211
      $region36: #{autoencoder_forward.7} parent=31 // pred_fallthru
        _
    $region32: #{autoencoder_forward.7} parent=5 // pred_fallthru
      _
    %p213 = scmp.le.s32.totalorder 1, %s13
    %p214 = scmp.lt.s32.totalorder %s13, 3
    %p215 = pnand %p213, %p214
    %p216 = pneg %p215
    // Predicated region
    $region37: #{autoencoder_forward.7} parent=5 // pred_check
      _
    $region38: #{autoencoder_forward.7} parent=5 // pred_check_branch
      %218 = sbr.rel (%p215) target = $region40
    $region39: #{autoencoder_forward.7} parent=5 // pred_region
      %s219 = ssub.s32 %s13, 1
      %p220 = scmp.lt.s32.totalorder %s18, 1
      %s221 = scalar_select %p220, %s18, 1
      %s222 = smul.addr %s221, 8
      %s223 = scalar_lea.vmem %s0, %s222
      %p224 = pneg %p39
      %p225 = pneg %p36
      %p226 = pneg %p60
      %p227 = pneg %p57
      %p228 = pneg %p81
      %p229 = pneg %p78
      %p230 = pneg %p102
      %p231 = pneg %p99
      %p232 = pneg %p123
      %p233 = pneg %p120
      %p234 = pneg %p149
      %p235 = pneg %p146
      %p236 = scmp.lt.s32.totalorder %s18, 1
      %s237 = scalar_select %p236, %s18, 1
      %s238 = smul.addr %s237, 4
      %s239 = scalar_lea.vmem %s5, %s238
      %p240 = pneg %p175
      %p241 = pneg %p172
      %p242 = scmp.lt.s32.totalorder %s18, 1
      %s243 = scalar_select %p242, %s18, 1
      %s244 = smul.addr %s243, 8
      %s245 = scalar_lea.vmem %s6, %s244
      %p246 = scmp.lt.s32.totalorder %s18, 1
      %s247 = scalar_select %p246, %s18, 1
      %s248 = smul.addr %s247, 8
      %s249 = scalar_lea.vmem %s0, %s248
      %p250 = scmp.lt.s32.totalorder %s18, 1
      %s251 = scalar_select %p250, %s18, 1
      %s252 = smul.addr %s251, 4
      %s253 = scalar_lea.vmem %s5, %s252
      %p254 = scmp.lt.s32.totalorder %s18, 1
      %s255 = scalar_select %p254, %s18, 1
      %s256 = smul.addr %s255, 8
      %s257 = scalar_lea.vmem %s6, %s256
      %v259 = vld [vmem:[%s249] sm:$0xff]
      %v260 = vld [vmem:[%s3] sm:$0x1]
      %v262 = vlaneseq
      %v263 = vshrl.u32 %v262, 7
      %v264 = vsub.s32 0, %v263
      %v265 = vrot.slane %v260, %v264
      %v267 = vmul.f32 %v259, %v265
      %v268 = vld [vmem:[%s4] sm:$0x1]
      %v270 = vlaneseq
      %v271 = vshrl.u32 %v270, 7
      %v272 = vsub.s32 0, %v271
      %v273 = vrot.slane %v268, %v272
      %v275 = vadd.f32 %v267, %v273
      %v276 = vmax.f32 %v275, 0.0
      %v277 = vpack.c.bf16 %v276, %v276
      %v278 = vld [vmem:[%s1] sm:$0x3]
      %vm279 = vcmask 64512
      %v281 = vsel %vm279, %v278, 0
      %vm283 = vcmask 1043456
      %v285 = vsel %vm283, %v277, 0
      %287 = vmatprep.subr.bf16.mxu0 0
      %288 = vmatpush1.bf16.msra.mxu0 %v285
      %289 = vmatprep.subr.bf16.mxu0 0
      %290 = vmatpush1.bf16.msra.mxu0 0
      %291 = vmatprep.subr.bf16.mxu0 0
      %292 = vmatpush1.bf16.msra.mxu0 0
      %293 = vmatprep.subr.bf16.mxu0 0
      %294 = vmatpush1.bf16.msra.mxu0 0
      %295 = vmatprep.subr.bf16.mxu0 0
      %296 = vmatpush1.bf16.msra.mxu0 0
      %297 = vmatprep.subr.bf16.mxu0 0
      %298 = vmatpush1.bf16.msra.mxu0 0
      %299 = vmatprep.subr.bf16.mxu0 0
      %300 = vmatpush1.bf16.msra.mxu0 0
      %301 = vmatprep.subr.bf16.mxu0 0
      %302 = vmatpush1.bf16.msra.mxu0 0
      %303 = vmatprep.subr.bf16.mxu0 0
      %304 = vmatpush1.bf16.msra.mxu0 0
      %305 = vmatprep.subr.bf16.mxu0 0
      %306 = vmatpush1.bf16.msra.mxu0 0
      %307 = vmatprep.subr.bf16.mxu0 0
      %308 = vmatpush1.bf16.msra.mxu0 0
      %309 = vmatprep.subr.bf16.mxu0 0
      %310 = vmatpush1.bf16.msra.mxu0 0
      %311 = vmatprep.subr.bf16.mxu0 0
      %312 = vmatpush1.bf16.msra.mxu0 0
      %313 = vmatprep.subr.bf16.mxu0 0
      %314 = vmatpush1.bf16.msra.mxu0 0
      %315 = vmatprep.subr.bf16.mxu0 0
      %316 = vmatpush1.bf16.msra.mxu0 0
      %317 = vmatprep.subr.bf16.mxu0 0
      %318 = vmatpush1.bf16.msra.mxu0 0
      %319 = vmatprep.mubr.bf16.mxu0 0
      %320 = vmatmul.mubr.bf16.gmra.mrb[0].mxu0 %v281
      %v321 = vpop.f32.mrb[0].mxu0
      %v322 = vadd.f32 0.0, %v321
      %v323 = vpop.f32.mrb[0].mxu0
      %v324 = vpop.f32.mrb[0].mxu0
      %v325 = vpop.f32.mrb[0].mxu0
      %326 = vdwg.mxu0
      %v327 = vpack.c.bf16 %v322, %v322
      %v328 = vld [vmem:[%s2] sm:$0xf]
      %v329 = vld [vmem:[%s2 + $0x4] sm:$0xf]
      %v330 = vld [vmem:[%s2 + $0x8] sm:$0xf]
      %v331 = vld [vmem:[%s2 + $0xc] sm:$0xf]
      %v332 = vld [vmem:[%s2 + $0x10] sm:$0xf]
      %v333 = vld [vmem:[%s2 + $0x14] sm:$0xf]
      %v334 = vld [vmem:[%s2 + $0x18] sm:$0xf]
      %v335 = vld [vmem:[%s2 + $0x1c] sm:$0xf]
      %v336 = vld [vmem:[%s2 + $0x20] sm:$0xf]
      %v337 = vld [vmem:[%s2 + $0x24] sm:$0xf]
      %v338 = vld [vmem:[%s2 + $0x28] sm:$0xf]
      %v339 = vld [vmem:[%s2 + $0x2c] sm:$0xf]
      %v340 = vld [vmem:[%s2 + $0x30] sm:$0xf]
      %v341 = vld [vmem:[%s2 + $0x34] sm:$0xf]
      %v342 = vld [vmem:[%s2 + $0x38] sm:$0xf]
      %v343 = vld [vmem:[%s2 + $0x3c] sm:$0xf]
      %s344 = scalar_lea.vmem %s1, 2
      %v345 = vld [vmem:[%s344] sm:$0x3]
      %v347 = vsel %vm279, %v345, 0
      %349 = vmatprep.subr.bf16.mxu0 0
      %350 = vmatpush1.bf16.msra.mxu0 %v285
      %351 = vmatprep.subr.bf16.mxu0 0
      %352 = vmatpush1.bf16.msra.mxu0 0
      %353 = vmatprep.subr.bf16.mxu0 0
      %354 = vmatpush1.bf16.msra.mxu0 0
      %355 = vmatprep.subr.bf16.mxu0 0
      %356 = vmatpush1.bf16.msra.mxu0 0
      %357 = vmatprep.subr.bf16.mxu0 0
      %358 = vmatpush1.bf16.msra.mxu0 0
      %359 = vmatprep.subr.bf16.mxu0 0
      %360 = vmatpush1.bf16.msra.mxu0 0
      %361 = vmatprep.subr.bf16.mxu0 0
      %362 = vmatpush1.bf16.msra.mxu0 0
      %363 = vmatprep.subr.bf16.mxu0 0
      %364 = vmatpush1.bf16.msra.mxu0 0
      %365 = vmatprep.subr.bf16.mxu0 0
      %366 = vmatpush1.bf16.msra.mxu0 0
      %367 = vmatprep.subr.bf16.mxu0 0
      %368 = vmatpush1.bf16.msra.mxu0 0
      %369 = vmatprep.subr.bf16.mxu0 0
      %370 = vmatpush1.bf16.msra.mxu0 0
      %371 = vmatprep.subr.bf16.mxu0 0
      %372 = vmatpush1.bf16.msra.mxu0 0
      %373 = vmatprep.subr.bf16.mxu0 0
      %374 = vmatpush1.bf16.msra.mxu0 0
      %375 = vmatprep.subr.bf16.mxu0 0
      %376 = vmatpush1.bf16.msra.mxu0 0
      %377 = vmatprep.subr.bf16.mxu0 0
      %378 = vmatpush1.bf16.msra.mxu0 0
      %379 = vmatprep.subr.bf16.mxu0 0
      %380 = vmatpush1.bf16.msra.mxu0 0
      %381 = vmatprep.mubr.bf16.mxu0 0
      %382 = vmatmul.mubr.bf16.gmra.mrb[0].mxu0 %v347
      %v383 = vpop.f32.mrb[0].mxu0
      %v384 = vadd.f32 0.0, %v383
      %v385 = vpop.f32.mrb[0].mxu0
      %v386 = vpop.f32.mrb[0].mxu0
      %v387 = vpop.f32.mrb[0].mxu0
      %388 = vdwg.mxu0
      %v389 = vpack.c.bf16 %v384, %v384
      %s390 = scalar_lea.vmem %s2, 64
      %v391 = vld [vmem:[%s390] sm:$0xf]
      %v392 = vld [vmem:[%s390 + $0x4] sm:$0xf]
      %v393 = vld [vmem:[%s390 + $0x8] sm:$0xf]
      %v394 = vld [vmem:[%s390 + $0xc] sm:$0xf]
      %v395 = vld [vmem:[%s390 + $0x10] sm:$0xf]
      %v396 = vld [vmem:[%s390 + $0x14] sm:$0xf]
      %v397 = vld [vmem:[%s390 + $0x18] sm:$0xf]
      %v398 = vld [vmem:[%s390 + $0x1c] sm:$0xf]
      %v399 = vld [vmem:[%s390 + $0x20] sm:$0xf]
      %v400 = vld [vmem:[%s390 + $0x24] sm:$0xf]
      %v401 = vld [vmem:[%s390 + $0x28] sm:$0xf]
      %v402 = vld [vmem:[%s390 + $0x2c] sm:$0xf]
      %v403 = vld [vmem:[%s390 + $0x30] sm:$0xf]
      %v404 = vld [vmem:[%s390 + $0x34] sm:$0xf]
      %v405 = vld [vmem:[%s390 + $0x38] sm:$0xf]
      %v406 = vld [vmem:[%s390 + $0x3c] sm:$0xf]
      %v423 = vunpack.c.l.b16 %v391
      %v424 = vunpack.c.l.b16 %v392
      %v425 = vunpack.c.l.b16 %v393
      %v426 = vunpack.c.l.b16 %v394
      %v427 = vunpack.c.l.b16 %v395
      %v428 = vunpack.c.l.b16 %v396
      %v429 = vunpack.c.l.b16 %v397
      %v430 = vunpack.c.l.b16 %v398
      %v431 = vunpack.c.l.b16 %v399
      %v432 = vunpack.c.l.b16 %v400
      %v433 = vunpack.c.l.b16 %v401
      %v434 = vunpack.c.l.b16 %v402
      %v435 = vunpack.c.l.b16 %v403
      %v436 = vunpack.c.l.b16 %v404
      %v437 = vunpack.c.l.b16 %v405
      %v438 = vunpack.c.l.b16 %v406
      %v439 = vpack.c.b16 %v424, %v423
      %v440 = vpack.c.b16 %v426, %v425
      %v441 = vpack.c.b16 %v428, %v427
      %v442 = vpack.c.b16 %v430, %v429
      %v443 = vpack.c.b16 %v432, %v431
      %v444 = vpack.c.b16 %v434, %v433
      %v445 = vpack.c.b16 %v436, %v435
      %v446 = vpack.c.b16 %v438, %v437
      %455 = vmatprep.subr.bf16.mxu0 0
      %456 = vmatpush1.bf16.msra.mxu0 %v439
      %457 = vmatprep.subr.bf16.mxu0 0
      %458 = vmatpush1.bf16.msra.mxu0 %v440
      %459 = vmatprep.subr.bf16.mxu0 0
      %460 = vmatpush1.bf16.msra.mxu0 %v441
      %461 = vmatprep.subr.bf16.mxu0 0
      %462 = vmatpush1.bf16.msra.mxu0 %v442
      %463 = vmatprep.subr.bf16.mxu0 0
      %464 = vmatpush1.bf16.msra.mxu0 %v443
      %465 = vmatprep.subr.bf16.mxu0 0
      %466 = vmatpush1.bf16.msra.mxu0 %v444
      %467 = vmatprep.subr.bf16.mxu0 0
      %468 = vmatpush1.bf16.msra.mxu0 %v445
      %469 = vmatprep.subr.bf16.mxu0 0
      %470 = vmatpush1.bf16.msra.mxu0 %v446
      %471 = vmatprep.subr.bf16.mxu0 0
      %472 = vmatpush1.bf16.msra.mxu0 0
      %473 = vmatprep.subr.bf16.mxu0 0
      %474 = vmatpush1.bf16.msra.mxu0 0
      %475 = vmatprep.subr.bf16.mxu0 0
      %476 = vmatpush1.bf16.msra.mxu0 0
      %477 = vmatprep.subr.bf16.mxu0 0
      %478 = vmatpush1.bf16.msra.mxu0 0
      %479 = vmatprep.subr.bf16.mxu0 0
      %480 = vmatpush1.bf16.msra.mxu0 0
      %481 = vmatprep.subr.bf16.mxu0 0
      %482 = vmatpush1.bf16.msra.mxu0 0
      %483 = vmatprep.subr.bf16.mxu0 0
      %484 = vmatpush1.bf16.msra.mxu0 0
      %485 = vmatprep.subr.bf16.mxu0 0
      %486 = vmatpush1.bf16.msra.mxu0 0
      %487 = vmatprep.mubr.bf16.mxu0 0
      %488 = vmatmul.mubr.bf16.gmra.mrb[0].mxu0 %v389
      %v489 = vpop.f32.mrb[0].mxu0
      %v490 = vadd.f32 0.0, %v489
      %v491 = vpop.f32.mrb[0].mxu0
      %v492 = vpop.f32.mrb[0].mxu0
      %v493 = vpop.f32.mrb[0].mxu0
      %494 = vdwg.mxu0
      %v511 = vunpack.c.l.b16 %v328
      %v512 = vunpack.c.l.b16 %v329
      %v513 = vunpack.c.l.b16 %v330
      %v514 = vunpack.c.l.b16 %v331
      %v515 = vunpack.c.l.b16 %v332
      %v516 = vunpack.c.l.b16 %v333
      %v517 = vunpack.c.l.b16 %v334
      %v518 = vunpack.c.l.b16 %v335
      %v519 = vunpack.c.l.b16 %v336
      %v520 = vunpack.c.l.b16 %v337
      %v521 = vunpack.c.l.b16 %v338
      %v522 = vunpack.c.l.b16 %v339
      %v523 = vunpack.c.l.b16 %v340
      %v524 = vunpack.c.l.b16 %v341
      %v525 = vunpack.c.l.b16 %v342
      %v526 = vunpack.c.l.b16 %v343
      %v527 = vpack.c.b16 %v512, %v511
      %v528 = vpack.c.b16 %v514, %v513
      %v529 = vpack.c.b16 %v516, %v515
      %v530 = vpack.c.b16 %v518, %v517
      %v531 = vpack.c.b16 %v520, %v519
      %v532 = vpack.c.b16 %v522, %v521
      %v533 = vpack.c.b16 %v524, %v523
      %v534 = vpack.c.b16 %v526, %v525
      %543 = vmatprep.subr.bf16.mxu0 0
      %544 = vmatpush1.bf16.msra.mxu0 %v527
      %545 = vmatprep.subr.bf16.mxu0 0
      %546 = vmatpush1.bf16.msra.mxu0 %v528
      %547 = vmatprep.subr.bf16.mxu0 0
      %548 = vmatpush1.bf16.msra.mxu0 %v529
      %549 = vmatprep.subr.bf16.mxu0 0
      %550 = vmatpush1.bf16.msra.mxu0 %v530
      %551 = vmatprep.subr.bf16.mxu0 0
      %552 = vmatpush1.bf16.msra.mxu0 %v531
      %553 = vmatprep.subr.bf16.mxu0 0
      %554 = vmatpush1.bf16.msra.mxu0 %v532
      %555 = vmatprep.subr.bf16.mxu0 0
      %556 = vmatpush1.bf16.msra.mxu0 %v533
      %557 = vmatprep.subr.bf16.mxu0 0
      %558 = vmatpush1.bf16.msra.mxu0 %v534
      %559 = vmatprep.subr.bf16.mxu0 0
      %560 = vmatpush1.bf16.msra.mxu0 0
      %561 = vmatprep.subr.bf16.mxu0 0
      %562 = vmatpush1.bf16.msra.mxu0 0
      %563 = vmatprep.subr.bf16.mxu0 0
      %564 = vmatpush1.bf16.msra.mxu0 0
      %565 = vmatprep.subr.bf16.mxu0 0
      %566 = vmatpush1.bf16.msra.mxu0 0
      %567 = vmatprep.subr.bf16.mxu0 0
      %568 = vmatpush1.bf16.msra.mxu0 0
      %569 = vmatprep.subr.bf16.mxu0 0
      %570 = vmatpush1.bf16.msra.mxu0 0
      %571 = vmatprep.subr.bf16.mxu0 0
      %572 = vmatpush1.bf16.msra.mxu0 0
      %573 = vmatprep.subr.bf16.mxu0 0
      %574 = vmatpush1.bf16.msra.mxu0 0
      %575 = vmatprep.mubr.bf16.mxu0 0
      %576 = vmatmul.mubr.bf16.gmra.mrb[0].mxu0 %v327
      %v577 = vpop.f32.mrb[0].mxu0
      %v578 = vadd.f32 %v490, %v577
      %v579 = vpop.f32.mrb[0].mxu0
      %v580 = vpop.f32.mrb[0].mxu0
      %v581 = vpop.f32.mrb[0].mxu0
      %582 = vdwg.mxu0
      %s583 = scalar_lea.vmem %s1, 4
      %v584 = vld [vmem:[%s583] sm:$0x3]
      %v586 = vsel %vm279, %v584, 0
      %588 = vmatprep.subr.bf16.mxu0 0
      %589 = vmatpush1.bf16.msra.mxu0 %v285
      %590 = vmatprep.subr.bf16.mxu0 0
      %591 = vmatpush1.bf16.msra.mxu0 0
      %592 = vmatprep.subr.bf16.mxu0 0
      %593 = vmatpush1.bf16.msra.mxu0 0
      %594 = vmatprep.subr.bf16.mxu0 0
      %595 = vmatpush1.bf16.msra.mxu0 0
      %596 = vmatprep.subr.bf16.mxu0 0
      %597 = vmatpush1.bf16.msra.mxu0 0
      %598 = vmatprep.subr.bf16.mxu0 0
      %599 = vmatpush1.bf16.msra.mxu0 0
      %600 = vmatprep.subr.bf16.mxu0 0
      %601 = vmatpush1.bf16.msra.mxu0 0
      %602 = vmatprep.subr.bf16.mxu0 0
      %603 = vmatpush1.bf16.msra.mxu0 0
      %604 = vmatprep.subr.bf16.mxu0 0
      %605 = vmatpush1.bf16.msra.mxu0 0
      %606 = vmatprep.subr.bf16.mxu0 0
      %607 = vmatpush1.bf16.msra.mxu0 0
      %608 = vmatprep.subr.bf16.mxu0 0
      %609 = vmatpush1.bf16.msra.mxu0 0
      %610 = vmatprep.subr.bf16.mxu0 0
      %611 = vmatpush1.bf16.msra.mxu0 0
      %612 = vmatprep.subr.bf16.mxu0 0
      %613 = vmatpush1.bf16.msra.mxu0 0
      %614 = vmatprep.subr.bf16.mxu0 0
      %615 = vmatpush1.bf16.msra.mxu0 0
      %616 = vmatprep.subr.bf16.mxu0 0
      %617 = vmatpush1.bf16.msra.mxu0 0
      %618 = vmatprep.subr.bf16.mxu0 0
      %619 = vmatpush1.bf16.msra.mxu0 0
      %620 = vmatprep.mubr.bf16.mxu0 0
      %621 = vmatmul.mubr.bf16.gmra.mrb[0].mxu0 %v586
      %v622 = vpop.f32.mrb[0].mxu0
      %v623 = vadd.f32 0.0, %v622
      %v624 = vpop.f32.mrb[0].mxu0
      %v625 = vpop.f32.mrb[0].mxu0
      %v626 = vpop.f32.mrb[0].mxu0
      %627 = vdwg.mxu0
      %v628 = vpack.c.bf16 %v623, %v623
      %s629 = scalar_lea.vmem %s2, 128
      %v630 = vld [vmem:[%s629] sm:$0xf]
      %v631 = vld [vmem:[%s629 + $0x4] sm:$0xf]
      %v632 = vld [vmem:[%s629 + $0x8] sm:$0xf]
      %v633 = vld [vmem:[%s629 + $0xc] sm:$0xf]
      %v634 = vld [vmem:[%s629 + $0x10] sm:$0xf]
      %v635 = vld [vmem:[%s629 + $0x14] sm:$0xf]
      %v636 = vld [vmem:[%s629 + $0x18] sm:$0xf]
      %v637 = vld [vmem:[%s629 + $0x1c] sm:$0xf]
      %v638 = vld [vmem:[%s629 + $0x20] sm:$0xf]
      %v639 = vld [vmem:[%s629 + $0x24] sm:$0xf]
      %v640 = vld [vmem:[%s629 + $0x28] sm:$0xf]
      %v641 = vld [vmem:[%s629 + $0x2c] sm:$0xf]
      %v642 = vld [vmem:[%s629 + $0x30] sm:$0xf]
      %v643 = vld [vmem:[%s629 + $0x34] sm:$0xf]
      %v644 = vld [vmem:[%s629 + $0x38] sm:$0xf]
      %v645 = vld [vmem:[%s629 + $0x3c] sm:$0xf]
      %v662 = vunpack.c.l.b16 %v630
      %v663 = vunpack.c.l.b16 %v631
      %v664 = vunpack.c.l.b16 %v632
      %v665 = vunpack.c.l.b16 %v633
      %v666 = vunpack.c.l.b16 %v634
      %v667 = vunpack.c.l.b16 %v635
      %v668 = vunpack.c.l.b16 %v636
      %v669 = vunpack.c.l.b16 %v637
      %v670 = vunpack.c.l.b16 %v638
      %v671 = vunpack.c.l.b16 %v639
      %v672 = vunpack.c.l.b16 %v640
      %v673 = vunpack.c.l.b16 %v641
      %v674 = vunpack.c.l.b16 %v642
      %v675 = vunpack.c.l.b16 %v643
      %v676 = vunpack.c.l.b16 %v644
      %v677 = vunpack.c.l.b16 %v645
      %v678 = vpack.c.b16 %v663, %v662
      %v679 = vpack.c.b16 %v665, %v664
      %v680 = vpack.c.b16 %v667, %v666
      %v681 = vpack.c.b16 %v669, %v668
      %v682 = vpack.c.b16 %v671, %v670
      %v683 = vpack.c.b16 %v673, %v672
      %v684 = vpack.c.b16 %v675, %v674
      %v685 = vpack.c.b16 %v677, %v676
      %694 = vmatprep.subr.bf16.mxu0 0
      %695 = vmatpush1.bf16.msra.mxu0 %v678
      %696 = vmatprep.subr.bf16.mxu0 0
      %697 = vmatpush1.bf16.msra.mxu0 %v679
      %698 = vmatprep.subr.bf16.mxu0 0
      %699 = vmatpush1.bf16.msra.mxu0 %v680
      %700 = vmatprep.subr.bf16.mxu0 0
      %701 = vmatpush1.bf16.msra.mxu0 %v681
      %702 = vmatprep.subr.bf16.mxu0 0
      %703 = vmatpush1.bf16.msra.mxu0 %v682
      %704 = vmatprep.subr.bf16.mxu0 0
      %705 = vmatpush1.bf16.msra.mxu0 %v683
      %706 = vmatprep.subr.bf16.mxu0 0
      %707 = vmatpush1.bf16.msra.mxu0 %v684
      %708 = vmatprep.subr.bf16.mxu0 0
      %709 = vmatpush1.bf16.msra.mxu0 %v685
      %710 = vmatprep.subr.bf16.mxu0 0
      %711 = vmatpush1.bf16.msra.mxu0 0
      %712 = vmatprep.subr.bf16.mxu0 0
      %713 = vmatpush1.bf16.msra.mxu0 0
      %714 = vmatprep.subr.bf16.mxu0 0
      %715 = vmatpush1.bf16.msra.mxu0 0
      %716 = vmatprep.subr.bf16.mxu0 0
      %717 = vmatpush1.bf16.msra.mxu0 0
      %718 = vmatprep.subr.bf16.mxu0 0
      %719 = vmatpush1.bf16.msra.mxu0 0
      %720 = vmatprep.subr.bf16.mxu0 0
      %721 = vmatpush1.bf16.msra.mxu0 0
      %722 = vmatprep.subr.bf16.mxu0 0
      %723 = vmatpush1.bf16.msra.mxu0 0
      %724 = vmatprep.subr.bf16.mxu0 0
      %725 = vmatpush1.bf16.msra.mxu0 0
      %726 = vmatprep.mubr.bf16.mxu0 0
      %727 = vmatmul.mubr.bf16.gmra.mrb[0].mxu0 %v628
      %v728 = vpop.f32.mrb[0].mxu0
      %v729 = vadd.f32 0.0, %v728
      %v730 = vpop.f32.mrb[0].mxu0
      %v731 = vpop.f32.mrb[0].mxu0
      %v732 = vpop.f32.mrb[0].mxu0
      %733 = vdwg.mxu0
      %v734 = vadd.f32 %v578, %v729
      %735 = vst [vmem:[%s253] sm:$0xf] %v734
      %v736 = vsel %vm283, %v734, 0.0
      %v737 = vrot.slane %v736, 4
      %v738 = vadd.f32 %v736, %v737
      %v739 = vrot.slane %v738, 2
      %v740 = vadd.f32 %v738, %v739
      %v741 = vrot.slane %v740, 1
      %v742 = vadd.f32 %v740, %v741
      %v743 = vmul.f32 %v734, %v734
      %v744 = vsel %vm283, %v743, 0.0
      %v745 = vrot.slane %v744, 4
      %v746 = vadd.f32 %v744, %v745
      %v747 = vrot.slane %v746, 2
      %v748 = vadd.f32 %v746, %v747
      %v749 = vrot.slane %v748, 1
      %v750 = vadd.f32 %v748, %v749
      %v751 = vlaneseq
      %v752 = vshrl.u32 %v751, 7
      %vm753 = vcmp.eq.s32.totalorder %v752, 0
      %vm754 = vcmp.eq.s32.totalorder %v752, 1
      %v755 = vsel %vm754, %v750, 0.0
      %v756 = vsel %vm753, %v742, %v755
      %757 = vst [vmem:[%s257] sm:$0xff] %v756
      %p758 = scmp.lt.s32.totalorder %s18, 1
      %s759 = scalar_select %p758, %s18, 1
      %s760 = smul.addr %s759, 4
      %s761 = scalar_lea.vmem %s5, %s760
      %p762 = scmp.lt.s32.totalorder %s18, 1
      %s763 = scalar_select %p762, %s18, 1
      %s764 = smul.addr %s763, 8
      %s765 = scalar_lea.vmem %s6, %s764
      // Predicated region
      $region41: #{autoencoder_forward.7} parent=39 // pred_check
        %p766 = pneg %p146
      $region42: #{autoencoder_forward.7} parent=39 // pred_check_branch
        %768 = sbr.rel (%p766) target = $region44
      $region43: #{autoencoder_forward.7} parent=39 // pred_region
        _
      $region44: #{autoencoder_forward.7} parent=39 // pred_fallthru
        _
      // Predicated region
      $region45: #{autoencoder_forward.7} parent=39 // pred_check
        %p769 = pneg %p172
      $region46: #{autoencoder_forward.7} parent=39 // pred_check_branch
        %771 = sbr.rel (%p769) target = $region48
      $region47: #{autoencoder_forward.7} parent=39 // pred_region
        _
      $region48: #{autoencoder_forward.7} parent=39 // pred_fallthru
        _
    $region40: #{autoencoder_forward.7} parent=5 // pred_fallthru
      _
    %p772 = scmp.le.s32.totalorder 2, %s13
    // Predicated region
    $region49: #{autoencoder_forward.7} parent=5 // pred_check
      %p773 = pneg %p772
    $region50: #{autoencoder_forward.7} parent=5 // pred_check_branch
      %775 = sbr.rel (%p773) target = $region52
    $region51: #{autoencoder_forward.7} parent=5 // pred_region
      %s776 = ssub.s32 %s13, 2
      // Predicated region
      $region53: #{autoencoder_forward.7} parent=51 // pred_check
        %p777 = pneg %p152
      $region54: #{autoencoder_forward.7} parent=51 // pred_check_branch
        %779 = sbr.rel (%p777) target = $region56
      $region55: #{autoencoder_forward.7} parent=51 // pred_region
        %p780 = scmp.lt.s32.totalorder %s19, 1
        %s781 = scalar_select %p780, %s19, 1
        %s782 = smul.addr %s781, 4
        %s783 = scalar_lea.vmem %s5, %s782
      $region56: #{autoencoder_forward.7} parent=51 // pred_fallthru
        _
      // Predicated region
      $region57: #{autoencoder_forward.7} parent=51 // pred_check
        %p784 = pneg %p178
      $region58: #{autoencoder_forward.7} parent=51 // pred_check_branch
        %786 = sbr.rel (%p784) target = $region60
      $region59: #{autoencoder_forward.7} parent=51 // pred_region
        %p787 = scmp.lt.s32.totalorder %s19, 1
        %s788 = scalar_select %p787, %s19, 1
        %s789 = smul.addr %s788, 8
        %s790 = scalar_lea.vmem %s6, %s789
      $region60: #{autoencoder_forward.7} parent=51 // pred_fallthru
        _
    $region52: #{autoencoder_forward.7} parent=5 // pred_fallthru
      _
  $region6: #{autoencoder_forward.7} parent=0 // loop_footer
    %s17 = sadd.s32 1, %s13
  $region7: #{autoencoder_forward.7} parent=0 // loop_footer_branch
    %12 = sbr.rel target = $region3
  $region8: #{autoencoder_forward.7} parent=0 // loop_exit
    _

// kernel: autoencoder_forward.8
$region0: #{autoencoder_forward.8}
  #allocation0 [shape = 'u32[]', space=smem, size = 0x4, offset = 0x4, fixed_abs, tag = 'smem constant byte address 0x4 - core index']
  #allocation1 [shape = 'u32[144,128]{1,0:T(1,128)}', space=vmem, size = 0x12000, scoped, tag = 'internal scratch']
  %s0 = inlined_call_operand.vmem [shape: f32[2,4,128], index: 0, kind: input, shape index: {}]
  %s1 = inlined_call_operand.vmem [shape: bf16[3,2,4], index: 1, kind: input, shape index: {}]
  %s2 = inlined_call_operand.vmem [shape: bf16[3,128,128], index: 2, kind: input, shape index: {}]
  %s3 = inlined_call_operand.vmem [shape: f32[1,128], index: 3, kind: input, shape index: {}]
  %s4 = inlined_call_operand.vmem [shape: f32[1,128], index: 4, kind: input, shape index: {}]
  %s5 = inlined_call_operand.vmem [shape: f32[2,2,128], index: 5, kind: output, shape index: {0}]
  %s6 = inlined_call_operand.vmem [shape: f32[2,8,128], index: 6, kind: output, shape index: {1}]
  %7 = xla_tuple %s5, %s6
  %s8 = sld [smem:[#allocation0]]
  $region61: #{autoencoder_forward.8} parent=0
    _
  %s10 = ssub.s32 1, %s8
  %s11 = scalar_select 0, %s10, %s8
  loop: start=0, step=1, limit=4
  $region2: #{autoencoder_forward.8} parent=0 // loop_pre_header
    _
  $region3: #{autoencoder_forward.8} parent=0 // loop_header
    %s13 = sphi 0, %s17
    %p14 = scmp.ge.s32.totalorder %s13, 4
    %s23 = sphi 0, %s25
    %s26 = sphi 0, %s23
    %s27 = sphi 0, %s26
    %s43 = sphi 0, %s27
    %s47 = sphi 0, %s47
    %s49 = sphi 0, %s47
    %s50 = sphi 0, %s49
    %s64 = sphi 0, %s50
    %s68 = sphi 0, %s68
    %s70 = sphi 0, %s68
    %s71 = sphi 0, %s70
    %s85 = sphi 0, %s71
    %s89 = sphi 0, %s89
    %s91 = sphi 0, %s89
    %s92 = sphi 0, %s91
    %s106 = sphi 0, %s92
    %s110 = sphi 0, %s110
    %s112 = sphi 0, %s110
    %s113 = sphi 0, %s112
    %s127 = sphi 0, %s113
    %s133 = sphi 0, %s135
    %s136 = sphi 0, %s133
    %s137 = sphi 0, %s136
    %s153 = sphi 0, %s137
    %s159 = sphi 0, %s161
    %s162 = sphi 0, %s159
    %s163 = sphi 0, %s162
    %s179 = sphi 0, %s163
  $region4: #{autoencoder_forward.8} parent=0 // loop_header_branch
    %16 = sbr.rel (%p14) target = $region8
  $region5: #{autoencoder_forward.8} parent=0 // loop_body
    %s18 = ssub.s32 %s13, 1
    %s19 = ssub.s32 %s13, 2
    %s20 = sadd.s32 %s13, 1
    %s21 = ssub.s32 %s13, %s20
    %p22 = scmp.eq.s32.totalorder %s21, 0
    %s24 = sadd.s32 %s23, 1
    %s25 = scalar_select %p22, %s23, %s24
    %p28 = pneg %p22
    %p29 = scmp.eq.s32.totalorder %s13, 1
    %p30 = por %p28, %p29
    %p31 = scmp.ne.s32.totalorder %s23, %s26
    %p32 = scmp.eq.s32.totalorder %s13, 0
    %p33 = por %p31, %p32
    %p34 = scmp.ne.s32.totalorder %s23, %s26
    %p35 = scmp.eq.s32.totalorder %s18, 1
    %p36 = por %p34, %p35
    %p37 = scmp.ne.s32.totalorder %s26, %s27
    %p38 = scmp.eq.s32.totalorder %s18, 0
    %p39 = por %p37, %p38
    %p40 = scmp.ne.s32.totalorder %s26, %s27
    %p41 = scmp.eq.s32.totalorder %s19, 1
    %p42 = por %p40, %p41
    %p44 = scmp.ne.s32.totalorder %s27, %s43
    %p45 = scmp.eq.s32.totalorder %s19, 0
    %p46 = por %p44, %p45
    %s48 = sadd.s32 %s47, 1
    %p51 = scmp.eq.s32.totalorder %s13, 1
    %p52 = scmp.ne.s32.totalorder %s47, %s49
    %p53 = scmp.eq.s32.totalorder %s13, 0
    %p54 = por %p52, %p53
    %p55 = scmp.ne.s32.totalorder %s47, %s49
    %p56 = scmp.eq.s32.totalorder %s18, 1
    %p57 = por %p55, %p56
    %p58 = scmp.ne.s32.totalorder %s49, %s50
    %p59 = scmp.eq.s32.totalorder %s18, 0
    %p60 = por %p58, %p59
    %p61 = scmp.ne.s32.totalorder %s49, %s50
    %p62 = scmp.eq.s32.totalorder %s19, 1
    %p63 = por %p61, %p62
    %p65 = scmp.ne.s32.totalorder %s50, %s64
    %p66 = scmp.eq.s32.totalorder %s19, 0
    %p67 = por %p65, %p66
    %s69 = sadd.s32 %s68, 1
    %p72 = scmp.eq.s32.totalorder %s13, 1
    %p73 = scmp.ne.s32.totalorder %s68, %s70
    %p74 = scmp.eq.s32.totalorder %s13, 0
    %p75 = por %p73, %p74
    %p76 = scmp.ne.s32.totalorder %s68, %s70
    %p77 = scmp.eq.s32.totalorder %s18, 1
    %p78 = por %p76, %p77
    %p79 = scmp.ne.s32.totalorder %s70, %s71
    %p80 = scmp.eq.s32.totalorder %s18, 0
    %p81 = por %p79, %p80
    %p82 = scmp.ne.s32.totalorder %s70, %s71
    %p83 = scmp.eq.s32.totalorder %s19, 1
    %p84 = por %p82, %p83
    %p86 = scmp.ne.s32.totalorder %s71, %s85
    %p87 = scmp.eq.s32.totalorder %s19, 0
    %p88 = por %p86, %p87
    %s90 = sadd.s32 %s89, 1
    %p93 = scmp.eq.s32.totalorder %s13, 1
    %p94 = scmp.ne.s32.totalorder %s89, %s91
    %p95 = scmp.eq.s32.totalorder %s13, 0
    %p96 = por %p94, %p95
    %p97 = scmp.ne.s32.totalorder %s89, %s91
    %p98 = scmp.eq.s32.totalorder %s18, 1
    %p99 = por %p97, %p98
    %p100 = scmp.ne.s32.totalorder %s91, %s92
    %p101 = scmp.eq.s32.totalorder %s18, 0
    %p102 = por %p100, %p101
    %p103 = scmp.ne.s32.totalorder %s91, %s92
    %p104 = scmp.eq.s32.totalorder %s19, 1
    %p105 = por %p103, %p104
    %p107 = scmp.ne.s32.totalorder %s92, %s106
    %p108 = scmp.eq.s32.totalorder %s19, 0
    %p109 = por %p107, %p108
    %s111 = sadd.s32 %s110, 1
    %p114 = scmp.eq.s32.totalorder %s13, 1
    %p115 = scmp.ne.s32.totalorder %s110, %s112
    %p116 = scmp.eq.s32.totalorder %s13, 0
    %p117 = por %p115, %p116
    %p118 = scmp.ne.s32.totalorder %s110, %s112
    %p119 = scmp.eq.s32.totalorder %s18, 1
    %p120 = por %p118, %p119
    %p121 = scmp.ne.s32.totalorder %s112, %s113
    %p122 = scmp.eq.s32.totalorder %s18, 0
    %p123 = por %p121, %p122
    %p124 = scmp.ne.s32.totalorder %s112, %s113
    %p125 = scmp.eq.s32.totalorder %s19, 1
    %p126 = por %p124, %p125
    %p128 = scmp.ne.s32.totalorder %s113, %s127
    %p129 = scmp.eq.s32.totalorder %s19, 0
    %p130 = por %p128, %p129
    %s131 = ssub.s32 %s13, %s20
    %p132 = scmp.eq.s32.totalorder %s131, 0
    %s134 = sadd.s32 %s133, 1
    %s135 = scalar_select %p132, %s133, %s134
    %p138 = pneg %p132
    %p139 = scmp.eq.s32.totalorder %s13, 1
    %p140 = por %p138, %p139
    %p141 = scmp.ne.s32.totalorder %s133, %s136
    %p142 = scmp.eq.s32.totalorder %s13, 0
    %p143 = por %p141, %p142
    %p144 = scmp.ne.s32.totalorder %s133, %s136
    %p145 = scmp.eq.s32.totalorder %s18, 1
    %p146 = por %p144, %p145
    %p147 = scmp.ne.s32.totalorder %s136, %s137
    %p148 = scmp.eq.s32.totalorder %s18, 0
    %p149 = por %p147, %p148
    %p150 = scmp.ne.s32.totalorder %s136, %s137
    %p151 = scmp.eq.s32.totalorder %s19, 1
    %p152 = por %p150, %p151
    %p154 = scmp.ne.s32.totalorder %s137, %s153
    %p155 = scmp.eq.s32.totalorder %s19, 0
    %p156 = por %p154, %p155
    %s157 = ssub.s32 %s13, %s20
    %p158 = scmp.eq.s32.totalorder %s157, 0
    %s160 = sadd.s32 %s159, 1
    %s161 = scalar_select %p158, %s159, %s160
    %p164 = pneg %p158
    %p165 = scmp.eq.s32.totalorder %s13, 1
    %p166 = por %p164, %p165
    %p167 = scmp.ne.s32.totalorder %s159, %s162
    %p168 = scmp.eq.s32.totalorder %s13, 0
    %p169 = por %p167, %p168
    %p170 = scmp.ne.s32.totalorder %s159, %s162
    %p171 = scmp.eq.s32.totalorder %s18, 1
    %p172 = por %p170, %p171
    %p173 = scmp.ne.s32.totalorder %s162, %s163
    %p174 = scmp.eq.s32.totalorder %s18, 0
    %p175 = por %p173, %p174
    %p176 = scmp.ne.s32.totalorder %s162, %s163
    %p177 = scmp.eq.s32.totalorder %s19, 1
    %p178 = por %p176, %p177
    %p180 = scmp.ne.s32.totalorder %s163, %s179
    %p181 = scmp.eq.s32.totalorder %s19, 0
    %p182 = por %p180, %p181
    %p183 = scmp.le.s32.totalorder 1, %s13
    %p184 = scmp.lt.s32.totalorder %s13, 3
    %p185 = pnand %p183, %p184
    %p186 = pneg %p185
    // Predicated region
    $region9: #{autoencoder_forward.8} parent=5 // pred_check
      _
    $region10: #{autoencoder_forward.8} parent=5 // pred_check_branch
      %188 = sbr.rel (%p185) target = $region12
    $region11: #{autoencoder_forward.8} parent=5 // pred_region
      %s189 = ssub.s32 %s13, 1
      // Predicated region
      $region13: #{autoencoder_forward.8} parent=11 // pred_check
        %p190 = pneg %p60
      $region14: #{autoencoder_forward.8} parent=11 // pred_check_branch
        %192 = sbr.rel (%p190) target = $region16
      $region15: #{autoencoder_forward.8} parent=11 // pred_region
        _
      $region16: #{autoencoder_forward.8} parent=11 // pred_fallthru
        _
      // Predicated region
      $region17: #{autoencoder_forward.8} parent=11 // pred_check
        %p193 = pneg %p81
      $region18: #{autoencoder_forward.8} parent=11 // pred_check_branch
        %195 = sbr.rel (%p193) target = $region20
      $region19: #{autoencoder_forward.8} parent=11 // pred_region
        _
      $region20: #{autoencoder_forward.8} parent=11 // pred_fallthru
        _
      // Predicated region
      $region21: #{autoencoder_forward.8} parent=11 // pred_check
        %p196 = pneg %p102
      $region22: #{autoencoder_forward.8} parent=11 // pred_check_branch
        %198 = sbr.rel (%p196) target = $region24
      $region23: #{autoencoder_forward.8} parent=11 // pred_region
        _
      $region24: #{autoencoder_forward.8} parent=11 // pred_fallthru
        _
      // Predicated region
      $region25: #{autoencoder_forward.8} parent=11 // pred_check
        %p199 = pneg %p123
      $region26: #{autoencoder_forward.8} parent=11 // pred_check_branch
        %201 = sbr.rel (%p199) target = $region28
      $region27: #{autoencoder_forward.8} parent=11 // pred_region
        _
      $region28: #{autoencoder_forward.8} parent=11 // pred_fallthru
        _
    $region12: #{autoencoder_forward.8} parent=5 // pred_fallthru
      _
    %p202 = scmp.lt.s32.totalorder %s13, 2
    // Predicated region
    $region29: #{autoencoder_forward.8} parent=5 // pred_check
      %p203 = pneg %p202
    $region30: #{autoencoder_forward.8} parent=5 // pred_check_branch
      %205 = sbr.rel (%p203) target = $region32
    $region31: #{autoencoder_forward.8} parent=5 // pred_region
      // Predicated region
      $region33: #{autoencoder_forward.8} parent=31 // pred_check
        %p206 = pneg %p33
      $region34: #{autoencoder_forward.8} parent=31 // pred_check_branch
        %208 = sbr.rel (%p206) target = $region36
      $region35: #{autoencoder_forward.8} parent=31 // pred_region
        %p209 = scmp.lt.s32.totalorder %s13, 1
        %s210 = scalar_select %p209, %s13, 1
        %s211 = smul.addr %s210, 4
        %s212 = scalar_lea.vmem %s0, %s211
      $region36: #{autoencoder_forward.8} parent=31 // pred_fallthru
        _
    $region32: #{autoencoder_forward.8} parent=5 // pred_fallthru
      _
    %p213 = scmp.le.s32.totalorder 1, %s13
    %p214 = scmp.lt.s32.totalorder %s13, 3
    %p215 = pnand %p213, %p214
    %p216 = pneg %p215
    // Predicated region
    $region37: #{autoencoder_forward.8} parent=5 // pred_check
      _
    $region38: #{autoencoder_forward.8} parent=5 // pred_check_branch
      %218 = sbr.rel (%p215) target = $region40
    $region39: #{autoencoder_forward.8} parent=5 // pred_region
      %s219 = ssub.s32 %s13, 1
      %p220 = scmp.lt.s32.totalorder %s18, 1
      %s221 = scalar_select %p220, %s18, 1
      %s222 = smul.addr %s221, 4
      %s223 = scalar_lea.vmem %s0, %s222
      %p224 = pneg %p39
      %p225 = pneg %p36
      %p226 = pneg %p60
      %p227 = pneg %p57
      %p228 = pneg %p81
      %p229 = pneg %p78
      %p230 = pneg %p102
      %p231 = pneg %p99
      %p232 = pneg %p123
      %p233 = pneg %p120
      %p234 = pneg %p149
      %p235 = pneg %p146
      %p236 = scmp.lt.s32.totalorder %s18, 1
      %s237 = scalar_select %p236, %s18, 1
      %s238 = smul.addr %s237, 2
      %s239 = scalar_lea.vmem %s5, %s238
      %p240 = pneg %p175
      %p241 = pneg %p172
      %p242 = scmp.lt.s32.totalorder %s18, 1
      %s243 = scalar_select %p242, %s18, 1
      %s244 = smul.addr %s243, 8
      %s245 = scalar_lea.vmem %s6, %s244
      %p246 = scmp.lt.s32.totalorder %s18, 1
      %s247 = scalar_select %p246, %s18, 1
      %s248 = smul.addr %s247, 4
      %s249 = scalar_lea.vmem %s0, %s248
      %p250 = scmp.lt.s32.totalorder %s18, 1
      %s251 = scalar_select %p250, %s18, 1
      %s252 = smul.addr %s251, 2
      %s253 = scalar_lea.vmem %s5, %s252
      %p254 = scmp.lt.s32.totalorder %s18, 1
      %s255 = scalar_select %p254, %s18, 1
      %s256 = smul.addr %s255, 8
      %s257 = scalar_lea.vmem %s6, %s256
      %v259 = vld [vmem:[%s249] sm:$0xf]
      %v260 = vld [vmem:[%s3] sm:$0x1]
      %v262 = vlaneseq
      %v263 = vshrl.u32 %v262, 7
      %v264 = vsub.s32 0, %v263
      %v265 = vrot.slane %v260, %v264
      %v267 = vmul.f32 %v259, %v265
      %v268 = vld [vmem:[%s4] sm:$0x1]
      %v270 = vlaneseq
      %v271 = vshrl.u32 %v270, 7
      %v272 = vsub.s32 0, %v271
      %v273 = vrot.slane %v268, %v272
      %v275 = vadd.f32 %v267, %v273
      %v276 = vmax.f32 %v275, 0.0
      %v277 = vpack.c.bf16 %v276, %v276
      %v278 = vld [vmem:[%s1] sm:$0x1]
      %vm279 = vcmask 31744
      %v281 = vsel %vm279, %v278, 0
      %vm283 = vcmask 1041408
      %v285 = vsel %vm283, %v277, 0
      %287 = vmatprep.subr.bf16.mxu0 0
      %288 = vmatpush1.bf16.msra.mxu0 %v285
      %289 = vmatprep.subr.bf16.mxu0 0
      %290 = vmatpush1.bf16.msra.mxu0 0
      %291 = vmatprep.subr.bf16.mxu0 0
      %292 = vmatpush1.bf16.msra.mxu0 0
      %293 = vmatprep.subr.bf16.mxu0 0
      %294 = vmatpush1.bf16.msra.mxu0 0
      %295 = vmatprep.subr.bf16.mxu0 0
      %296 = vmatpush1.bf16.msra.mxu0 0
      %297 = vmatprep.subr.bf16.mxu0 0
      %298 = vmatpush1.bf16.msra.mxu0 0
      %299 = vmatprep.subr.bf16.mxu0 0
      %300 = vmatpush1.bf16.msra.mxu0 0
      %301 = vmatprep.subr.bf16.mxu0 0
      %302 = vmatpush1.bf16.msra.mxu0 0
      %303 = vmatprep.subr.bf16.mxu0 0
      %304 = vmatpush1.bf16.msra.mxu0 0
      %305 = vmatprep.subr.bf16.mxu0 0
      %306 = vmatpush1.bf16.msra.mxu0 0
      %307 = vmatprep.subr.bf16.mxu0 0
      %308 = vmatpush1.bf16.msra.mxu0 0
      %309 = vmatprep.subr.bf16.mxu0 0
      %310 = vmatpush1.bf16.msra.mxu0 0
      %311 = vmatprep.subr.bf16.mxu0 0
      %312 = vmatpush1.bf16.msra.mxu0 0
      %313 = vmatprep.subr.bf16.mxu0 0
      %314 = vmatpush1.bf16.msra.mxu0 0
      %315 = vmatprep.subr.bf16.mxu0 0
      %316 = vmatpush1.bf16.msra.mxu0 0
      %317 = vmatprep.subr.bf16.mxu0 0
      %318 = vmatpush1.bf16.msra.mxu0 0
      %319 = vmatprep.mubr.bf16.mxu0 0
      %320 = vmatmul.mubr.bf16.gmra.mrb[0].mxu0 %v281
      %v321 = vpop.f32.mrb[0].mxu0
      %v322 = vadd.f32 0.0, %v321
      %v323 = vpop.f32.mrb[0].mxu0
      %v324 = vpop.f32.mrb[0].mxu0
      %v325 = vpop.f32.mrb[0].mxu0
      %326 = vdwg.mxu0
      %v327 = vpack.c.bf16 %v322, %v322
      %v328 = vld [vmem:[%s2] sm:$0xf]
      %v329 = vld [vmem:[%s2 + $0x4] sm:$0xf]
      %v330 = vld [vmem:[%s2 + $0x8] sm:$0xf]
      %v331 = vld [vmem:[%s2 + $0xc] sm:$0xf]
      %v332 = vld [vmem:[%s2 + $0x10] sm:$0xf]
      %v333 = vld [vmem:[%s2 + $0x14] sm:$0xf]
      %v334 = vld [vmem:[%s2 + $0x18] sm:$0xf]
      %v335 = vld [vmem:[%s2 + $0x1c] sm:$0xf]
      %v336 = vld [vmem:[%s2 + $0x20] sm:$0xf]
      %v337 = vld [vmem:[%s2 + $0x24] sm:$0xf]
      %v338 = vld [vmem:[%s2 + $0x28] sm:$0xf]
      %v339 = vld [vmem:[%s2 + $0x2c] sm:$0xf]
      %v340 = vld [vmem:[%s2 + $0x30] sm:$0xf]
      %v341 = vld [vmem:[%s2 + $0x34] sm:$0xf]
      %v342 = vld [vmem:[%s2 + $0x38] sm:$0xf]
      %v343 = vld [vmem:[%s2 + $0x3c] sm:$0xf]
      %s344 = scalar_lea.vmem %s1, 1
      %v345 = vld [vmem:[%s344] sm:$0x1]
      %v347 = vsel %vm279, %v345, 0
      %349 = vmatprep.subr.bf16.mxu0 0
      %350 = vmatpush1.bf16.msra.mxu0 %v285
      %351 = vmatprep.subr.bf16.mxu0 0
      %352 = vmatpush1.bf16.msra.mxu0 0
      %353 = vmatprep.subr.bf16.mxu0 0
      %354 = vmatpush1.bf16.msra.mxu0 0
      %355 = vmatprep.subr.bf16.mxu0 0
      %356 = vmatpush1.bf16.msra.mxu0 0
      %357 = vmatprep.subr.bf16.mxu0 0
      %358 = vmatpush1.bf16.msra.mxu0 0
      %359 = vmatprep.subr.bf16.mxu0 0
      %360 = vmatpush1.bf16.msra.mxu0 0
      %361 = vmatprep.subr.bf16.mxu0 0
      %362 = vmatpush1.bf16.msra.mxu0 0
      %363 = vmatprep.subr.bf16.mxu0 0
      %364 = vmatpush1.bf16.msra.mxu0 0
      %365 = vmatprep.subr.bf16.mxu0 0
      %366 = vmatpush1.bf16.msra.mxu0 0
      %367 = vmatprep.subr.bf16.mxu0 0
      %368 = vmatpush1.bf16.msra.mxu0 0
      %369 = vmatprep.subr.bf16.mxu0 0
      %370 = vmatpush1.bf16.msra.mxu0 0
      %371 = vmatprep.subr.bf16.mxu0 0
      %372 = vmatpush1.bf16.msra.mxu0 0
      %373 = vmatprep.subr.bf16.mxu0 0
      %374 = vmatpush1.bf16.msra.mxu0 0
      %375 = vmatprep.subr.bf16.mxu0 0
      %376 = vmatpush1.bf16.msra.mxu0 0
      %377 = vmatprep.subr.bf16.mxu0 0
      %378 = vmatpush1.bf16.msra.mxu0 0
      %379 = vmatprep.subr.bf16.mxu0 0
      %380 = vmatpush1.bf16.msra.mxu0 0
      %381 = vmatprep.mubr.bf16.mxu0 0
      %382 = vmatmul.mubr.bf16.gmra.mrb[0].mxu0 %v347
      %v383 = vpop.f32.mrb[0].mxu0
      %v384 = vadd.f32 0.0, %v383
      %v385 = vpop.f32.mrb[0].mxu0
      %v386 = vpop.f32.mrb[0].mxu0
      %v387 = vpop.f32.mrb[0].mxu0
      %388 = vdwg.mxu0
      %v389 = vpack.c.bf16 %v384, %v384
      %s390 = scalar_lea.vmem %s2, 64
      %v391 = vld [vmem:[%s390] sm:$0xf]
      %v392 = vld [vmem:[%s390 + $0x4] sm:$0xf]
      %v393 = vld [vmem:[%s390 + $0x8] sm:$0xf]
      %v394 = vld [vmem:[%s390 + $0xc] sm:$0xf]
      %v395 = vld [vmem:[%s390 + $0x10] sm:$0xf]
      %v396 = vld [vmem:[%s390 + $0x14] sm:$0xf]
      %v397 = vld [vmem:[%s390 + $0x18] sm:$0xf]
      %v398 = vld [vmem:[%s390 + $0x1c] sm:$0xf]
      %v399 = vld [vmem:[%s390 + $0x20] sm:$0xf]
      %v400 = vld [vmem:[%s390 + $0x24] sm:$0xf]
      %v401 = vld [vmem:[%s390 + $0x28] sm:$0xf]
      %v402 = vld [vmem:[%s390 + $0x2c] sm:$0xf]
      %v403 = vld [vmem:[%s390 + $0x30] sm:$0xf]
      %v404 = vld [vmem:[%s390 + $0x34] sm:$0xf]
      %v405 = vld [vmem:[%s390 + $0x38] sm:$0xf]
      %v406 = vld [vmem:[%s390 + $0x3c] sm:$0xf]
      %v423 = vunpack.c.l.b16 %v391
      %v424 = vunpack.c.l.b16 %v392
      %v425 = vunpack.c.l.b16 %v393
      %v426 = vunpack.c.l.b16 %v394
      %v427 = vunpack.c.l.b16 %v395
      %v428 = vunpack.c.l.b16 %v396
      %v429 = vunpack.c.l.b16 %v397
      %v430 = vunpack.c.l.b16 %v398
      %v431 = vunpack.c.l.b16 %v399
      %v432 = vunpack.c.l.b16 %v400
      %v433 = vunpack.c.l.b16 %v401
      %v434 = vunpack.c.l.b16 %v402
      %v435 = vunpack.c.l.b16 %v403
      %v436 = vunpack.c.l.b16 %v404
      %v437 = vunpack.c.l.b16 %v405
      %v438 = vunpack.c.l.b16 %v406
      %v439 = vpack.c.b16 %v424, %v423
      %v440 = vpack.c.b16 %v426, %v425
      %v441 = vpack.c.b16 %v428, %v427
      %v442 = vpack.c.b16 %v430, %v429
      %v443 = vpack.c.b16 %v432, %v431
      %v444 = vpack.c.b16 %v434, %v433
      %v445 = vpack.c.b16 %v436, %v435
      %v446 = vpack.c.b16 %v438, %v437
      %455 = vmatprep.subr.bf16.mxu0 0
      %456 = vmatpush1.bf16.msra.mxu0 %v439
      %457 = vmatprep.subr.bf16.mxu0 0
      %458 = vmatpush1.bf16.msra.mxu0 %v440
      %459 = vmatprep.subr.bf16.mxu0 0
      %460 = vmatpush1.bf16.msra.mxu0 %v441
      %461 = vmatprep.subr.bf16.mxu0 0
      %462 = vmatpush1.bf16.msra.mxu0 %v442
      %463 = vmatprep.subr.bf16.mxu0 0
      %464 = vmatpush1.bf16.msra.mxu0 %v443
      %465 = vmatprep.subr.bf16.mxu0 0
      %466 = vmatpush1.bf16.msra.mxu0 %v444
      %467 = vmatprep.subr.bf16.mxu0 0
      %468 = vmatpush1.bf16.msra.mxu0 %v445
      %469 = vmatprep.subr.bf16.mxu0 0
      %470 = vmatpush1.bf16.msra.mxu0 %v446
      %471 = vmatprep.subr.bf16.mxu0 0
      %472 = vmatpush1.bf16.msra.mxu0 0
      %473 = vmatprep.subr.bf16.mxu0 0
      %474 = vmatpush1.bf16.msra.mxu0 0
      %475 = vmatprep.subr.bf16.mxu0 0
      %476 = vmatpush1.bf16.msra.mxu0 0
      %477 = vmatprep.subr.bf16.mxu0 0
      %478 = vmatpush1.bf16.msra.mxu0 0
      %479 = vmatprep.subr.bf16.mxu0 0
      %480 = vmatpush1.bf16.msra.mxu0 0
      %481 = vmatprep.subr.bf16.mxu0 0
      %482 = vmatpush1.bf16.msra.mxu0 0
      %483 = vmatprep.subr.bf16.mxu0 0
      %484 = vmatpush1.bf16.msra.mxu0 0
      %485 = vmatprep.subr.bf16.mxu0 0
      %486 = vmatpush1.bf16.msra.mxu0 0
      %487 = vmatprep.mubr.bf16.mxu0 0
      %488 = vmatmul.mubr.bf16.gmra.mrb[0].mxu0 %v389
      %v489 = vpop.f32.mrb[0].mxu0
      %v490 = vadd.f32 0.0, %v489
      %v491 = vpop.f32.mrb[0].mxu0
      %v492 = vpop.f32.mrb[0].mxu0
      %v493 = vpop.f32.mrb[0].mxu0
      %494 = vdwg.mxu0
      %v511 = vunpack.c.l.b16 %v328
      %v512 = vunpack.c.l.b16 %v329
      %v513 = vunpack.c.l.b16 %v330
      %v514 = vunpack.c.l.b16 %v331
      %v515 = vunpack.c.l.b16 %v332
      %v516 = vunpack.c.l.b16 %v333
      %v517 = vunpack.c.l.b16 %v334
      %v518 = vunpack.c.l.b16 %v335
      %v519 = vunpack.c.l.b16 %v336
      %v520 = vunpack.c.l.b16 %v337
      %v521 = vunpack.c.l.b16 %v338
      %v522 = vunpack.c.l.b16 %v339
      %v523 = vunpack.c.l.b16 %v340
      %v524 = vunpack.c.l.b16 %v341
      %v525 = vunpack.c.l.b16 %v342
      %v526 = vunpack.c.l.b16 %v343
      %v527 = vpack.c.b16 %v512, %v511
      %v528 = vpack.c.b16 %v514, %v513
      %v529 = vpack.c.b16 %v516, %v515
      %v530 = vpack.c.b16 %v518, %v517
      %v531 = vpack.c.b16 %v520, %v519
      %v532 = vpack.c.b16 %v522, %v521
      %v533 = vpack.c.b16 %v524, %v523
      %v534 = vpack.c.b16 %v526, %v525
      %543 = vmatprep.subr.bf16.mxu0 0
      %544 = vmatpush1.bf16.msra.mxu0 %v527
      %545 = vmatprep.subr.bf16.mxu0 0
      %546 = vmatpush1.bf16.msra.mxu0 %v528
      %547 = vmatprep.subr.bf16.mxu0 0
      %548 = vmatpush1.bf16.msra.mxu0 %v529
      %549 = vmatprep.subr.bf16.mxu0 0
      %550 = vmatpush1.bf16.msra.mxu0 %v530
      %551 = vmatprep.subr.bf16.mxu0 0
      %552 = vmatpush1.bf16.msra.mxu0 %v531
      %553 = vmatprep.subr.bf16.mxu0 0
      %554 = vmatpush1.bf16.msra.mxu0 %v532
      %555 = vmatprep.subr.bf16.mxu0 0
      %556 = vmatpush1.bf16.msra.mxu0 %v533
      %557 = vmatprep.subr.bf16.mxu0 0
      %558 = vmatpush1.bf16.msra.mxu0 %v534
      %559 = vmatprep.subr.bf16.mxu0 0
      %560 = vmatpush1.bf16.msra.mxu0 0
      %561 = vmatprep.subr.bf16.mxu0 0
      %562 = vmatpush1.bf16.msra.mxu0 0
      %563 = vmatprep.subr.bf16.mxu0 0
      %564 = vmatpush1.bf16.msra.mxu0 0
      %565 = vmatprep.subr.bf16.mxu0 0
      %566 = vmatpush1.bf16.msra.mxu0 0
      %567 = vmatprep.subr.bf16.mxu0 0
      %568 = vmatpush1.bf16.msra.mxu0 0
      %569 = vmatprep.subr.bf16.mxu0 0
      %570 = vmatpush1.bf16.msra.mxu0 0
      %571 = vmatprep.subr.bf16.mxu0 0
      %572 = vmatpush1.bf16.msra.mxu0 0
      %573 = vmatprep.subr.bf16.mxu0 0
      %574 = vmatpush1.bf16.msra.mxu0 0
      %575 = vmatprep.mubr.bf16.mxu0 0
      %576 = vmatmul.mubr.bf16.gmra.mrb[0].mxu0 %v327
      %v577 = vpop.f32.mrb[0].mxu0
      %v578 = vadd.f32 %v490, %v577
      %v579 = vpop.f32.mrb[0].mxu0
      %v580 = vpop.f32.mrb[0].mxu0
      %v581 = vpop.f32.mrb[0].mxu0
      %582 = vdwg.mxu0
      %s583 = scalar_lea.vmem %s1, 2
      %v584 = vld [vmem:[%s583] sm:$0x1]
      %v586 = vsel %vm279, %v584, 0
      %588 = vmatprep.subr.bf16.mxu0 0
      %589 = vmatpush1.bf16.msra.mxu0 %v285
      %590 = vmatprep.subr.bf16.mxu0 0
      %591 = vmatpush1.bf16.msra.mxu0 0
      %592 = vmatprep.subr.bf16.mxu0 0
      %593 = vmatpush1.bf16.msra.mxu0 0
      %594 = vmatprep.subr.bf16.mxu0 0
      %595 = vmatpush1.bf16.msra.mxu0 0
      %596 = vmatprep.subr.bf16.mxu0 0
      %597 = vmatpush1.bf16.msra.mxu0 0
      %598 = vmatprep.subr.bf16.mxu0 0
      %599 = vmatpush1.bf16.msra.mxu0 0
      %600 = vmatprep.subr.bf16.mxu0 0
      %601 = vmatpush1.bf16.msra.mxu0 0
      %602 = vmatprep.subr.bf16.mxu0 0
      %603 = vmatpush1.bf16.msra.mxu0 0
      %604 = vmatprep.subr.bf16.mxu0 0
      %605 = vmatpush1.bf16.msra.mxu0 0
      %606 = vmatprep.subr.bf16.mxu0 0
      %607 = vmatpush1.bf16.msra.mxu0 0
      %608 = vmatprep.subr.bf16.mxu0 0
      %609 = vmatpush1.bf16.msra.mxu0 0
      %610 = vmatprep.subr.bf16.mxu0 0
      %611 = vmatpush1.bf16.msra.mxu0 0
      %612 = vmatprep.subr.bf16.mxu0 0
      %613 = vmatpush1.bf16.msra.mxu0 0
      %614 = vmatprep.subr.bf16.mxu0 0
      %615 = vmatpush1.bf16.msra.mxu0 0
      %616 = vmatprep.subr.bf16.mxu0 0
      %617 = vmatpush1.bf16.msra.mxu0 0
      %618 = vmatprep.subr.bf16.mxu0 0
      %619 = vmatpush1.bf16.msra.mxu0 0
      %620 = vmatprep.mubr.bf16.mxu0 0
      %621 = vmatmul.mubr.bf16.gmra.mrb[0].mxu0 %v586
      %v622 = vpop.f32.mrb[0].mxu0
      %v623 = vadd.f32 0.0, %v622
      %v624 = vpop.f32.mrb[0].mxu0
      %v625 = vpop.f32.mrb[0].mxu0
      %v626 = vpop.f32.mrb[0].mxu0
      %627 = vdwg.mxu0
      %v628 = vpack.c.bf16 %v623, %v623
      %s629 = scalar_lea.vmem %s2, 128
      %v630 = vld [vmem:[%s629] sm:$0xf]
      %v631 = vld [vmem:[%s629 + $0x4] sm:$0xf]
      %v632 = vld [vmem:[%s629 + $0x8] sm:$0xf]
      %v633 = vld [vmem:[%s629 + $0xc] sm:$0xf]
      %v634 = vld [vmem:[%s629 + $0x10] sm:$0xf]
      %v635 = vld [vmem:[%s629 + $0x14] sm:$0xf]
      %v636 = vld [vmem:[%s629 + $0x18] sm:$0xf]
      %v637 = vld [vmem:[%s629 + $0x1c] sm:$0xf]
      %v638 = vld [vmem:[%s629 + $0x20] sm:$0xf]
      %v639 = vld [vmem:[%s629 + $0x24] sm:$0xf]
      %v640 = vld [vmem:[%s629 + $0x28] sm:$0xf]
      %v641 = vld [vmem:[%s629 + $0x2c] sm:$0xf]
      %v642 = vld [vmem:[%s629 + $0x30] sm:$0xf]
      %v643 = vld [vmem:[%s629 + $0x34] sm:$0xf]
      %v644 = vld [vmem:[%s629 + $0x38] sm:$0xf]
      %v645 = vld [vmem:[%s629 + $0x3c] sm:$0xf]
      %v662 = vunpack.c.l.b16 %v630
      %v663 = vunpack.c.l.b16 %v631
      %v664 = vunpack.c.l.b16 %v632
      %v665 = vunpack.c.l.b16 %v633
      %v666 = vunpack.c.l.b16 %v634
      %v667 = vunpack.c.l.b16 %v635
      %v668 = vunpack.c.l.b16 %v636
      %v669 = vunpack.c.l.b16 %v637
      %v670 = vunpack.c.l.b16 %v638
      %v671 = vunpack.c.l.b16 %v639
      %v672 = vunpack.c.l.b16 %v640
      %v673 = vunpack.c.l.b16 %v641
      %v674 = vunpack.c.l.b16 %v642
      %v675 = vunpack.c.l.b16 %v643
      %v676 = vunpack.c.l.b16 %v644
      %v677 = vunpack.c.l.b16 %v645
      %v678 = vpack.c.b16 %v663, %v662
      %v679 = vpack.c.b16 %v665, %v664
      %v680 = vpack.c.b16 %v667, %v666
      %v681 = vpack.c.b16 %v669, %v668
      %v682 = vpack.c.b16 %v671, %v670
      %v683 = vpack.c.b16 %v673, %v672
      %v684 = vpack.c.b16 %v675, %v674
      %v685 = vpack.c.b16 %v677, %v676
      %694 = vmatprep.subr.bf16.mxu0 0
      %695 = vmatpush1.bf16.msra.mxu0 %v678
      %696 = vmatprep.subr.bf16.mxu0 0
      %697 = vmatpush1.bf16.msra.mxu0 %v679
      %698 = vmatprep.subr.bf16.mxu0 0
      %699 = vmatpush1.bf16.msra.mxu0 %v680
      %700 = vmatprep.subr.bf16.mxu0 0
      %701 = vmatpush1.bf16.msra.mxu0 %v681
      %702 = vmatprep.subr.bf16.mxu0 0
      %703 = vmatpush1.bf16.msra.mxu0 %v682
      %704 = vmatprep.subr.bf16.mxu0 0
      %705 = vmatpush1.bf16.msra.mxu0 %v683
      %706 = vmatprep.subr.bf16.mxu0 0
      %707 = vmatpush1.bf16.msra.mxu0 %v684
      %708 = vmatprep.subr.bf16.mxu0 0
      %709 = vmatpush1.bf16.msra.mxu0 %v685
      %710 = vmatprep.subr.bf16.mxu0 0
      %711 = vmatpush1.bf16.msra.mxu0 0
      %712 = vmatprep.subr.bf16.mxu0 0
      %713 = vmatpush1.bf16.msra.mxu0 0
      %714 = vmatprep.subr.bf16.mxu0 0
      %715 = vmatpush1.bf16.msra.mxu0 0
      %716 = vmatprep.subr.bf16.mxu0 0
      %717 = vmatpush1.bf16.msra.mxu0 0
      %718 = vmatprep.subr.bf16.mxu0 0
      %719 = vmatpush1.bf16.msra.mxu0 0
      %720 = vmatprep.subr.bf16.mxu0 0
      %721 = vmatpush1.bf16.msra.mxu0 0
      %722 = vmatprep.subr.bf16.mxu0 0
      %723 = vmatpush1.bf16.msra.mxu0 0
      %724 = vmatprep.subr.bf16.mxu0 0
      %725 = vmatpush1.bf16.msra.mxu0 0
      %726 = vmatprep.mubr.bf16.mxu0 0
      %727 = vmatmul.mubr.bf16.gmra.mrb[0].mxu0 %v628
      %v728 = vpop.f32.mrb[0].mxu0
      %v729 = vadd.f32 0.0, %v728
      %v730 = vpop.f32.mrb[0].mxu0
      %v731 = vpop.f32.mrb[0].mxu0
      %v732 = vpop.f32.mrb[0].mxu0
      %733 = vdwg.mxu0
      %v734 = vadd.f32 %v578, %v729
      %735 = vst [vmem:[%s253] sm:$0x3] %v734
      %v736 = vsel %vm283, %v734, 0.0
      %v737 = vrot.slane %v736, 4
      %v738 = vadd.f32 %v736, %v737
      %v739 = vrot.slane %v738, 2
      %v740 = vadd.f32 %v738, %v739
      %v741 = vrot.slane %v740, 1
      %v742 = vadd.f32 %v740, %v741
      %v743 = vmul.f32 %v734, %v734
      %v744 = vsel %vm283, %v743, 0.0
      %v745 = vrot.slane %v744, 4
      %v746 = vadd.f32 %v744, %v745
      %v747 = vrot.slane %v746, 2
      %v748 = vadd.f32 %v746, %v747
      %v749 = vrot.slane %v748, 1
      %v750 = vadd.f32 %v748, %v749
      %v751 = vlaneseq
      %v752 = vshrl.u32 %v751, 7
      %vm753 = vcmp.eq.s32.totalorder %v752, 0
      %vm754 = vcmp.eq.s32.totalorder %v752, 1
      %v755 = vsel %vm754, %v750, 0.0
      %v756 = vsel %vm753, %v742, %v755
      %757 = vst [vmem:[%s257] sm:$0xff] %v756
      %p758 = scmp.lt.s32.totalorder %s18, 1
      %s759 = scalar_select %p758, %s18, 1
      %s760 = smul.addr %s759, 2
      %s761 = scalar_lea.vmem %s5, %s760
      %p762 = scmp.lt.s32.totalorder %s18, 1
      %s763 = scalar_select %p762, %s18, 1
      %s764 = smul.addr %s763, 8
      %s765 = scalar_lea.vmem %s6, %s764
      // Predicated region
      $region41: #{autoencoder_forward.8} parent=39 // pred_check
        %p766 = pneg %p146
      $region42: #{autoencoder_forward.8} parent=39 // pred_check_branch
        %768 = sbr.rel (%p766) target = $region44
      $region43: #{autoencoder_forward.8} parent=39 // pred_region
        _
      $region44: #{autoencoder_forward.8} parent=39 // pred_fallthru
        _
      // Predicated region
      $region45: #{autoencoder_forward.8} parent=39 // pred_check
        %p769 = pneg %p172
      $region46: #{autoencoder_forward.8} parent=39 // pred_check_branch
        %771 = sbr.rel (%p769) target = $region48
      $region47: #{autoencoder_forward.8} parent=39 // pred_region
        _
      $region48: #{autoencoder_forward.8} parent=39 // pred_fallthru
        _
    $region40: #{autoencoder_forward.8} parent=5 // pred_fallthru
      _
    %p772 = scmp.le.s32.totalorder 2, %s13
    // Predicated region
    $region49: #{autoencoder_forward.8} parent=5 // pred_check
      %p773 = pneg %p772
    $region50: #{autoencoder_forward.8} parent=5 // pred_check_branch
      %775 = sbr.rel (%p773) target = $region52
    $region51: #{autoencoder_forward.8} parent=5 // pred_region
      %s776 = ssub.s32 %s13, 2
      // Predicated region
      $region53: #{autoencoder_forward.8} parent=51 // pred_check
        %p777 = pneg %p152
      $region54: #{autoencoder_forward.8} parent=51 // pred_check_branch
        %779 = sbr.rel (%p777) target = $region56
      $region55: #{autoencoder_forward.8} parent=51 // pred_region
        %p780 = scmp.lt.s32.totalorder %s19, 1
        %s781 = scalar_select %p780, %s19, 1
        %s782 = smul.addr %s781, 2
        %s783 = scalar_lea.vmem %s5, %s782
      $region56: #{autoencoder_forward.8} parent=51 // pred_fallthru
        _
      // Predicated region
      $region57: #{autoencoder_forward.8} parent=51 // pred_check
        %p784 = pneg %p178
      $region58: #{autoencoder_forward.8} parent=51 // pred_check_branch
        %786 = sbr.rel (%p784) target = $region60
      $region59: #{autoencoder_forward.8} parent=51 // pred_region
        %p787 = scmp.lt.s32.totalorder %s19, 1
        %s788 = scalar_select %p787, %s19, 1
        %s789 = smul.addr %s788, 8
        %s790 = scalar_lea.vmem %s6, %s789
      $region60: #{autoencoder_forward.8} parent=51 // pred_fallthru
        _
    $region52: #{autoencoder_forward.8} parent=5 // pred_fallthru
      _
  $region6: #{autoencoder_forward.8} parent=0 // loop_footer
    %s17 = sadd.s32 1, %s13
  $region7: #{autoencoder_forward.8} parent=0 // loop_footer_branch
    %12 = sbr.rel target = $region3
  $region8: #{autoencoder_forward.8} parent=0 // loop_exit
    _

// kernel: autoencoder_forward.9
$region0: #{autoencoder_forward.9}
  #allocation0 [shape = 'u32[]', space=smem, size = 0x4, offset = 0x4, fixed_abs, tag = 'smem constant byte address 0x4 - core index']
  #allocation1 [shape = 'u32[144,128]{1,0:T(1,128)}', space=vmem, size = 0x12000, scoped, tag = 'internal scratch']
  %s0 = inlined_call_operand.vmem [shape: f32[2,2,128], index: 0, kind: input, shape index: {}]
  %s1 = inlined_call_operand.vmem [shape: bf16[3,4,2], index: 1, kind: input, shape index: {}]
  %s2 = inlined_call_operand.vmem [shape: bf16[3,128,128], index: 2, kind: input, shape index: {}]
  %s3 = inlined_call_operand.vmem [shape: f32[1,128], index: 3, kind: input, shape index: {}]
  %s4 = inlined_call_operand.vmem [shape: f32[1,128], index: 4, kind: input, shape index: {}]
  %s5 = inlined_call_operand.vmem [shape: f32[2,4,128], index: 5, kind: output, shape index: {0}]
  %s6 = inlined_call_operand.vmem [shape: f32[2,8,128], index: 6, kind: output, shape index: {1}]
  %7 = xla_tuple %s5, %s6
  %s8 = sld [smem:[#allocation0]]
  $region61: #{autoencoder_forward.9} parent=0
    _
  %s10 = ssub.s32 1, %s8
  %s11 = scalar_select 0, %s10, %s8
  loop: start=0, step=1, limit=4
  $region2: #{autoencoder_forward.9} parent=0 // loop_pre_header
    _
  $region3: #{autoencoder_forward.9} parent=0 // loop_header
    %s13 = sphi 0, %s17
    %p14 = scmp.ge.s32.totalorder %s13, 4
    %s23 = sphi 0, %s25
    %s26 = sphi 0, %s23
    %s27 = sphi 0, %s26
    %s43 = sphi 0, %s27
    %s47 = sphi 0, %s47
    %s49 = sphi 0, %s47
    %s50 = sphi 0, %s49
    %s64 = sphi 0, %s50
    %s68 = sphi 0, %s68
    %s70 = sphi 0, %s68
    %s71 = sphi 0, %s70
    %s85 = sphi 0, %s71
    %s89 = sphi 0, %s89
    %s91 = sphi 0, %s89
    %s92 = sphi 0, %s91
    %s106 = sphi 0, %s92
    %s110 = sphi 0, %s110
    %s112 = sphi 0, %s110
    %s113 = sphi 0, %s112
    %s127 = sphi 0, %s113
    %s133 = sphi 0, %s135
    %s136 = sphi 0, %s133
    %s137 = sphi 0, %s136
    %s153 = sphi 0, %s137
    %s159 = sphi 0, %s161
    %s162 = sphi 0, %s159
    %s163 = sphi 0, %s162
    %s179 = sphi 0, %s163
  $region4: #{autoencoder_forward.9} parent=0 // loop_header_branch
    %16 = sbr.rel (%p14) target = $region8
  $region5: #{autoencoder_forward.9} parent=0 // loop_body
    %s18 = ssub.s32 %s13, 1
    %s19 = ssub.s32 %s13, 2
    %s20 = sadd.s32 %s13, 1
    %s21 = ssub.s32 %s13, %s20
    %p22 = scmp.eq.s32.totalorder %s21, 0
    %s24 = sadd.s32 %s23, 1
    %s25 = scalar_select %p22, %s23, %s24
    %p28 = pneg %p22
    %p29 = scmp.eq.s32.totalorder %s13, 1
    %p30 = por %p28, %p29
    %p31 = scmp.ne.s32.totalorder %s23, %s26
    %p32 = scmp.eq.s32.totalorder %s13, 0
    %p33 = por %p31, %p32
    %p34 = scmp.ne.s32.totalorder %s23, %s26
    %p35 = scmp.eq.s32.totalorder %s18, 1
    %p36 = por %p34, %p35
    %p37 = scmp.ne.s32.totalorder %s26, %s27
    %p38 = scmp.eq.s32.totalorder %s18, 0
    %p39 = por %p37, %p38
    %p40 = scmp.ne.s32.totalorder %s26, %s27
    %p41 = scmp.eq.s32.totalorder %s19, 1
    %p42 = por %p40, %p41
    %p44 = scmp.ne.s32.totalorder %s27, %s43
    %p45 = scmp.eq.s32.totalorder %s19, 0
    %p46 = por %p44, %p45
    %s48 = sadd.s32 %s47, 1
    %p51 = scmp.eq.s32.totalorder %s13, 1
    %p52 = scmp.ne.s32.totalorder %s47, %s49
    %p53 = scmp.eq.s32.totalorder %s13, 0
    %p54 = por %p52, %p53
    %p55 = scmp.ne.s32.totalorder %s47, %s49
    %p56 = scmp.eq.s32.totalorder %s18, 1
    %p57 = por %p55, %p56
    %p58 = scmp.ne.s32.totalorder %s49, %s50
    %p59 = scmp.eq.s32.totalorder %s18, 0
    %p60 = por %p58, %p59
    %p61 = scmp.ne.s32.totalorder %s49, %s50
    %p62 = scmp.eq.s32.totalorder %s19, 1
    %p63 = por %p61, %p62
    %p65 = scmp.ne.s32.totalorder %s50, %s64
    %p66 = scmp.eq.s32.totalorder %s19, 0
    %p67 = por %p65, %p66
    %s69 = sadd.s32 %s68, 1
    %p72 = scmp.eq.s32.totalorder %s13, 1
    %p73 = scmp.ne.s32.totalorder %s68, %s70
    %p74 = scmp.eq.s32.totalorder %s13, 0
    %p75 = por %p73, %p74
    %p76 = scmp.ne.s32.totalorder %s68, %s70
    %p77 = scmp.eq.s32.totalorder %s18, 1
    %p78 = por %p76, %p77
    %p79 = scmp.ne.s32.totalorder %s70, %s71
    %p80 = scmp.eq.s32.totalorder %s18, 0
    %p81 = por %p79, %p80
    %p82 = scmp.ne.s32.totalorder %s70, %s71
    %p83 = scmp.eq.s32.totalorder %s19, 1
    %p84 = por %p82, %p83
    %p86 = scmp.ne.s32.totalorder %s71, %s85
    %p87 = scmp.eq.s32.totalorder %s19, 0
    %p88 = por %p86, %p87
    %s90 = sadd.s32 %s89, 1
    %p93 = scmp.eq.s32.totalorder %s13, 1
    %p94 = scmp.ne.s32.totalorder %s89, %s91
    %p95 = scmp.eq.s32.totalorder %s13, 0
    %p96 = por %p94, %p95
    %p97 = scmp.ne.s32.totalorder %s89, %s91
    %p98 = scmp.eq.s32.totalorder %s18, 1
    %p99 = por %p97, %p98
    %p100 = scmp.ne.s32.totalorder %s91, %s92
    %p101 = scmp.eq.s32.totalorder %s18, 0
    %p102 = por %p100, %p101
    %p103 = scmp.ne.s32.totalorder %s91, %s92
    %p104 = scmp.eq.s32.totalorder %s19, 1
    %p105 = por %p103, %p104
    %p107 = scmp.ne.s32.totalorder %s92, %s106
    %p108 = scmp.eq.s32.totalorder %s19, 0
    %p109 = por %p107, %p108
    %s111 = sadd.s32 %s110, 1
    %p114 = scmp.eq.s32.totalorder %s13, 1
    %p115 = scmp.ne.s32.totalorder %s110, %s112
    %p116 = scmp.eq.s32.totalorder %s13, 0
    %p117 = por %p115, %p116
    %p118 = scmp.ne.s32.totalorder %s110, %s112
    %p119 = scmp.eq.s32.totalorder %s18, 1
    %p120 = por %p118, %p119
    %p121 = scmp.ne.s32.totalorder %s112, %s113
    %p122 = scmp.eq.s32.totalorder %s18, 0
    %p123 = por %p121, %p122
    %p124 = scmp.ne.s32.totalorder %s112, %s113
    %p125 = scmp.eq.s32.totalorder %s19, 1
    %p126 = por %p124, %p125
    %p128 = scmp.ne.s32.totalorder %s113, %s127
    %p129 = scmp.eq.s32.totalorder %s19, 0
    %p130 = por %p128, %p129
    %s131 = ssub.s32 %s13, %s20
    %p132 = scmp.eq.s32.totalorder %s131, 0
    %s134 = sadd.s32 %s133, 1
    %s135 = scalar_select %p132, %s133, %s134
    %p138 = pneg %p132
    %p139 = scmp.eq.s32.totalorder %s13, 1
    %p140 = por %p138, %p139
    %p141 = scmp.ne.s32.totalorder %s133, %s136
    %p142 = scmp.eq.s32.totalorder %s13, 0
    %p143 = por %p141, %p142
    %p144 = scmp.ne.s32.totalorder %s133, %s136
    %p145 = scmp.eq.s32.totalorder %s18, 1
    %p146 = por %p144, %p145
    %p147 = scmp.ne.s32.totalorder %s136, %s137
    %p148 = scmp.eq.s32.totalorder %s18, 0
    %p149 = por %p147, %p148
    %p150 = scmp.ne.s32.totalorder %s136, %s137
    %p151 = scmp.eq.s32.totalorder %s19, 1
    %p152 = por %p150, %p151
    %p154 = scmp.ne.s32.totalorder %s137, %s153
    %p155 = scmp.eq.s32.totalorder %s19, 0
    %p156 = por %p154, %p155
    %s157 = ssub.s32 %s13, %s20
    %p158 = scmp.eq.s32.totalorder %s157, 0
    %s160 = sadd.s32 %s159, 1
    %s161 = scalar_select %p158, %s159, %s160
    %p164 = pneg %p158
    %p165 = scmp.eq.s32.totalorder %s13, 1
    %p166 = por %p164, %p165
    %p167 = scmp.ne.s32.totalorder %s159, %s162
    %p168 = scmp.eq.s32.totalorder %s13, 0
    %p169 = por %p167, %p168
    %p170 = scmp.ne.s32.totalorder %s159, %s162
    %p171 = scmp.eq.s32.totalorder %s18, 1
    %p172 = por %p170, %p171
    %p173 = scmp.ne.s32.totalorder %s162, %s163
    %p174 = scmp.eq.s32.totalorder %s18, 0
    %p175 = por %p173, %p174
    %p176 = scmp.ne.s32.totalorder %s162, %s163
    %p177 = scmp.eq.s32.totalorder %s19, 1
    %p178 = por %p176, %p177
    %p180 = scmp.ne.s32.totalorder %s163, %s179
    %p181 = scmp.eq.s32.totalorder %s19, 0
    %p182 = por %p180, %p181
    %p183 = scmp.le.s32.totalorder 1, %s13
    %p184 = scmp.lt.s32.totalorder %s13, 3
    %p185 = pnand %p183, %p184
    %p186 = pneg %p185
    // Predicated region
    $region9: #{autoencoder_forward.9} parent=5 // pred_check
      _
    $region10: #{autoencoder_forward.9} parent=5 // pred_check_branch
      %188 = sbr.rel (%p185) target = $region12
    $region11: #{autoencoder_forward.9} parent=5 // pred_region
      %s189 = ssub.s32 %s13, 1
      // Predicated region
      $region13: #{autoencoder_forward.9} parent=11 // pred_check
        %p190 = pneg %p60
      $region14: #{autoencoder_forward.9} parent=11 // pred_check_branch
        %192 = sbr.rel (%p190) target = $region16
      $region15: #{autoencoder_forward.9} parent=11 // pred_region
        _
      $region16: #{autoencoder_forward.9} parent=11 // pred_fallthru
        _
      // Predicated region
      $region17: #{autoencoder_forward.9} parent=11 // pred_check
        %p193 = pneg %p81
      $region18: #{autoencoder_forward.9} parent=11 // pred_check_branch
        %195 = sbr.rel (%p193) target = $region20
      $region19: #{autoencoder_forward.9} parent=11 // pred_region
        _
      $region20: #{autoencoder_forward.9} parent=11 // pred_fallthru
        _
      // Predicated region
      $region21: #{autoencoder_forward.9} parent=11 // pred_check
        %p196 = pneg %p102
      $region22: #{autoencoder_forward.9} parent=11 // pred_check_branch
        %198 = sbr.rel (%p196) target = $region24
      $region23: #{autoencoder_forward.9} parent=11 // pred_region
        _
      $region24: #{autoencoder_forward.9} parent=11 // pred_fallthru
        _
      // Predicated region
      $region25: #{autoencoder_forward.9} parent=11 // pred_check
        %p199 = pneg %p123
      $region26: #{autoencoder_forward.9} parent=11 // pred_check_branch
        %201 = sbr.rel (%p199) target = $region28
      $region27: #{autoencoder_forward.9} parent=11 // pred_region
        _
      $region28: #{autoencoder_forward.9} parent=11 // pred_fallthru
        _
    $region12: #{autoencoder_forward.9} parent=5 // pred_fallthru
      _
    %p202 = scmp.lt.s32.totalorder %s13, 2
    // Predicated region
    $region29: #{autoencoder_forward.9} parent=5 // pred_check
      %p203 = pneg %p202
    $region30: #{autoencoder_forward.9} parent=5 // pred_check_branch
      %205 = sbr.rel (%p203) target = $region32
    $region31: #{autoencoder_forward.9} parent=5 // pred_region
      // Predicated region
      $region33: #{autoencoder_forward.9} parent=31 // pred_check
        %p206 = pneg %p33
      $region34: #{autoencoder_forward.9} parent=31 // pred_check_branch
        %208 = sbr.rel (%p206) target = $region36
      $region35: #{autoencoder_forward.9} parent=31 // pred_region
        %p209 = scmp.lt.s32.totalorder %s13, 1
        %s210 = scalar_select %p209, %s13, 1
        %s211 = smul.addr %s210, 2
        %s212 = scalar_lea.vmem %s0, %s211
      $region36: #{autoencoder_forward.9} parent=31 // pred_fallthru
        _
    $region32: #{autoencoder_forward.9} parent=5 // pred_fallthru
      _
    %p213 = scmp.le.s32.totalorder 1, %s13
    %p214 = scmp.lt.s32.totalorder %s13, 3
    %p215 = pnand %p213, %p214
    %p216 = pneg %p215
    // Predicated region
    $region37: #{autoencoder_forward.9} parent=5 // pred_check
      _
    $region38: #{autoencoder_forward.9} parent=5 // pred_check_branch
      %218 = sbr.rel (%p215) target = $region40
    $region39: #{autoencoder_forward.9} parent=5 // pred_region
      %s219 = ssub.s32 %s13, 1
      %p220 = scmp.lt.s32.totalorder %s18, 1
      %s221 = scalar_select %p220, %s18, 1
      %s222 = smul.addr %s221, 2
      %s223 = scalar_lea.vmem %s0, %s222
      %p224 = pneg %p39
      %p225 = pneg %p36
      %p226 = pneg %p60
      %p227 = pneg %p57
      %p228 = pneg %p81
      %p229 = pneg %p78
      %p230 = pneg %p102
      %p231 = pneg %p99
      %p232 = pneg %p123
      %p233 = pneg %p120
      %p234 = pneg %p149
      %p235 = pneg %p146
      %p236 = scmp.lt.s32.totalorder %s18, 1
      %s237 = scalar_select %p236, %s18, 1
      %s238 = smul.addr %s237, 4
      %s239 = scalar_lea.vmem %s5, %s238
      %p240 = pneg %p175
      %p241 = pneg %p172
      %p242 = scmp.lt.s32.totalorder %s18, 1
      %s243 = scalar_select %p242, %s18, 1
      %s244 = smul.addr %s243, 8
      %s245 = scalar_lea.vmem %s6, %s244
      %p246 = scmp.lt.s32.totalorder %s18, 1
      %s247 = scalar_select %p246, %s18, 1
      %s248 = smul.addr %s247, 2
      %s249 = scalar_lea.vmem %s0, %s248
      %p250 = scmp.lt.s32.totalorder %s18, 1
      %s251 = scalar_select %p250, %s18, 1
      %s252 = smul.addr %s251, 4
      %s253 = scalar_lea.vmem %s5, %s252
      %p254 = scmp.lt.s32.totalorder %s18, 1
      %s255 = scalar_select %p254, %s18, 1
      %s256 = smul.addr %s255, 8
      %s257 = scalar_lea.vmem %s6, %s256
      %v259 = vld [vmem:[%s249] sm:$0x3]
      %v260 = vld [vmem:[%s3] sm:$0x1]
      %v262 = vlaneseq
      %v263 = vshrl.u32 %v262, 7
      %v264 = vsub.s32 0, %v263
      %v265 = vrot.slane %v260, %v264
      %v267 = vmul.f32 %v259, %v265
      %v268 = vld [vmem:[%s4] sm:$0x1]
      %v270 = vlaneseq
      %v271 = vshrl.u32 %v270, 7
      %v272 = vsub.s32 0, %v271
      %v273 = vrot.slane %v268, %v272
      %v275 = vadd.f32 %v267, %v273
      %v276 = vmax.f32 %v275, 0.0
      %v277 = vpack.c.bf16 %v276, %v276
      %v278 = vld [vmem:[%s2] sm:$0xf]
      %v279 = vld [vmem:[%s2 + $0x4] sm:$0xf]
      %v280 = vld [vmem:[%s2 + $0x8] sm:$0xf]
      %v281 = vld [vmem:[%s2 + $0xc] sm:$0xf]
      %v282 = vld [vmem:[%s2 + $0x10] sm:$0xf]
      %v283 = vld [vmem:[%s2 + $0x14] sm:$0xf]
      %v284 = vld [vmem:[%s2 + $0x18] sm:$0xf]
      %v285 = vld [vmem:[%s2 + $0x1c] sm:$0xf]
      %v286 = vld [vmem:[%s2 + $0x20] sm:$0xf]
      %v287 = vld [vmem:[%s2 + $0x24] sm:$0xf]
      %v288 = vld [vmem:[%s2 + $0x28] sm:$0xf]
      %v289 = vld [vmem:[%s2 + $0x2c] sm:$0xf]
      %v290 = vld [vmem:[%s2 + $0x30] sm:$0xf]
      %v291 = vld [vmem:[%s2 + $0x34] sm:$0xf]
      %v292 = vld [vmem:[%s2 + $0x38] sm:$0xf]
      %v293 = vld [vmem:[%s2 + $0x3c] sm:$0xf]
      %v310 = vunpack.c.l.b16 %v278
      %v311 = vunpack.c.l.b16 %v279
      %v312 = vunpack.c.l.b16 %v280
      %v313 = vunpack.c.l.b16 %v281
      %v314 = vunpack.c.l.b16 %v282
      %v315 = vunpack.c.l.b16 %v283
      %v316 = vunpack.c.l.b16 %v284
      %v317 = vunpack.c.l.b16 %v285
      %v318 = vunpack.c.l.b16 %v286
      %v319 = vunpack.c.l.b16 %v287
      %v320 = vunpack.c.l.b16 %v288
      %v321 = vunpack.c.l.b16 %v289
      %v322 = vunpack.c.l.b16 %v290
      %v323 = vunpack.c.l.b16 %v291
      %v324 = vunpack.c.l.b16 %v292
      %v325 = vunpack.c.l.b16 %v293
      %v326 = vpack.c.b16 %v311, %v310
      %v327 = vpack.c.b16 %v313, %v312
      %v328 = vpack.c.b16 %v315, %v314
      %v329 = vpack.c.b16 %v317, %v316
      %v330 = vpack.c.b16 %v319, %v318
      %v331 = vpack.c.b16 %v321, %v320
      %v332 = vpack.c.b16 %v323, %v322
      %v333 = vpack.c.b16 %v325, %v324
      %342 = vmatprep.subr.bf16.mxu0 0
      %343 = vmatpush1.bf16.msra.mxu0 %v326
      %344 = vmatprep.subr.bf16.mxu0 0
      %345 = vmatpush1.bf16.msra.mxu0 %v327
      %346 = vmatprep.subr.bf16.mxu0 0
      %347 = vmatpush1.bf16.msra.mxu0 %v328
      %348 = vmatprep.subr.bf16.mxu0 0
      %349 = vmatpush1.bf16.msra.mxu0 %v329
      %350 = vmatprep.subr.bf16.mxu0 0
      %351 = vmatpush1.bf16.msra.mxu0 %v330
      %352 = vmatprep.subr.bf16.mxu0 0
      %353 = vmatpush1.bf16.msra.mxu0 %v331
      %354 = vmatprep.subr.bf16.mxu0 0
      %355 = vmatpush1.bf16.msra.mxu0 %v332
      %356 = vmatprep.subr.bf16.mxu0 0
      %357 = vmatpush1.bf16.msra.mxu0 %v333
      %358 = vmatprep.subr.bf16.mxu0 0
      %359 = vmatpush1.bf16.msra.mxu0 0
      %360 = vmatprep.subr.bf16.mxu0 0
      %361 = vmatpush1.bf16.msra.mxu0 0
      %362 = vmatprep.subr.bf16.mxu0 0
      %363 = vmatpush1.bf16.msra.mxu0 0
      %364 = vmatprep.subr.bf16.mxu0 0
      %365 = vmatpush1.bf16.msra.mxu0 0
      %366 = vmatprep.subr.bf16.mxu0 0
      %367 = vmatpush1.bf16.msra.mxu0 0
      %368 = vmatprep.subr.bf16.mxu0 0
      %369 = vmatpush1.bf16.msra.mxu0 0
      %370 = vmatprep.subr.bf16.mxu0 0
      %371 = vmatpush1.bf16.msra.mxu0 0
      %372 = vmatprep.subr.bf16.mxu0 0
      %373 = vmatpush1.bf16.msra.mxu0 0
      %374 = vmatprep.mubr.bf16.mxu0 0
      %375 = vmatmul.mubr.bf16.gmra.mrb[0].mxu0 %v277
      %v376 = vpop.f32.mrb[0].mxu0
      %v377 = vadd.f32 0.0, %v376
      %v378 = vpop.f32.mrb[0].mxu0
      %v379 = vpop.f32.mrb[0].mxu0
      %v380 = vpop.f32.mrb[0].mxu0
      %381 = vdwg.mxu0
      %v382 = vld [vmem:[%s1] sm:$0x3]
      %v383 = vpack.c.bf16 %v377, %v377
      %s384 = scalar_lea.vmem %s2, 64
      %v385 = vld [vmem:[%s384] sm:$0xf]
      %v386 = vld [vmem:[%s384 + $0x4] sm:$0xf]
      %v387 = vld [vmem:[%s384 + $0x8] sm:$0xf]
      %v388 = vld [vmem:[%s384 + $0xc] sm:$0xf]
      %v389 = vld [vmem:[%s384 + $0x10] sm:$0xf]
      %v390 = vld [vmem:[%s384 + $0x14] sm:$0xf]
      %v391 = vld [vmem:[%s384 + $0x18] sm:$0xf]
      %v392 = vld [vmem:[%s384 + $0x1c] sm:$0xf]
      %v393 = vld [vmem:[%s384 + $0x20] sm:$0xf]
      %v394 = vld [vmem:[%s384 + $0x24] sm:$0xf]
      %v395 = vld [vmem:[%s384 + $0x28] sm:$0xf]
      %v396 = vld [vmem:[%s384 + $0x2c] sm:$0xf]
      %v397 = vld [vmem:[%s384 + $0x30] sm:$0xf]
      %v398 = vld [vmem:[%s384 + $0x34] sm:$0xf]
      %v399 = vld [vmem:[%s384 + $0x38] sm:$0xf]
      %v400 = vld [vmem:[%s384 + $0x3c] sm:$0xf]
      %v417 = vunpack.c.l.b16 %v385
      %v418 = vunpack.c.l.b16 %v386
      %v419 = vunpack.c.l.b16 %v387
      %v420 = vunpack.c.l.b16 %v388
      %v421 = vunpack.c.l.b16 %v389
      %v422 = vunpack.c.l.b16 %v390
      %v423 = vunpack.c.l.b16 %v391
      %v424 = vunpack.c.l.b16 %v392
      %v425 = vunpack.c.l.b16 %v393
      %v426 = vunpack.c.l.b16 %v394
      %v427 = vunpack.c.l.b16 %v395
      %v428 = vunpack.c.l.b16 %v396
      %v429 = vunpack.c.l.b16 %v397
      %v430 = vunpack.c.l.b16 %v398
      %v431 = vunpack.c.l.b16 %v399
      %v432 = vunpack.c.l.b16 %v400
      %v433 = vpack.c.b16 %v418, %v417
      %v434 = vpack.c.b16 %v420, %v419
      %v435 = vpack.c.b16 %v422, %v421
      %v436 = vpack.c.b16 %v424, %v423
      %v437 = vpack.c.b16 %v426, %v425
      %v438 = vpack.c.b16 %v428, %v427
      %v439 = vpack.c.b16 %v430, %v429
      %v440 = vpack.c.b16 %v432, %v431
      %449 = vmatprep.subr.bf16.mxu0 0
      %450 = vmatpush1.bf16.msra.mxu0 %v433
      %451 = vmatprep.subr.bf16.mxu0 0
      %452 = vmatpush1.bf16.msra.mxu0 %v434
      %453 = vmatprep.subr.bf16.mxu0 0
      %454 = vmatpush1.bf16.msra.mxu0 %v435
      %455 = vmatprep.subr.bf16.mxu0 0
      %456 = vmatpush1.bf16.msra.mxu0 %v436
      %457 = vmatprep.subr.bf16.mxu0 0
      %458 = vmatpush1.bf16.msra.mxu0 %v437
      %459 = vmatprep.subr.bf16.mxu0 0
      %460 = vmatpush1.bf16.msra.mxu0 %v438
      %461 = vmatprep.subr.bf16.mxu0 0
      %462 = vmatpush1.bf16.msra.mxu0 %v439
      %463 = vmatprep.subr.bf16.mxu0 0
      %464 = vmatpush1.bf16.msra.mxu0 %v440
      %465 = vmatprep.subr.bf16.mxu0 0
      %466 = vmatpush1.bf16.msra.mxu0 0
      %467 = vmatprep.subr.bf16.mxu0 0
      %468 = vmatpush1.bf16.msra.mxu0 0
      %469 = vmatprep.subr.bf16.mxu0 0
      %470 = vmatpush1.bf16.msra.mxu0 0
      %471 = vmatprep.subr.bf16.mxu0 0
      %472 = vmatpush1.bf16.msra.mxu0 0
      %473 = vmatprep.subr.bf16.mxu0 0
      %474 = vmatpush1.bf16.msra.mxu0 0
      %475 = vmatprep.subr.bf16.mxu0 0
      %476 = vmatpush1.bf16.msra.mxu0 0
      %477 = vmatprep.subr.bf16.mxu0 0
      %478 = vmatpush1.bf16.msra.mxu0 0
      %479 = vmatprep.subr.bf16.mxu0 0
      %480 = vmatpush1.bf16.msra.mxu0 0
      %481 = vmatprep.mubr.bf16.mxu0 0
      %482 = vmatmul.mubr.bf16.gmra.mrb[0].mxu0 %v277
      %v483 = vpop.f32.mrb[0].mxu0
      %v484 = vadd.f32 0.0, %v483
      %v485 = vpop.f32.mrb[0].mxu0
      %v486 = vpop.f32.mrb[0].mxu0
      %v487 = vpop.f32.mrb[0].mxu0
      %488 = vdwg.mxu0
      %s489 = scalar_lea.vmem %s1, 2
      %v490 = vld [vmem:[%s489] sm:$0x3]
      %v491 = vpack.c.bf16 %v484, %v484
      %vm492 = vcmask 15360
      %v494 = vsel %vm492, %v490, 0
      %vm496 = vcmask 1040384
      %v498 = vsel %vm496, %v491, 0
      %500 = vmatprep.subr.bf16.mxu0 0
      %501 = vmatpush1.bf16.msra.mxu0 %v498
      %502 = vmatprep.subr.bf16.mxu0 0
      %503 = vmatpush1.bf16.msra.mxu0 0
      %504 = vmatprep.subr.bf16.mxu0 0
      %505 = vmatpush1.bf16.msra.mxu0 0
      %506 = vmatprep.subr.bf16.mxu0 0
      %507 = vmatpush1.bf16.msra.mxu0 0
      %508 = vmatprep.subr.bf16.mxu0 0
      %509 = vmatpush1.bf16.msra.mxu0 0
      %510 = vmatprep.subr.bf16.mxu0 0
      %511 = vmatpush1.bf16.msra.mxu0 0
      %512 = vmatprep.subr.bf16.mxu0 0
      %513 = vmatpush1.bf16.msra.mxu0 0
      %514 = vmatprep.subr.bf16.mxu0 0
      %515 = vmatpush1.bf16.msra.mxu0 0
      %516 = vmatprep.subr.bf16.mxu0 0
      %517 = vmatpush1.bf16.msra.mxu0 0
      %518 = vmatprep.subr.bf16.mxu0 0
      %519 = vmatpush1.bf16.msra.mxu0 0
      %520 = vmatprep.subr.bf16.mxu0 0
      %521 = vmatpush1.bf16.msra.mxu0 0
      %522 = vmatprep.subr.bf16.mxu0 0
      %523 = vmatpush1.bf16.msra.mxu0 0
      %524 = vmatprep.subr.bf16.mxu0 0
      %525 = vmatpush1.bf16.msra.mxu0 0
      %526 = vmatprep.subr.bf16.mxu0 0
      %527 = vmatpush1.bf16.msra.mxu0 0
      %528 = vmatprep.subr.bf16.mxu0 0
      %529 = vmatpush1.bf16.msra.mxu0 0
      %530 = vmatprep.subr.bf16.mxu0 0
      %531 = vmatpush1.bf16.msra.mxu0 0
      %532 = vmatprep.mubr.bf16.mxu0 0
      %533 = vmatmul.mubr.bf16.gmra.mrb[0].mxu0 %v494
      %v534 = vpop.f32.mrb[0].mxu0
      %v535 = vadd.f32 0.0, %v534
      %v536 = vpop.f32.mrb[0].mxu0
      %v537 = vpop.f32.mrb[0].mxu0
      %v538 = vpop.f32.mrb[0].mxu0
      %539 = vdwg.mxu0
      %v541 = vsel %vm492, %v382, 0
      %v544 = vsel %vm496, %v383, 0
      %546 = vmatprep.subr.bf16.mxu0 0
      %547 = vmatpush1.bf16.msra.mxu0 %v544
      %548 = vmatprep.subr.bf16.mxu0 0
      %549 = vmatpush1.bf16.msra.mxu0 0
      %550 = vmatprep.subr.bf16.mxu0 0
      %551 = vmatpush1.bf16.msra.mxu0 0
      %552 = vmatprep.subr.bf16.mxu0 0
      %553 = vmatpush1.bf16.msra.mxu0 0
      %554 = vmatprep.subr.bf16.mxu0 0
      %555 = vmatpush1.bf16.msra.mxu0 0
      %556 = vmatprep.subr.bf16.mxu0 0
      %557 = vmatpush1.bf16.msra.mxu0 0
      %558 = vmatprep.subr.bf16.mxu0 0
      %559 = vmatpush1.bf16.msra.mxu0 0
      %560 = vmatprep.subr.bf16.mxu0 0
      %561 = vmatpush1.bf16.msra.mxu0 0
      %562 = vmatprep.subr.bf16.mxu0 0
      %563 = vmatpush1.bf16.msra.mxu0 0
      %564 = vmatprep.subr.bf16.mxu0 0
      %565 = vmatpush1.bf16.msra.mxu0 0
      %566 = vmatprep.subr.bf16.mxu0 0
      %567 = vmatpush1.bf16.msra.mxu0 0
      %568 = vmatprep.subr.bf16.mxu0 0
      %569 = vmatpush1.bf16.msra.mxu0 0
      %570 = vmatprep.subr.bf16.mxu0 0
      %571 = vmatpush1.bf16.msra.mxu0 0
      %572 = vmatprep.subr.bf16.mxu0 0
      %573 = vmatpush1.bf16.msra.mxu0 0
      %574 = vmatprep.subr.bf16.mxu0 0
      %575 = vmatpush1.bf16.msra.mxu0 0
      %576 = vmatprep.subr.bf16.mxu0 0
      %577 = vmatpush1.bf16.msra.mxu0 0
      %578 = vmatprep.mubr.bf16.mxu0 0
      %579 = vmatmul.mubr.bf16.gmra.mrb[0].mxu0 %v541
      %v580 = vpop.f32.mrb[0].mxu0
      %v581 = vadd.f32 %v535, %v580
      %v582 = vpop.f32.mrb[0].mxu0
      %v583 = vpop.f32.mrb[0].mxu0
      %v584 = vpop.f32.mrb[0].mxu0
      %585 = vdwg.mxu0
      %s586 = scalar_lea.vmem %s2, 128
      %v587 = vld [vmem:[%s586] sm:$0xf]
      %v588 = vld [vmem:[%s586 + $0x4] sm:$0xf]
      %v589 = vld [vmem:[%s586 + $0x8] sm:$0xf]
      %v590 = vld [vmem:[%s586 + $0xc] sm:$0xf]
      %v591 = vld [vmem:[%s586 + $0x10] sm:$0xf]
      %v592 = vld [vmem:[%s586 + $0x14] sm:$0xf]
      %v593 = vld [vmem:[%s586 + $0x18] sm:$0xf]
      %v594 = vld [vmem:[%s586 + $0x1c] sm:$0xf]
      %v595 = vld [vmem:[%s586 + $0x20] sm:$0xf]
      %v596 = vld [vmem:[%s586 + $0x24] sm:$0xf]
      %v597 = vld [vmem:[%s586 + $0x28] sm:$0xf]
      %v598 = vld [vmem:[%s586 + $0x2c] sm:$0xf]
      %v599 = vld [vmem:[%s586 + $0x30] sm:$0xf]
      %v600 = vld [vmem:[%s586 + $0x34] sm:$0xf]
      %v601 = vld [vmem:[%s586 + $0x38] sm:$0xf]
      %v602 = vld [vmem:[%s586 + $0x3c] sm:$0xf]
      %v619 = vunpack.c.l.b16 %v587
      %v620 = vunpack.c.l.b16 %v588
      %v621 = vunpack.c.l.b16 %v589
      %v622 = vunpack.c.l.b16 %v590
      %v623 = vunpack.c.l.b16 %v591
      %v624 = vunpack.c.l.b16 %v592
      %v625 = vunpack.c.l.b16 %v593
      %v626 = vunpack.c.l.b16 %v594
      %v627 = vunpack.c.l.b16 %v595
      %v628 = vunpack.c.l.b16 %v596
      %v629 = vunpack.c.l.b16 %v597
      %v630 = vunpack.c.l.b16 %v598
      %v631 = vunpack.c.l.b16 %v599
      %v632 = vunpack.c.l.b16 %v600
      %v633 = vunpack.c.l.b16 %v601
      %v634 = vunpack.c.l.b16 %v602
      %v635 = vpack.c.b16 %v620, %v619
      %v636 = vpack.c.b16 %v622, %v621
      %v637 = vpack.c.b16 %v624, %v623
      %v638 = vpack.c.b16 %v626, %v625
      %v639 = vpack.c.b16 %v628, %v627
      %v640 = vpack.c.b16 %v630, %v629
      %v641 = vpack.c.b16 %v632, %v631
      %v642 = vpack.c.b16 %v634, %v633
      %651 = vmatprep.subr.bf16.mxu0 0
      %652 = vmatpush1.bf16.msra.mxu0 %v635
      %653 = vmatprep.subr.bf16.mxu0 0
      %654 = vmatpush1.bf16.msra.mxu0 %v636
      %655 = vmatprep.subr.bf16.mxu0 0
      %656 = vmatpush1.bf16.msra.mxu0 %v637
      %657 = vmatprep.subr.bf16.mxu0 0
      %658 = vmatpush1.bf16.msra.mxu0 %v638
      %659 = vmatprep.subr.bf16.mxu0 0
      %660 = vmatpush1.bf16.msra.mxu0 %v639
      %661 = vmatprep.subr.bf16.mxu0 0
      %662 = vmatpush1.bf16.msra.mxu0 %v640
      %663 = vmatprep.subr.bf16.mxu0 0
      %664 = vmatpush1.bf16.msra.mxu0 %v641
      %665 = vmatprep.subr.bf16.mxu0 0
      %666 = vmatpush1.bf16.msra.mxu0 %v642
      %667 = vmatprep.subr.bf16.mxu0 0
      %668 = vmatpush1.bf16.msra.mxu0 0
      %669 = vmatprep.subr.bf16.mxu0 0
      %670 = vmatpush1.bf16.msra.mxu0 0
      %671 = vmatprep.subr.bf16.mxu0 0
      %672 = vmatpush1.bf16.msra.mxu0 0
      %673 = vmatprep.subr.bf16.mxu0 0
      %674 = vmatpush1.bf16.msra.mxu0 0
      %675 = vmatprep.subr.bf16.mxu0 0
      %676 = vmatpush1.bf16.msra.mxu0 0
      %677 = vmatprep.subr.bf16.mxu0 0
      %678 = vmatpush1.bf16.msra.mxu0 0
      %679 = vmatprep.subr.bf16.mxu0 0
      %680 = vmatpush1.bf16.msra.mxu0 0
      %681 = vmatprep.subr.bf16.mxu0 0
      %682 = vmatpush1.bf16.msra.mxu0 0
      %683 = vmatprep.mubr.bf16.mxu0 0
      %684 = vmatmul.mubr.bf16.gmra.mrb[0].mxu0 %v277
      %v685 = vpop.f32.mrb[0].mxu0
      %v686 = vadd.f32 0.0, %v685
      %v687 = vpop.f32.mrb[0].mxu0
      %v688 = vpop.f32.mrb[0].mxu0
      %v689 = vpop.f32.mrb[0].mxu0
      %690 = vdwg.mxu0
      %s691 = scalar_lea.vmem %s1, 4
      %v692 = vld [vmem:[%s691] sm:$0x3]
      %v693 = vpack.c.bf16 %v686, %v686
      %v695 = vsel %vm492, %v692, 0
      %v698 = vsel %vm496, %v693, 0
      %700 = vmatprep.subr.bf16.mxu0 0
      %701 = vmatpush1.bf16.msra.mxu0 %v698
      %702 = vmatprep.subr.bf16.mxu0 0
      %703 = vmatpush1.bf16.msra.mxu0 0
      %704 = vmatprep.subr.bf16.mxu0 0
      %705 = vmatpush1.bf16.msra.mxu0 0
      %706 = vmatprep.subr.bf16.mxu0 0
      %707 = vmatpush1.bf16.msra.mxu0 0
      %708 = vmatprep.subr.bf16.mxu0 0
      %709 = vmatpush1.bf16.msra.mxu0 0
      %710 = vmatprep.subr.bf16.mxu0 0
      %711 = vmatpush1.bf16.msra.mxu0 0
      %712 = vmatprep.subr.bf16.mxu0 0
      %713 = vmatpush1.bf16.msra.mxu0 0
      %714 = vmatprep.subr.bf16.mxu0 0
      %715 = vmatpush1.bf16.msra.mxu0 0
      %716 = vmatprep.subr.bf16.mxu0 0
      %717 = vmatpush1.bf16.msra.mxu0 0
      %718 = vmatprep.subr.bf16.mxu0 0
      %719 = vmatpush1.bf16.msra.mxu0 0
      %720 = vmatprep.subr.bf16.mxu0 0
      %721 = vmatpush1.bf16.msra.mxu0 0
      %722 = vmatprep.subr.bf16.mxu0 0
      %723 = vmatpush1.bf16.msra.mxu0 0
      %724 = vmatprep.subr.bf16.mxu0 0
      %725 = vmatpush1.bf16.msra.mxu0 0
      %726 = vmatprep.subr.bf16.mxu0 0
      %727 = vmatpush1.bf16.msra.mxu0 0
      %728 = vmatprep.subr.bf16.mxu0 0
      %729 = vmatpush1.bf16.msra.mxu0 0
      %730 = vmatprep.subr.bf16.mxu0 0
      %731 = vmatpush1.bf16.msra.mxu0 0
      %732 = vmatprep.mubr.bf16.mxu0 0
      %733 = vmatmul.mubr.bf16.gmra.mrb[0].mxu0 %v695
      %v734 = vpop.f32.mrb[0].mxu0
      %v735 = vadd.f32 0.0, %v734
      %v736 = vpop.f32.mrb[0].mxu0
      %v737 = vpop.f32.mrb[0].mxu0
      %v738 = vpop.f32.mrb[0].mxu0
      %739 = vdwg.mxu0
      %v740 = vadd.f32 %v581, %v735
      %741 = vst [vmem:[%s253] sm:$0xf] %v740
      %vm742 = vcmask 1043456
      %v743 = vsel %vm742, %v740, 0.0
      %v744 = vrot.slane %v743, 4
      %v745 = vadd.f32 %v743, %v744
      %v746 = vrot.slane %v745, 2
      %v747 = vadd.f32 %v745, %v746
      %v748 = vrot.slane %v747, 1
      %v749 = vadd.f32 %v747, %v748
      %v750 = vmul.f32 %v740, %v740
      %v751 = vsel %vm742, %v750, 0.0
      %v752 = vrot.slane %v751, 4
      %v753 = vadd.f32 %v751, %v752
      %v754 = vrot.slane %v753, 2
      %v755 = vadd.f32 %v753, %v754
      %v756 = vrot.slane %v755, 1
      %v757 = vadd.f32 %v755, %v756
      %v758 = vlaneseq
      %v759 = vshrl.u32 %v758, 7
      %vm760 = vcmp.eq.s32.totalorder %v759, 0
      %vm761 = vcmp.eq.s32.totalorder %v759, 1
      %v762 = vsel %vm761, %v757, 0.0
      %v763 = vsel %vm760, %v749, %v762
      %764 = vst [vmem:[%s257] sm:$0xff] %v763
      %p765 = scmp.lt.s32.totalorder %s18, 1
      %s766 = scalar_select %p765, %s18, 1
      %s767 = smul.addr %s766, 4
      %s768 = scalar_lea.vmem %s5, %s767
      %p769 = scmp.lt.s32.totalorder %s18, 1
      %s770 = scalar_select %p769, %s18, 1
      %s771 = smul.addr %s770, 8
      %s772 = scalar_lea.vmem %s6, %s771
      // Predicated region
      $region41: #{autoencoder_forward.9} parent=39 // pred_check
        %p773 = pneg %p146
      $region42: #{autoencoder_forward.9} parent=39 // pred_check_branch
        %775 = sbr.rel (%p773) target = $region44
      $region43: #{autoencoder_forward.9} parent=39 // pred_region
        _
      $region44: #{autoencoder_forward.9} parent=39 // pred_fallthru
        _
      // Predicated region
      $region45: #{autoencoder_forward.9} parent=39 // pred_check
        %p776 = pneg %p172
      $region46: #{autoencoder_forward.9} parent=39 // pred_check_branch
        %778 = sbr.rel (%p776) target = $region48
      $region47: #{autoencoder_forward.9} parent=39 // pred_region
        _
      $region48: #{autoencoder_forward.9} parent=39 // pred_fallthru
        _
    $region40: #{autoencoder_forward.9} parent=5 // pred_fallthru
      _
    %p779 = scmp.le.s32.totalorder 2, %s13
    // Predicated region
    $region49: #{autoencoder_forward.9} parent=5 // pred_check
      %p780 = pneg %p779
    $region50: #{autoencoder_forward.9} parent=5 // pred_check_branch
      %782 = sbr.rel (%p780) target = $region52
    $region51: #{autoencoder_forward.9} parent=5 // pred_region
      %s783 = ssub.s32 %s13, 2
      // Predicated region
      $region53: #{autoencoder_forward.9} parent=51 // pred_check
        %p784 = pneg %p152
      $region54: #{autoencoder_forward.9} parent=51 // pred_check_branch
        %786 = sbr.rel (%p784) target = $region56
      $region55: #{autoencoder_forward.9} parent=51 // pred_region
        %p787 = scmp.lt.s32.totalorder %s19, 1
        %s788 = scalar_select %p787, %s19, 1
        %s789 = smul.addr %s788, 4
        %s790 = scalar_lea.vmem %s5, %s789
      $region56: #{autoencoder_forward.9} parent=51 // pred_fallthru
        _
      // Predicated region
      $region57: #{autoencoder_forward.9} parent=51 // pred_check
        %p791 = pneg %p178
      $region58: #{autoencoder_forward.9} parent=51 // pred_check_branch
        %793 = sbr.rel (%p791) target = $region60
      $region59: #{autoencoder_forward.9} parent=51 // pred_region
        %p794 = scmp.lt.s32.totalorder %s19, 1
        %s795 = scalar_select %p794, %s19, 1
        %s796 = smul.addr %s795, 8
        %s797 = scalar_lea.vmem %s6, %s796
      $region60: #{autoencoder_forward.9} parent=51 // pred_fallthru
        _
    $region52: #{autoencoder_forward.9} parent=5 // pred_fallthru
      _
  $region6: #{autoencoder_forward.9} parent=0 // loop_footer
    %s17 = sadd.s32 1, %s13
  $region7: #{autoencoder_forward.9} parent=0 // loop_footer_branch
    %12 = sbr.rel target = $region3
  $region8: #{autoencoder_forward.9} parent=0 // loop_exit
    _

// kernel: autoencoder_forward.10
$region0: #{autoencoder_forward.10}
  #allocation0 [shape = 'u32[]', space=smem, size = 0x4, offset = 0x4, fixed_abs, tag = 'smem constant byte address 0x4 - core index']
  #allocation1 [shape = 'u32[144,128]{1,0:T(1,128)}', space=vmem, size = 0x12000, scoped, tag = 'internal scratch']
  %s0 = inlined_call_operand.vmem [shape: f32[2,4,128], index: 0, kind: input, shape index: {}]
  %s1 = inlined_call_operand.vmem [shape: bf16[3,8,4], index: 1, kind: input, shape index: {}]
  %s2 = inlined_call_operand.vmem [shape: bf16[3,128,128], index: 2, kind: input, shape index: {}]
  %s3 = inlined_call_operand.vmem [shape: f32[1,128], index: 3, kind: input, shape index: {}]
  %s4 = inlined_call_operand.vmem [shape: f32[1,128], index: 4, kind: input, shape index: {}]
  %s5 = inlined_call_operand.vmem [shape: f32[2,8,128], index: 5, kind: output, shape index: {0}]
  %s6 = inlined_call_operand.vmem [shape: f32[2,8,128], index: 6, kind: output, shape index: {1}]
  %7 = xla_tuple %s5, %s6
  %s8 = sld [smem:[#allocation0]]
  $region61: #{autoencoder_forward.10} parent=0
    _
  %s10 = ssub.s32 1, %s8
  %s11 = scalar_select 0, %s10, %s8
  loop: start=0, step=1, limit=4
  $region2: #{autoencoder_forward.10} parent=0 // loop_pre_header
    _
  $region3: #{autoencoder_forward.10} parent=0 // loop_header
    %s13 = sphi 0, %s17
    %p14 = scmp.ge.s32.totalorder %s13, 4
    %s23 = sphi 0, %s25
    %s26 = sphi 0, %s23
    %s27 = sphi 0, %s26
    %s43 = sphi 0, %s27
    %s47 = sphi 0, %s47
    %s49 = sphi 0, %s47
    %s50 = sphi 0, %s49
    %s64 = sphi 0, %s50
    %s68 = sphi 0, %s68
    %s70 = sphi 0, %s68
    %s71 = sphi 0, %s70
    %s85 = sphi 0, %s71
    %s89 = sphi 0, %s89
    %s91 = sphi 0, %s89
    %s92 = sphi 0, %s91
    %s106 = sphi 0, %s92
    %s110 = sphi 0, %s110
    %s112 = sphi 0, %s110
    %s113 = sphi 0, %s112
    %s127 = sphi 0, %s113
    %s133 = sphi 0, %s135
    %s136 = sphi 0, %s133
    %s137 = sphi 0, %s136
    %s153 = sphi 0, %s137
    %s159 = sphi 0, %s161
    %s162 = sphi 0, %s159
    %s163 = sphi 0, %s162
    %s179 = sphi 0, %s163
  $region4: #{autoencoder_forward.10} parent=0 // loop_header_branch
    %16 = sbr.rel (%p14) target = $region8
  $region5: #{autoencoder_forward.10} parent=0 // loop_body
    %s18 = ssub.s32 %s13, 1
    %s19 = ssub.s32 %s13, 2
    %s20 = sadd.s32 %s13, 1
    %s21 = ssub.s32 %s13, %s20
    %p22 = scmp.eq.s32.totalorder %s21, 0
    %s24 = sadd.s32 %s23, 1
    %s25 = scalar_select %p22, %s23, %s24
    %p28 = pneg %p22
    %p29 = scmp.eq.s32.totalorder %s13, 1
    %p30 = por %p28, %p29
    %p31 = scmp.ne.s32.totalorder %s23, %s26
    %p32 = scmp.eq.s32.totalorder %s13, 0
    %p33 = por %p31, %p32
    %p34 = scmp.ne.s32.totalorder %s23, %s26
    %p35 = scmp.eq.s32.totalorder %s18, 1
    %p36 = por %p34, %p35
    %p37 = scmp.ne.s32.totalorder %s26, %s27
    %p38 = scmp.eq.s32.totalorder %s18, 0
    %p39 = por %p37, %p38
    %p40 = scmp.ne.s32.totalorder %s26, %s27
    %p41 = scmp.eq.s32.totalorder %s19, 1
    %p42 = por %p40, %p41
    %p44 = scmp.ne.s32.totalorder %s27, %s43
    %p45 = scmp.eq.s32.totalorder %s19, 0
    %p46 = por %p44, %p45
    %s48 = sadd.s32 %s47, 1
    %p51 = scmp.eq.s32.totalorder %s13, 1
    %p52 = scmp.ne.s32.totalorder %s47, %s49
    %p53 = scmp.eq.s32.totalorder %s13, 0
    %p54 = por %p52, %p53
    %p55 = scmp.ne.s32.totalorder %s47, %s49
    %p56 = scmp.eq.s32.totalorder %s18, 1
    %p57 = por %p55, %p56
    %p58 = scmp.ne.s32.totalorder %s49, %s50
    %p59 = scmp.eq.s32.totalorder %s18, 0
    %p60 = por %p58, %p59
    %p61 = scmp.ne.s32.totalorder %s49, %s50
    %p62 = scmp.eq.s32.totalorder %s19, 1
    %p63 = por %p61, %p62
    %p65 = scmp.ne.s32.totalorder %s50, %s64
    %p66 = scmp.eq.s32.totalorder %s19, 0
    %p67 = por %p65, %p66
    %s69 = sadd.s32 %s68, 1
    %p72 = scmp.eq.s32.totalorder %s13, 1
    %p73 = scmp.ne.s32.totalorder %s68, %s70
    %p74 = scmp.eq.s32.totalorder %s13, 0
    %p75 = por %p73, %p74
    %p76 = scmp.ne.s32.totalorder %s68, %s70
    %p77 = scmp.eq.s32.totalorder %s18, 1
    %p78 = por %p76, %p77
    %p79 = scmp.ne.s32.totalorder %s70, %s71
    %p80 = scmp.eq.s32.totalorder %s18, 0
    %p81 = por %p79, %p80
    %p82 = scmp.ne.s32.totalorder %s70, %s71
    %p83 = scmp.eq.s32.totalorder %s19, 1
    %p84 = por %p82, %p83
    %p86 = scmp.ne.s32.totalorder %s71, %s85
    %p87 = scmp.eq.s32.totalorder %s19, 0
    %p88 = por %p86, %p87
    %s90 = sadd.s32 %s89, 1
    %p93 = scmp.eq.s32.totalorder %s13, 1
    %p94 = scmp.ne.s32.totalorder %s89, %s91
    %p95 = scmp.eq.s32.totalorder %s13, 0
    %p96 = por %p94, %p95
    %p97 = scmp.ne.s32.totalorder %s89, %s91
    %p98 = scmp.eq.s32.totalorder %s18, 1
    %p99 = por %p97, %p98
    %p100 = scmp.ne.s32.totalorder %s91, %s92
    %p101 = scmp.eq.s32.totalorder %s18, 0
    %p102 = por %p100, %p101
    %p103 = scmp.ne.s32.totalorder %s91, %s92
    %p104 = scmp.eq.s32.totalorder %s19, 1
    %p105 = por %p103, %p104
    %p107 = scmp.ne.s32.totalorder %s92, %s106
    %p108 = scmp.eq.s32.totalorder %s19, 0
    %p109 = por %p107, %p108
    %s111 = sadd.s32 %s110, 1
    %p114 = scmp.eq.s32.totalorder %s13, 1
    %p115 = scmp.ne.s32.totalorder %s110, %s112
    %p116 = scmp.eq.s32.totalorder %s13, 0
    %p117 = por %p115, %p116
    %p118 = scmp.ne.s32.totalorder %s110, %s112
    %p119 = scmp.eq.s32.totalorder %s18, 1
    %p120 = por %p118, %p119
    %p121 = scmp.ne.s32.totalorder %s112, %s113
    %p122 = scmp.eq.s32.totalorder %s18, 0
    %p123 = por %p121, %p122
    %p124 = scmp.ne.s32.totalorder %s112, %s113
    %p125 = scmp.eq.s32.totalorder %s19, 1
    %p126 = por %p124, %p125
    %p128 = scmp.ne.s32.totalorder %s113, %s127
    %p129 = scmp.eq.s32.totalorder %s19, 0
    %p130 = por %p128, %p129
    %s131 = ssub.s32 %s13, %s20
    %p132 = scmp.eq.s32.totalorder %s131, 0
    %s134 = sadd.s32 %s133, 1
    %s135 = scalar_select %p132, %s133, %s134
    %p138 = pneg %p132
    %p139 = scmp.eq.s32.totalorder %s13, 1
    %p140 = por %p138, %p139
    %p141 = scmp.ne.s32.totalorder %s133, %s136
    %p142 = scmp.eq.s32.totalorder %s13, 0
    %p143 = por %p141, %p142
    %p144 = scmp.ne.s32.totalorder %s133, %s136
    %p145 = scmp.eq.s32.totalorder %s18, 1
    %p146 = por %p144, %p145
    %p147 = scmp.ne.s32.totalorder %s136, %s137
    %p148 = scmp.eq.s32.totalorder %s18, 0
    %p149 = por %p147, %p148
    %p150 = scmp.ne.s32.totalorder %s136, %s137
    %p151 = scmp.eq.s32.totalorder %s19, 1
    %p152 = por %p150, %p151
    %p154 = scmp.ne.s32.totalorder %s137, %s153
    %p155 = scmp.eq.s32.totalorder %s19, 0
    %p156 = por %p154, %p155
    %s157 = ssub.s32 %s13, %s20
    %p158 = scmp.eq.s32.totalorder %s157, 0
    %s160 = sadd.s32 %s159, 1
    %s161 = scalar_select %p158, %s159, %s160
    %p164 = pneg %p158
    %p165 = scmp.eq.s32.totalorder %s13, 1
    %p166 = por %p164, %p165
    %p167 = scmp.ne.s32.totalorder %s159, %s162
    %p168 = scmp.eq.s32.totalorder %s13, 0
    %p169 = por %p167, %p168
    %p170 = scmp.ne.s32.totalorder %s159, %s162
    %p171 = scmp.eq.s32.totalorder %s18, 1
    %p172 = por %p170, %p171
    %p173 = scmp.ne.s32.totalorder %s162, %s163
    %p174 = scmp.eq.s32.totalorder %s18, 0
    %p175 = por %p173, %p174
    %p176 = scmp.ne.s32.totalorder %s162, %s163
    %p177 = scmp.eq.s32.totalorder %s19, 1
    %p178 = por %p176, %p177
    %p180 = scmp.ne.s32.totalorder %s163, %s179
    %p181 = scmp.eq.s32.totalorder %s19, 0
    %p182 = por %p180, %p181
    %p183 = scmp.le.s32.totalorder 1, %s13
    %p184 = scmp.lt.s32.totalorder %s13, 3
    %p185 = pnand %p183, %p184
    %p186 = pneg %p185
    // Predicated region
    $region9: #{autoencoder_forward.10} parent=5 // pred_check
      _
    $region10: #{autoencoder_forward.10} parent=5 // pred_check_branch
      %188 = sbr.rel (%p185) target = $region12
    $region11: #{autoencoder_forward.10} parent=5 // pred_region
      %s189 = ssub.s32 %s13, 1
      // Predicated region
      $region13: #{autoencoder_forward.10} parent=11 // pred_check
        %p190 = pneg %p60
      $region14: #{autoencoder_forward.10} parent=11 // pred_check_branch
        %192 = sbr.rel (%p190) target = $region16
      $region15: #{autoencoder_forward.10} parent=11 // pred_region
        _
      $region16: #{autoencoder_forward.10} parent=11 // pred_fallthru
        _
      // Predicated region
      $region17: #{autoencoder_forward.10} parent=11 // pred_check
        %p193 = pneg %p81
      $region18: #{autoencoder_forward.10} parent=11 // pred_check_branch
        %195 = sbr.rel (%p193) target = $region20
      $region19: #{autoencoder_forward.10} parent=11 // pred_region
        _
      $region20: #{autoencoder_forward.10} parent=11 // pred_fallthru
        _
      // Predicated region
      $region21: #{autoencoder_forward.10} parent=11 // pred_check
        %p196 = pneg %p102
      $region22: #{autoencoder_forward.10} parent=11 // pred_check_branch
        %198 = sbr.rel (%p196) target = $region24
      $region23: #{autoencoder_forward.10} parent=11 // pred_region
        _
      $region24: #{autoencoder_forward.10} parent=11 // pred_fallthru
        _
      // Predicated region
      $region25: #{autoencoder_forward.10} parent=11 // pred_check
        %p199 = pneg %p123
      $region26: #{autoencoder_forward.10} parent=11 // pred_check_branch
        %201 = sbr.rel (%p199) target = $region28
      $region27: #{autoencoder_forward.10} parent=11 // pred_region
        _
      $region28: #{autoencoder_forward.10} parent=11 // pred_fallthru
        _
    $region12: #{autoencoder_forward.10} parent=5 // pred_fallthru
      _
    %p202 = scmp.lt.s32.totalorder %s13, 2
    // Predicated region
    $region29: #{autoencoder_forward.10} parent=5 // pred_check
      %p203 = pneg %p202
    $region30: #{autoencoder_forward.10} parent=5 // pred_check_branch
      %205 = sbr.rel (%p203) target = $region32
    $region31: #{autoencoder_forward.10} parent=5 // pred_region
      // Predicated region
      $region33: #{autoencoder_forward.10} parent=31 // pred_check
        %p206 = pneg %p33
      $region34: #{autoencoder_forward.10} parent=31 // pred_check_branch
        %208 = sbr.rel (%p206) target = $region36
      $region35: #{autoencoder_forward.10} parent=31 // pred_region
        %p209 = scmp.lt.s32.totalorder %s13, 1
        %s210 = scalar_select %p209, %s13, 1
        %s211 = smul.addr %s210, 4
        %s212 = scalar_lea.vmem %s0, %s211
      $region36: #{autoencoder_forward.10} parent=31 // pred_fallthru
        _
    $region32: #{autoencoder_forward.10} parent=5 // pred_fallthru
      _
    %p213 = scmp.le.s32.totalorder 1, %s13
    %p214 = scmp.lt.s32.totalorder %s13, 3
    %p215 = pnand %p213, %p214
    %p216 = pneg %p215
    // Predicated region
    $region37: #{autoencoder_forward.10} parent=5 // pred_check
      _
    $region38: #{autoencoder_forward.10} parent=5 // pred_check_branch
      %218 = sbr.rel (%p215) target = $region40
    $region39: #{autoencoder_forward.10} parent=5 // pred_region
      %s219 = ssub.s32 %s13, 1
      %p220 = scmp.lt.s32.totalorder %s18, 1
      %s221 = scalar_select %p220, %s18, 1
      %s222 = smul.addr %s221, 4
      %s223 = scalar_lea.vmem %s0, %s222
      %p224 = pneg %p39
      %p225 = pneg %p36
      %p226 = pneg %p60
      %p227 = pneg %p57
      %p228 = pneg %p81
      %p229 = pneg %p78
      %p230 = pneg %p102
      %p231 = pneg %p99
      %p232 = pneg %p123
      %p233 = pneg %p120
      %p234 = pneg %p149
      %p235 = pneg %p146
      %p236 = scmp.lt.s32.totalorder %s18, 1
      %s237 = scalar_select %p236, %s18, 1
      %s238 = smul.addr %s237, 8
      %s239 = scalar_lea.vmem %s5, %s238
      %p240 = pneg %p175
      %p241 = pneg %p172
      %p242 = scmp.lt.s32.totalorder %s18, 1
      %s243 = scalar_select %p242, %s18, 1
      %s244 = smul.addr %s243, 8
      %s245 = scalar_lea.vmem %s6, %s244
      %p246 = scmp.lt.s32.totalorder %s18, 1
      %s247 = scalar_select %p246, %s18, 1
      %s248 = smul.addr %s247, 4
      %s249 = scalar_lea.vmem %s0, %s248
      %p250 = scmp.lt.s32.totalorder %s18, 1
      %s251 = scalar_select %p250, %s18, 1
      %s252 = smul.addr %s251, 8
      %s253 = scalar_lea.vmem %s5, %s252
      %p254 = scmp.lt.s32.totalorder %s18, 1
      %s255 = scalar_select %p254, %s18, 1
      %s256 = smul.addr %s255, 8
      %s257 = scalar_lea.vmem %s6, %s256
      %v259 = vld [vmem:[%s249] sm:$0xf]
      %v260 = vld [vmem:[%s3] sm:$0x1]
      %v262 = vlaneseq
      %v263 = vshrl.u32 %v262, 7
      %v264 = vsub.s32 0, %v263
      %v265 = vrot.slane %v260, %v264
      %v267 = vmul.f32 %v259, %v265
      %v268 = vld [vmem:[%s4] sm:$0x1]
      %v270 = vlaneseq
      %v271 = vshrl.u32 %v270, 7
      %v272 = vsub.s32 0, %v271
      %v273 = vrot.slane %v268, %v272
      %v275 = vadd.f32 %v267, %v273
      %v276 = vmax.f32 %v275, 0.0
      %v277 = vpack.c.bf16 %v276, %v276
      %v278 = vld [vmem:[%s2] sm:$0xf]
      %v279 = vld [vmem:[%s2 + $0x4] sm:$0xf]
      %v280 = vld [vmem:[%s2 + $0x8] sm:$0xf]
      %v281 = vld [vmem:[%s2 + $0xc] sm:$0xf]
      %v282 = vld [vmem:[%s2 + $0x10] sm:$0xf]
      %v283 = vld [vmem:[%s2 + $0x14] sm:$0xf]
      %v284 = vld [vmem:[%s2 + $0x18] sm:$0xf]
      %v285 = vld [vmem:[%s2 + $0x1c] sm:$0xf]
      %v286 = vld [vmem:[%s2 + $0x20] sm:$0xf]
      %v287 = vld [vmem:[%s2 + $0x24] sm:$0xf]
      %v288 = vld [vmem:[%s2 + $0x28] sm:$0xf]
      %v289 = vld [vmem:[%s2 + $0x2c] sm:$0xf]
      %v290 = vld [vmem:[%s2 + $0x30] sm:$0xf]
      %v291 = vld [vmem:[%s2 + $0x34] sm:$0xf]
      %v292 = vld [vmem:[%s2 + $0x38] sm:$0xf]
      %v293 = vld [vmem:[%s2 + $0x3c] sm:$0xf]
      %v310 = vunpack.c.l.b16 %v278
      %v311 = vunpack.c.l.b16 %v279
      %v312 = vunpack.c.l.b16 %v280
      %v313 = vunpack.c.l.b16 %v281
      %v314 = vunpack.c.l.b16 %v282
      %v315 = vunpack.c.l.b16 %v283
      %v316 = vunpack.c.l.b16 %v284
      %v317 = vunpack.c.l.b16 %v285
      %v318 = vunpack.c.l.b16 %v286
      %v319 = vunpack.c.l.b16 %v287
      %v320 = vunpack.c.l.b16 %v288
      %v321 = vunpack.c.l.b16 %v289
      %v322 = vunpack.c.l.b16 %v290
      %v323 = vunpack.c.l.b16 %v291
      %v324 = vunpack.c.l.b16 %v292
      %v325 = vunpack.c.l.b16 %v293
      %v326 = vpack.c.b16 %v311, %v310
      %v327 = vpack.c.b16 %v313, %v312
      %v328 = vpack.c.b16 %v315, %v314
      %v329 = vpack.c.b16 %v317, %v316
      %v330 = vpack.c.b16 %v319, %v318
      %v331 = vpack.c.b16 %v321, %v320
      %v332 = vpack.c.b16 %v323, %v322
      %v333 = vpack.c.b16 %v325, %v324
      %342 = vmatprep.subr.bf16.mxu0 0
      %343 = vmatpush1.bf16.msra.mxu0 %v326
      %344 = vmatprep.subr.bf16.mxu0 0
      %345 = vmatpush1.bf16.msra.mxu0 %v327
      %346 = vmatprep.subr.bf16.mxu0 0
      %347 = vmatpush1.bf16.msra.mxu0 %v328
      %348 = vmatprep.subr.bf16.mxu0 0
      %349 = vmatpush1.bf16.msra.mxu0 %v329
      %350 = vmatprep.subr.bf16.mxu0 0
      %351 = vmatpush1.bf16.msra.mxu0 %v330
      %352 = vmatprep.subr.bf16.mxu0 0
      %353 = vmatpush1.bf16.msra.mxu0 %v331
      %354 = vmatprep.subr.bf16.mxu0 0
      %355 = vmatpush1.bf16.msra.mxu0 %v332
      %356 = vmatprep.subr.bf16.mxu0 0
      %357 = vmatpush1.bf16.msra.mxu0 %v333
      %358 = vmatprep.subr.bf16.mxu0 0
      %359 = vmatpush1.bf16.msra.mxu0 0
      %360 = vmatprep.subr.bf16.mxu0 0
      %361 = vmatpush1.bf16.msra.mxu0 0
      %362 = vmatprep.subr.bf16.mxu0 0
      %363 = vmatpush1.bf16.msra.mxu0 0
      %364 = vmatprep.subr.bf16.mxu0 0
      %365 = vmatpush1.bf16.msra.mxu0 0
      %366 = vmatprep.subr.bf16.mxu0 0
      %367 = vmatpush1.bf16.msra.mxu0 0
      %368 = vmatprep.subr.bf16.mxu0 0
      %369 = vmatpush1.bf16.msra.mxu0 0
      %370 = vmatprep.subr.bf16.mxu0 0
      %371 = vmatpush1.bf16.msra.mxu0 0
      %372 = vmatprep.subr.bf16.mxu0 0
      %373 = vmatpush1.bf16.msra.mxu0 0
      %374 = vmatprep.mubr.bf16.mxu0 0
      %375 = vmatmul.mubr.bf16.gmra.mrb[0].mxu0 %v277
      %v376 = vpop.f32.mrb[0].mxu0
      %v377 = vadd.f32 0.0, %v376
      %v378 = vpop.f32.mrb[0].mxu0
      %v379 = vpop.f32.mrb[0].mxu0
      %v380 = vpop.f32.mrb[0].mxu0
      %381 = vdwg.mxu0
      %v382 = vld [vmem:[%s1] sm:$0xf]
      %v383 = vpack.c.bf16 %v377, %v377
      %s384 = scalar_lea.vmem %s2, 64
      %v385 = vld [vmem:[%s384] sm:$0xf]
      %v386 = vld [vmem:[%s384 + $0x4] sm:$0xf]
      %v387 = vld [vmem:[%s384 + $0x8] sm:$0xf]
      %v388 = vld [vmem:[%s384 + $0xc] sm:$0xf]
      %v389 = vld [vmem:[%s384 + $0x10] sm:$0xf]
      %v390 = vld [vmem:[%s384 + $0x14] sm:$0xf]
      %v391 = vld [vmem:[%s384 + $0x18] sm:$0xf]
      %v392 = vld [vmem:[%s384 + $0x1c] sm:$0xf]
      %v393 = vld [vmem:[%s384 + $0x20] sm:$0xf]
      %v394 = vld [vmem:[%s384 + $0x24] sm:$0xf]
      %v395 = vld [vmem:[%s384 + $0x28] sm:$0xf]
      %v396 = vld [vmem:[%s384 + $0x2c] sm:$0xf]
      %v397 = vld [vmem:[%s384 + $0x30] sm:$0xf]
      %v398 = vld [vmem:[%s384 + $0x34] sm:$0xf]
      %v399 = vld [vmem:[%s384 + $0x38] sm:$0xf]
      %v400 = vld [vmem:[%s384 + $0x3c] sm:$0xf]
      %v417 = vunpack.c.l.b16 %v385
      %v418 = vunpack.c.l.b16 %v386
      %v419 = vunpack.c.l.b16 %v387
      %v420 = vunpack.c.l.b16 %v388
      %v421 = vunpack.c.l.b16 %v389
      %v422 = vunpack.c.l.b16 %v390
      %v423 = vunpack.c.l.b16 %v391
      %v424 = vunpack.c.l.b16 %v392
      %v425 = vunpack.c.l.b16 %v393
      %v426 = vunpack.c.l.b16 %v394
      %v427 = vunpack.c.l.b16 %v395
      %v428 = vunpack.c.l.b16 %v396
      %v429 = vunpack.c.l.b16 %v397
      %v430 = vunpack.c.l.b16 %v398
      %v431 = vunpack.c.l.b16 %v399
      %v432 = vunpack.c.l.b16 %v400
      %v433 = vpack.c.b16 %v418, %v417
      %v434 = vpack.c.b16 %v420, %v419
      %v435 = vpack.c.b16 %v422, %v421
      %v436 = vpack.c.b16 %v424, %v423
      %v437 = vpack.c.b16 %v426, %v425
      %v438 = vpack.c.b16 %v428, %v427
      %v439 = vpack.c.b16 %v430, %v429
      %v440 = vpack.c.b16 %v432, %v431
      %449 = vmatprep.subr.bf16.mxu0 0
      %450 = vmatpush1.bf16.msra.mxu0 %v433
      %451 = vmatprep.subr.bf16.mxu0 0
      %452 = vmatpush1.bf16.msra.mxu0 %v434
      %453 = vmatprep.subr.bf16.mxu0 0
      %454 = vmatpush1.bf16.msra.mxu0 %v435
      %455 = vmatprep.subr.bf16.mxu0 0
      %456 = vmatpush1.bf16.msra.mxu0 %v436
      %457 = vmatprep.subr.bf16.mxu0 0
      %458 = vmatpush1.bf16.msra.mxu0 %v437
      %459 = vmatprep.subr.bf16.mxu0 0
      %460 = vmatpush1.bf16.msra.mxu0 %v438
      %461 = vmatprep.subr.bf16.mxu0 0
      %462 = vmatpush1.bf16.msra.mxu0 %v439
      %463 = vmatprep.subr.bf16.mxu0 0
      %464 = vmatpush1.bf16.msra.mxu0 %v440
      %465 = vmatprep.subr.bf16.mxu0 0
      %466 = vmatpush1.bf16.msra.mxu0 0
      %467 = vmatprep.subr.bf16.mxu0 0
      %468 = vmatpush1.bf16.msra.mxu0 0
      %469 = vmatprep.subr.bf16.mxu0 0
      %470 = vmatpush1.bf16.msra.mxu0 0
      %471 = vmatprep.subr.bf16.mxu0 0
      %472 = vmatpush1.bf16.msra.mxu0 0
      %473 = vmatprep.subr.bf16.mxu0 0
      %474 = vmatpush1.bf16.msra.mxu0 0
      %475 = vmatprep.subr.bf16.mxu0 0
      %476 = vmatpush1.bf16.msra.mxu0 0
      %477 = vmatprep.subr.bf16.mxu0 0
      %478 = vmatpush1.bf16.msra.mxu0 0
      %479 = vmatprep.subr.bf16.mxu0 0
      %480 = vmatpush1.bf16.msra.mxu0 0
      %481 = vmatprep.mubr.bf16.mxu0 0
      %482 = vmatmul.mubr.bf16.gmra.mrb[0].mxu0 %v277
      %v483 = vpop.f32.mrb[0].mxu0
      %v484 = vadd.f32 0.0, %v483
      %v485 = vpop.f32.mrb[0].mxu0
      %v486 = vpop.f32.mrb[0].mxu0
      %v487 = vpop.f32.mrb[0].mxu0
      %488 = vdwg.mxu0
      %s489 = scalar_lea.vmem %s1, 4
      %v490 = vld [vmem:[%s489] sm:$0xf]
      %v491 = vpack.c.bf16 %v484, %v484
      %vm492 = vcmask 31744
      %v494 = vsel %vm492, %v490, 0
      %vm496 = vcmask 1041408
      %v498 = vsel %vm496, %v491, 0
      %500 = vmatprep.subr.bf16.mxu0 0
      %501 = vmatpush1.bf16.msra.mxu0 %v498
      %502 = vmatprep.subr.bf16.mxu0 0
      %503 = vmatpush1.bf16.msra.mxu0 0
      %504 = vmatprep.subr.bf16.mxu0 0
      %505 = vmatpush1.bf16.msra.mxu0 0
      %506 = vmatprep.subr.bf16.mxu0 0
      %507 = vmatpush1.bf16.msra.mxu0 0
      %508 = vmatprep.subr.bf16.mxu0 0
      %509 = vmatpush1.bf16.msra.mxu0 0
      %510 = vmatprep.subr.bf16.mxu0 0
      %511 = vmatpush1.bf16.msra.mxu0 0
      %512 = vmatprep.subr.bf16.mxu0 0
      %513 = vmatpush1.bf16.msra.mxu0 0
      %514 = vmatprep.subr.bf16.mxu0 0
      %515 = vmatpush1.bf16.msra.mxu0 0
      %516 = vmatprep.subr.bf16.mxu0 0
      %517 = vmatpush1.bf16.msra.mxu0 0
      %518 = vmatprep.subr.bf16.mxu0 0
      %519 = vmatpush1.bf16.msra.mxu0 0
      %520 = vmatprep.subr.bf16.mxu0 0
      %521 = vmatpush1.bf16.msra.mxu0 0
      %522 = vmatprep.subr.bf16.mxu0 0
      %523 = vmatpush1.bf16.msra.mxu0 0
      %524 = vmatprep.subr.bf16.mxu0 0
      %525 = vmatpush1.bf16.msra.mxu0 0
      %526 = vmatprep.subr.bf16.mxu0 0
      %527 = vmatpush1.bf16.msra.mxu0 0
      %528 = vmatprep.subr.bf16.mxu0 0
      %529 = vmatpush1.bf16.msra.mxu0 0
      %530 = vmatprep.subr.bf16.mxu0 0
      %531 = vmatpush1.bf16.msra.mxu0 0
      %532 = vmatprep.mubr.bf16.mxu0 0
      %533 = vmatmul.mubr.bf16.gmra.mrb[0].mxu0 %v494
      %v534 = vpop.f32.mrb[0].mxu0
      %v535 = vadd.f32 0.0, %v534
      %v536 = vpop.f32.mrb[0].mxu0
      %v537 = vpop.f32.mrb[0].mxu0
      %v538 = vpop.f32.mrb[0].mxu0
      %539 = vdwg.mxu0
      %v541 = vsel %vm492, %v382, 0
      %v544 = vsel %vm496, %v383, 0
      %546 = vmatprep.subr.bf16.mxu0 0
      %547 = vmatpush1.bf16.msra.mxu0 %v544
      %548 = vmatprep.subr.bf16.mxu0 0
      %549 = vmatpush1.bf16.msra.mxu0 0
      %550 = vmatprep.subr.bf16.mxu0 0
      %551 = vmatpush1.bf16.msra.mxu0 0
      %552 = vmatprep.subr.bf16.mxu0 0
      %553 = vmatpush1.bf16.msra.mxu0 0
      %554 = vmatprep.subr.bf16.mxu0 0
      %555 = vmatpush1.bf16.msra.mxu0 0
      %556 = vmatprep.subr.bf16.mxu0 0
      %557 = vmatpush1.bf16.msra.mxu0 0
      %558 = vmatprep.subr.bf16.mxu0 0
      %559 = vmatpush1.bf16.msra.mxu0 0
      %560 = vmatprep.subr.bf16.mxu0 0
      %561 = vmatpush1.bf16.msra.mxu0 0
      %562 = vmatprep.subr.bf16.mxu0 0
      %563 = vmatpush1.bf16.msra.mxu0 0
      %564 = vmatprep.subr.bf16.mxu0 0
      %565 = vmatpush1.bf16.msra.mxu0 0
      %566 = vmatprep.subr.bf16.mxu0 0
      %567 = vmatpush1.bf16.msra.mxu0 0
      %568 = vmatprep.subr.bf16.mxu0 0
      %569 = vmatpush1.bf16.msra.mxu0 0
      %570 = vmatprep.subr.bf16.mxu0 0
      %571 = vmatpush1.bf16.msra.mxu0 0
      %572 = vmatprep.subr.bf16.mxu0 0
      %573 = vmatpush1.bf16.msra.mxu0 0
      %574 = vmatprep.subr.bf16.mxu0 0
      %575 = vmatpush1.bf16.msra.mxu0 0
      %576 = vmatprep.subr.bf16.mxu0 0
      %577 = vmatpush1.bf16.msra.mxu0 0
      %578 = vmatprep.mubr.bf16.mxu0 0
      %579 = vmatmul.mubr.bf16.gmra.mrb[0].mxu0 %v541
      %v580 = vpop.f32.mrb[0].mxu0
      %v581 = vadd.f32 %v535, %v580
      %v582 = vpop.f32.mrb[0].mxu0
      %v583 = vpop.f32.mrb[0].mxu0
      %v584 = vpop.f32.mrb[0].mxu0
      %585 = vdwg.mxu0
      %s586 = scalar_lea.vmem %s2, 128
      %v587 = vld [vmem:[%s586] sm:$0xf]
      %v588 = vld [vmem:[%s586 + $0x4] sm:$0xf]
      %v589 = vld [vmem:[%s586 + $0x8] sm:$0xf]
      %v590 = vld [vmem:[%s586 + $0xc] sm:$0xf]
      %v591 = vld [vmem:[%s586 + $0x10] sm:$0xf]
      %v592 = vld [vmem:[%s586 + $0x14] sm:$0xf]
      %v593 = vld [vmem:[%s586 + $0x18] sm:$0xf]
      %v594 = vld [vmem:[%s586 + $0x1c] sm:$0xf]
      %v595 = vld [vmem:[%s586 + $0x20] sm:$0xf]
      %v596 = vld [vmem:[%s586 + $0x24] sm:$0xf]
      %v597 = vld [vmem:[%s586 + $0x28] sm:$0xf]
      %v598 = vld [vmem:[%s586 + $0x2c] sm:$0xf]
      %v599 = vld [vmem:[%s586 + $0x30] sm:$0xf]
      %v600 = vld [vmem:[%s586 + $0x34] sm:$0xf]
      %v601 = vld [vmem:[%s586 + $0x38] sm:$0xf]
      %v602 = vld [vmem:[%s586 + $0x3c] sm:$0xf]
      %v619 = vunpack.c.l.b16 %v587
      %v620 = vunpack.c.l.b16 %v588
      %v621 = vunpack.c.l.b16 %v589
      %v622 = vunpack.c.l.b16 %v590
      %v623 = vunpack.c.l.b16 %v591
      %v624 = vunpack.c.l.b16 %v592
      %v625 = vunpack.c.l.b16 %v593
      %v626 = vunpack.c.l.b16 %v594
      %v627 = vunpack.c.l.b16 %v595
      %v628 = vunpack.c.l.b16 %v596
      %v629 = vunpack.c.l.b16 %v597
      %v630 = vunpack.c.l.b16 %v598
      %v631 = vunpack.c.l.b16 %v599
      %v632 = vunpack.c.l.b16 %v600
      %v633 = vunpack.c.l.b16 %v601
      %v634 = vunpack.c.l.b16 %v602
      %v635 = vpack.c.b16 %v620, %v619
      %v636 = vpack.c.b16 %v622, %v621
      %v637 = vpack.c.b16 %v624, %v623
      %v638 = vpack.c.b16 %v626, %v625
      %v639 = vpack.c.b16 %v628, %v627
      %v640 = vpack.c.b16 %v630, %v629
      %v641 = vpack.c.b16 %v632, %v631
      %v642 = vpack.c.b16 %v634, %v633
      %651 = vmatprep.subr.bf16.mxu0 0
      %652 = vmatpush1.bf16.msra.mxu0 %v635
      %653 = vmatprep.subr.bf16.mxu0 0
      %654 = vmatpush1.bf16.msra.mxu0 %v636
      %655 = vmatprep.subr.bf16.mxu0 0
      %656 = vmatpush1.bf16.msra.mxu0 %v637
      %657 = vmatprep.subr.bf16.mxu0 0
      %658 = vmatpush1.bf16.msra.mxu0 %v638
      %659 = vmatprep.subr.bf16.mxu0 0
      %660 = vmatpush1.bf16.msra.mxu0 %v639
      %661 = vmatprep.subr.bf16.mxu0 0
      %662 = vmatpush1.bf16.msra.mxu0 %v640
      %663 = vmatprep.subr.bf16.mxu0 0
      %664 = vmatpush1.bf16.msra.mxu0 %v641
      %665 = vmatprep.subr.bf16.mxu0 0
      %666 = vmatpush1.bf16.msra.mxu0 %v642
      %667 = vmatprep.subr.bf16.mxu0 0
      %668 = vmatpush1.bf16.msra.mxu0 0
      %669 = vmatprep.subr.bf16.mxu0 0
      %670 = vmatpush1.bf16.msra.mxu0 0
      %671 = vmatprep.subr.bf16.mxu0 0
      %672 = vmatpush1.bf16.msra.mxu0 0
      %673 = vmatprep.subr.bf16.mxu0 0
      %674 = vmatpush1.bf16.msra.mxu0 0
      %675 = vmatprep.subr.bf16.mxu0 0
      %676 = vmatpush1.bf16.msra.mxu0 0
      %677 = vmatprep.subr.bf16.mxu0 0
      %678 = vmatpush1.bf16.msra.mxu0 0
      %679 = vmatprep.subr.bf16.mxu0 0
      %680 = vmatpush1.bf16.msra.mxu0 0
      %681 = vmatprep.subr.bf16.mxu0 0
      %682 = vmatpush1.bf16.msra.mxu0 0
      %683 = vmatprep.mubr.bf16.mxu0 0
      %684 = vmatmul.mubr.bf16.gmra.mrb[0].mxu0 %v277
      %v685 = vpop.f32.mrb[0].mxu0
      %v686 = vadd.f32 0.0, %v685
      %v687 = vpop.f32.mrb[0].mxu0
      %v688 = vpop.f32.mrb[0].mxu0
      %v689 = vpop.f32.mrb[0].mxu0
      %690 = vdwg.mxu0
      %s691 = scalar_lea.vmem %s1, 8
      %v692 = vld [vmem:[%s691] sm:$0xf]
      %v693 = vpack.c.bf16 %v686, %v686
      %v695 = vsel %vm492, %v692, 0
      %v698 = vsel %vm496, %v693, 0
      %700 = vmatprep.subr.bf16.mxu0 0
      %701 = vmatpush1.bf16.msra.mxu0 %v698
      %702 = vmatprep.subr.bf16.mxu0 0
      %703 = vmatpush1.bf16.msra.mxu0 0
      %704 = vmatprep.subr.bf16.mxu0 0
      %705 = vmatpush1.bf16.msra.mxu0 0
      %706 = vmatprep.subr.bf16.mxu0 0
      %707 = vmatpush1.bf16.msra.mxu0 0
      %708 = vmatprep.subr.bf16.mxu0 0
      %709 = vmatpush1.bf16.msra.mxu0 0
      %710 = vmatprep.subr.bf16.mxu0 0
      %711 = vmatpush1.bf16.msra.mxu0 0
      %712 = vmatprep.subr.bf16.mxu0 0
      %713 = vmatpush1.bf16.msra.mxu0 0
      %714 = vmatprep.subr.bf16.mxu0 0
      %715 = vmatpush1.bf16.msra.mxu0 0
      %716 = vmatprep.subr.bf16.mxu0 0
      %717 = vmatpush1.bf16.msra.mxu0 0
      %718 = vmatprep.subr.bf16.mxu0 0
      %719 = vmatpush1.bf16.msra.mxu0 0
      %720 = vmatprep.subr.bf16.mxu0 0
      %721 = vmatpush1.bf16.msra.mxu0 0
      %722 = vmatprep.subr.bf16.mxu0 0
      %723 = vmatpush1.bf16.msra.mxu0 0
      %724 = vmatprep.subr.bf16.mxu0 0
      %725 = vmatpush1.bf16.msra.mxu0 0
      %726 = vmatprep.subr.bf16.mxu0 0
      %727 = vmatpush1.bf16.msra.mxu0 0
      %728 = vmatprep.subr.bf16.mxu0 0
      %729 = vmatpush1.bf16.msra.mxu0 0
      %730 = vmatprep.subr.bf16.mxu0 0
      %731 = vmatpush1.bf16.msra.mxu0 0
      %732 = vmatprep.mubr.bf16.mxu0 0
      %733 = vmatmul.mubr.bf16.gmra.mrb[0].mxu0 %v695
      %v734 = vpop.f32.mrb[0].mxu0
      %v735 = vadd.f32 0.0, %v734
      %v736 = vpop.f32.mrb[0].mxu0
      %v737 = vpop.f32.mrb[0].mxu0
      %v738 = vpop.f32.mrb[0].mxu0
      %739 = vdwg.mxu0
      %v740 = vadd.f32 %v581, %v735
      %741 = vst [vmem:[%s253] sm:$0xff] %v740
      %v742 = vrot.slane %v740, 4
      %v743 = vadd.f32 %v740, %v742
      %v744 = vrot.slane %v743, 2
      %v745 = vadd.f32 %v743, %v744
      %v746 = vrot.slane %v745, 1
      %v747 = vadd.f32 %v745, %v746
      %v748 = vmul.f32 %v740, %v740
      %v749 = vrot.slane %v748, 4
      %v750 = vadd.f32 %v748, %v749
      %v751 = vrot.slane %v750, 2
      %v752 = vadd.f32 %v750, %v751
      %v753 = vrot.slane %v752, 1
      %v754 = vadd.f32 %v752, %v753
      %v755 = vlaneseq
      %v756 = vshrl.u32 %v755, 7
      %vm757 = vcmp.eq.s32.totalorder %v756, 0
      %vm758 = vcmp.eq.s32.totalorder %v756, 1
      %v759 = vsel %vm758, %v754, 0.0
      %v760 = vsel %vm757, %v747, %v759
      %761 = vst [vmem:[%s257] sm:$0xff] %v760
      %p762 = scmp.lt.s32.totalorder %s18, 1
      %s763 = scalar_select %p762, %s18, 1
      %s764 = smul.addr %s763, 8
      %s765 = scalar_lea.vmem %s5, %s764
      %p766 = scmp.lt.s32.totalorder %s18, 1
      %s767 = scalar_select %p766, %s18, 1
      %s768 = smul.addr %s767, 8
      %s769 = scalar_lea.vmem %s6, %s768
      // Predicated region
      $region41: #{autoencoder_forward.10} parent=39 // pred_check
        %p770 = pneg %p146
      $region42: #{autoencoder_forward.10} parent=39 // pred_check_branch
        %772 = sbr.rel (%p770) target = $region44
      $region43: #{autoencoder_forward.10} parent=39 // pred_region
        _
      $region44: #{autoencoder_forward.10} parent=39 // pred_fallthru
        _
      // Predicated region
      $region45: #{autoencoder_forward.10} parent=39 // pred_check
        %p773 = pneg %p172
      $region46: #{autoencoder_forward.10} parent=39 // pred_check_branch
        %775 = sbr.rel (%p773) target = $region48
      $region47: #{autoencoder_forward.10} parent=39 // pred_region
        _
      $region48: #{autoencoder_forward.10} parent=39 // pred_fallthru
        _
    $region40: #{autoencoder_forward.10} parent=5 // pred_fallthru
      _
    %p776 = scmp.le.s32.totalorder 2, %s13
    // Predicated region
    $region49: #{autoencoder_forward.10} parent=5 // pred_check
      %p777 = pneg %p776
    $region50: #{autoencoder_forward.10} parent=5 // pred_check_branch
      %779 = sbr.rel (%p777) target = $region52
    $region51: #{autoencoder_forward.10} parent=5 // pred_region
      %s780 = ssub.s32 %s13, 2
      // Predicated region
      $region53: #{autoencoder_forward.10} parent=51 // pred_check
        %p781 = pneg %p152
      $region54: #{autoencoder_forward.10} parent=51 // pred_check_branch
        %783 = sbr.rel (%p781) target = $region56
      $region55: #{autoencoder_forward.10} parent=51 // pred_region
        %p784 = scmp.lt.s32.totalorder %s19, 1
        %s785 = scalar_select %p784, %s19, 1
        %s786 = smul.addr %s785, 8
        %s787 = scalar_lea.vmem %s5, %s786
      $region56: #{autoencoder_forward.10} parent=51 // pred_fallthru
        _
      // Predicated region
      $region57: #{autoencoder_forward.10} parent=51 // pred_check
        %p788 = pneg %p178
      $region58: #{autoencoder_forward.10} parent=51 // pred_check_branch
        %790 = sbr.rel (%p788) target = $region60
      $region59: #{autoencoder_forward.10} parent=51 // pred_region
        %p791 = scmp.lt.s32.totalorder %s19, 1
        %s792 = scalar_select %p791, %s19, 1
        %s793 = smul.addr %s792, 8
        %s794 = scalar_lea.vmem %s6, %s793
      $region60: #{autoencoder_forward.10} parent=51 // pred_fallthru
        _
    $region52: #{autoencoder_forward.10} parent=5 // pred_fallthru
      _
  $region6: #{autoencoder_forward.10} parent=0 // loop_footer
    %s17 = sadd.s32 1, %s13
  $region7: #{autoencoder_forward.10} parent=0 // loop_footer_branch
    %12 = sbr.rel target = $region3
  $region8: #{autoencoder_forward.10} parent=0 // loop_exit
    _

// kernel: autoencoder_forward.11
$region0: #{autoencoder_forward.11}
  #allocation0 [shape = 'u32[]', space=smem, size = 0x4, offset = 0x4, fixed_abs, tag = 'smem constant byte address 0x4 - core index']
  #allocation1 [shape = 'u32[144,128]{1,0:T(1,128)}', space=vmem, size = 0x12000, scoped, tag = 'internal scratch']
  %s0 = inlined_call_operand.vmem [shape: f32[2,8,128], index: 0, kind: input, shape index: {}]
  %s1 = inlined_call_operand.vmem [shape: bf16[3,16,8], index: 1, kind: input, shape index: {}]
  %s2 = inlined_call_operand.vmem [shape: bf16[3,128,16], index: 2, kind: input, shape index: {}]
  %s3 = inlined_call_operand.vmem [shape: f32[1,128], index: 3, kind: input, shape index: {}]
  %s4 = inlined_call_operand.vmem [shape: f32[1,128], index: 4, kind: input, shape index: {}]
  %s5 = inlined_call_operand.vmem [shape: f32[1,16], index: 5, kind: input, shape index: {}]
  %s6 = inlined_call_operand.hbm [shape: f32[2,16,16], index: 6, kind: output, shape index: {}]
  %s7 = sld [smem:[#allocation0]]
  $region57: #{autoencoder_forward.11} parent=0
    _
  %s9 = ssub.s32 1, %s7
  %s10 = scalar_select 0, %s9, %s7
  $region1: #{autoencoder_forward.11} parent=0
    #allocation2 [shape = 'u8[16384]{0}', space=vmem, size = 0x4000, scoped, tag = 'output window, operand 0']
    #allocation3 [shape = 's32[2]{0}', space=sflag, size = 0x8, scoped, tag = 'scoped memory for autoencoder_forward.11']
    %11 = vsyncpa [#allocation3], 0
    %s12 = scalar_lea.sflag [#allocation3], 1
    %13 = vsyncpa %s12, 0
    loop: start=0, step=1, limit=4
    $region2: #{autoencoder_forward.11} parent=1 // loop_pre_header
      _
    $region3: #{autoencoder_forward.11} parent=1 // loop_header
      %s15 = sphi 0, %s19
      %p16 = scmp.ge.s32.totalorder %s15, 4
      %s25 = sphi 0, %s27
      %s28 = sphi 0, %s25
      %s29 = sphi 0, %s28
      %s45 = sphi 0, %s29
      %s49 = sphi 0, %s49
      %s51 = sphi 0, %s49
      %s52 = sphi 0, %s51
      %s66 = sphi 0, %s52
      %s70 = sphi 0, %s70
      %s72 = sphi 0, %s70
      %s73 = sphi 0, %s72
      %s87 = sphi 0, %s73
      %s91 = sphi 0, %s91
      %s93 = sphi 0, %s91
      %s94 = sphi 0, %s93
      %s108 = sphi 0, %s94
      %s112 = sphi 0, %s112
      %s114 = sphi 0, %s112
      %s115 = sphi 0, %s114
      %s129 = sphi 0, %s115
      %s133 = sphi 0, %s133
      %s135 = sphi 0, %s133
      %s136 = sphi 0, %s135
      %s150 = sphi 0, %s136
      %s156 = sphi 0, %s158
      %s159 = sphi 0, %s156
      %s160 = sphi 0, %s159
      %s176 = sphi 0, %s160
    $region4: #{autoencoder_forward.11} parent=1 // loop_header_branch
      %18 = sbr.rel (%p16) target = $region8
    $region5: #{autoencoder_forward.11} parent=1 // loop_body
      %s20 = ssub.s32 %s15, 1
      %s21 = ssub.s32 %s15, 2
      %s22 = sadd.s32 %s15, 1
      %s23 = ssub.s32 %s15, %s22
      %p24 = scmp.eq.s32.totalorder %s23, 0
      %s26 = sadd.s32 %s25, 1
      %s27 = scalar_select %p24, %s25, %s26
      %p30 = pneg %p24
      %p31 = scmp.eq.s32.totalorder %s15, 1
      %p32 = por %p30, %p31
      %p33 = scmp.ne.s32.totalorder %s25, %s28
      %p34 = scmp.eq.s32.totalorder %s15, 0
      %p35 = por %p33, %p34
      %p36 = scmp.ne.s32.totalorder %s25, %s28
      %p37 = scmp.eq.s32.totalorder %s20, 1
      %p38 = por %p36, %p37
      %p39 = scmp.ne.s32.totalorder %s28, %s29
      %p40 = scmp.eq.s32.totalorder %s20, 0
      %p41 = por %p39, %p40
      %p42 = scmp.ne.s32.totalorder %s28, %s29
      %p43 = scmp.eq.s32.totalorder %s21, 1
      %p44 = por %p42, %p43
      %p46 = scmp.ne.s32.totalorder %s29, %s45
      %p47 = scmp.eq.s32.totalorder %s21, 0
      %p48 = por %p46, %p47
      %s50 = sadd.s32 %s49, 1
      %p53 = scmp.eq.s32.totalorder %s15, 1
      %p54 = scmp.ne.s32.totalorder %s49, %s51
      %p55 = scmp.eq.s32.totalorder %s15, 0
      %p56 = por %p54, %p55
      %p57 = scmp.ne.s32.totalorder %s49, %s51
      %p58 = scmp.eq.s32.totalorder %s20, 1
      %p59 = por %p57, %p58
      %p60 = scmp.ne.s32.totalorder %s51, %s52
      %p61 = scmp.eq.s32.totalorder %s20, 0
      %p62 = por %p60, %p61
      %p63 = scmp.ne.s32.totalorder %s51, %s52
      %p64 = scmp.eq.s32.totalorder %s21, 1
      %p65 = por %p63, %p64
      %p67 = scmp.ne.s32.totalorder %s52, %s66
      %p68 = scmp.eq.s32.totalorder %s21, 0
      %p69 = por %p67, %p68
      %s71 = sadd.s32 %s70, 1
      %p74 = scmp.eq.s32.totalorder %s15, 1
      %p75 = scmp.ne.s32.totalorder %s70, %s72
      %p76 = scmp.eq.s32.totalorder %s15, 0
      %p77 = por %p75, %p76
      %p78 = scmp.ne.s32.totalorder %s70, %s72
      %p79 = scmp.eq.s32.totalorder %s20, 1
      %p80 = por %p78, %p79
      %p81 = scmp.ne.s32.totalorder %s72, %s73
      %p82 = scmp.eq.s32.totalorder %s20, 0
      %p83 = por %p81, %p82
      %p84 = scmp.ne.s32.totalorder %s72, %s73
      %p85 = scmp.eq.s32.totalorder %s21, 1
      %p86 = por %p84, %p85
      %p88 = scmp.ne.s32.totalorder %s73, %s87
      %p89 = scmp.eq.s32.totalorder %s21, 0
      %p90 = por %p88, %p89
      %s92 = sadd.s32 %s91, 1
      %p95 = scmp.eq.s32.totalorder %s15, 1
      %p96 = scmp.ne.s32.totalorder %s91, %s93
      %p97 = scmp.eq.s32.totalorder %s15, 0
      %p98 = por %p96, %p97
      %p99 = scmp.ne.s32.totalorder %s91, %s93
      %p100 = scmp.eq.s32.totalorder %s20, 1
      %p101 = por %p99, %p100
      %p102 = scmp.ne.s32.totalorder %s93, %s94
      %p103 = scmp.eq.s32.totalorder %s20, 0
      %p104 = por %p102, %p103
      %p105 = scmp.ne.s32.totalorder %s93, %s94
      %p106 = scmp.eq.s32.totalorder %s21, 1
      %p107 = por %p105, %p106
      %p109 = scmp.ne.s32.totalorder %s94, %s108
      %p110 = scmp.eq.s32.totalorder %s21, 0
      %p111 = por %p109, %p110
      %s113 = sadd.s32 %s112, 1
      %p116 = scmp.eq.s32.totalorder %s15, 1
      %p117 = scmp.ne.s32.totalorder %s112, %s114
      %p118 = scmp.eq.s32.totalorder %s15, 0
      %p119 = por %p117, %p118
      %p120 = scmp.ne.s32.totalorder %s112, %s114
      %p121 = scmp.eq.s32.totalorder %s20, 1
      %p122 = por %p120, %p121
      %p123 = scmp.ne.s32.totalorder %s114, %s115
      %p124 = scmp.eq.s32.totalorder %s20, 0
      %p125 = por %p123, %p124
      %p126 = scmp.ne.s32.totalorder %s114, %s115
      %p127 = scmp.eq.s32.totalorder %s21, 1
      %p128 = por %p126, %p127
      %p130 = scmp.ne.s32.totalorder %s115, %s129
      %p131 = scmp.eq.s32.totalorder %s21, 0
      %p132 = por %p130, %p131
      %s134 = sadd.s32 %s133, 1
      %p137 = scmp.eq.s32.totalorder %s15, 1
      %p138 = scmp.ne.s32.totalorder %s133, %s135
      %p139 = scmp.eq.s32.totalorder %s15, 0
      %p140 = por %p138, %p139
      %p141 = scmp.ne.s32.totalorder %s133, %s135
      %p142 = scmp.eq.s32.totalorder %s20, 1
      %p143 = por %p141, %p142
      %p144 = scmp.ne.s32.totalorder %s135, %s136
      %p145 = scmp.eq.s32.totalorder %s20, 0
      %p146 = por %p144, %p145
      %p147 = scmp.ne.s32.totalorder %s135, %s136
      %p148 = scmp.eq.s32.totalorder %s21, 1
      %p149 = por %p147, %p148
      %p151 = scmp.ne.s32.totalorder %s136, %s150
      %p152 = scmp.eq.s32.totalorder %s21, 0
      %p153 = por %p151, %p152
      %s154 = ssub.s32 %s15, %s22
      %p155 = scmp.eq.s32.totalorder %s154, 0
      %s157 = sadd.s32 %s156, 1
      %s158 = scalar_select %p155, %s156, %s157
      %p161 = pneg %p155
      %p162 = scmp.eq.s32.totalorder %s15, 1
      %p163 = por %p161, %p162
      %p164 = scmp.ne.s32.totalorder %s156, %s159
      %p165 = scmp.eq.s32.totalorder %s15, 0
      %p166 = por %p164, %p165
      %p167 = scmp.ne.s32.totalorder %s156, %s159
      %p168 = scmp.eq.s32.totalorder %s20, 1
      %p169 = por %p167, %p168
      %p170 = scmp.ne.s32.totalorder %s159, %s160
      %p171 = scmp.eq.s32.totalorder %s20, 0
      %p172 = por %p170, %p171
      %p173 = scmp.ne.s32.totalorder %s159, %s160
      %p174 = scmp.eq.s32.totalorder %s21, 1
      %p175 = por %p173, %p174
      %p177 = scmp.ne.s32.totalorder %s160, %s176
      %p178 = scmp.eq.s32.totalorder %s21, 0
      %p179 = por %p177, %p178
      %p180 = scmp.le.s32.totalorder 1, %s15
      %p181 = scmp.lt.s32.totalorder %s15, 3
      %p182 = pnand %p180, %p181
      %p183 = pneg %p182
      // Predicated region
      $region9: #{autoencoder_forward.11} parent=5 // pred_check
        _
      $region10: #{autoencoder_forward.11} parent=5 // pred_check_branch
        %185 = sbr.rel (%p182) target = $region12
      $region11: #{autoencoder_forward.11} parent=5 // pred_region
        %s186 = ssub.s32 %s15, 1
        // Predicated region
        $region13: #{autoencoder_forward.11} parent=11 // pred_check
          %p187 = pneg %p62
        $region14: #{autoencoder_forward.11} parent=11 // pred_check_branch
          %189 = sbr.rel (%p187) target = $region16
        $region15: #{autoencoder_forward.11} parent=11 // pred_region
          _
        $region16: #{autoencoder_forward.11} parent=11 // pred_fallthru
          _
        // Predicated region
        $region17: #{autoencoder_forward.11} parent=11 // pred_check
          %p190 = pneg %p83
        $region18: #{autoencoder_forward.11} parent=11 // pred_check_branch
          %192 = sbr.rel (%p190) target = $region20
        $region19: #{autoencoder_forward.11} parent=11 // pred_region
          _
        $region20: #{autoencoder_forward.11} parent=11 // pred_fallthru
          _
        // Predicated region
        $region21: #{autoencoder_forward.11} parent=11 // pred_check
          %p193 = pneg %p104
        $region22: #{autoencoder_forward.11} parent=11 // pred_check_branch
          %195 = sbr.rel (%p193) target = $region24
        $region23: #{autoencoder_forward.11} parent=11 // pred_region
          _
        $region24: #{autoencoder_forward.11} parent=11 // pred_fallthru
          _
        // Predicated region
        $region25: #{autoencoder_forward.11} parent=11 // pred_check
          %p196 = pneg %p125
        $region26: #{autoencoder_forward.11} parent=11 // pred_check_branch
          %198 = sbr.rel (%p196) target = $region28
        $region27: #{autoencoder_forward.11} parent=11 // pred_region
          _
        $region28: #{autoencoder_forward.11} parent=11 // pred_fallthru
          _
        // Predicated region
        $region29: #{autoencoder_forward.11} parent=11 // pred_check
          %p199 = pneg %p146
        $region30: #{autoencoder_forward.11} parent=11 // pred_check_branch
          %201 = sbr.rel (%p199) target = $region32
        $region31: #{autoencoder_forward.11} parent=11 // pred_region
          _
        $region32: #{autoencoder_forward.11} parent=11 // pred_fallthru
          _
      $region12: #{autoencoder_forward.11} parent=5 // pred_fallthru
        _
      %p202 = scmp.lt.s32.totalorder %s15, 2
      // Predicated region
      $region33: #{autoencoder_forward.11} parent=5 // pred_check
        %p203 = pneg %p202
      $region34: #{autoencoder_forward.11} parent=5 // pred_check_branch
        %205 = sbr.rel (%p203) target = $region36
      $region35: #{autoencoder_forward.11} parent=5 // pred_region
        // Predicated region
        $region37: #{autoencoder_forward.11} parent=35 // pred_check
          %p206 = pneg %p35
        $region38: #{autoencoder_forward.11} parent=35 // pred_check_branch
          %208 = sbr.rel (%p206) target = $region40
        $region39: #{autoencoder_forward.11} parent=35 // pred_region
          %p209 = scmp.lt.s32.totalorder %s15, 1
          %s210 = scalar_select %p209, %s15, 1
          %s211 = smul.addr %s210, 8
          %s212 = scalar_lea.vmem %s0, %s211
        $region40: #{autoencoder_forward.11} parent=35 // pred_fallthru
          _
      $region36: #{autoencoder_forward.11} parent=5 // pred_fallthru
        _
      %p213 = scmp.le.s32.totalorder 1, %s15
      %p214 = scmp.lt.s32.totalorder %s15, 3
      %p215 = pnand %p213, %p214
      %p216 = pneg %p215
      // Predicated region
      $region41: #{autoencoder_forward.11} parent=5 // pred_check
        _
      $region42: #{autoencoder_forward.11} parent=5 // pred_check_branch
        %218 = sbr.rel (%p215) target = $region44
      $region43: #{autoencoder_forward.11} parent=5 // pred_region
        %s219 = ssub.s32 %s15, 1
        %p220 = scmp.lt.s32.totalorder %s20, 1
        %s221 = scalar_select %p220, %s20, 1
        %s222 = smul.addr %s221, 8
        %s223 = scalar_lea.vmem %s0, %s222
        %p224 = pneg %p41
        %p225 = pneg %p38
        %p226 = pneg %p62
        %p227 = pneg %p59
        %p228 = pneg %p83
        %p229 = pneg %p80
        %p230 = pneg %p104
        %p231 = pneg %p101
        %p232 = pneg %p125
        %p233 = pneg %p122
        %p234 = pneg %p146
        %p235 = pneg %p143
        %p236 = pneg %p172
        %p237 = pneg %p169
        %s238 = sand.u32 %s159, 1
        %s239 = scalar_lea.sflag [#allocation3], %s238
        %s240 = sand.u32 %s159, 1
        %s241 = smul.addr %s240, 16
        %s242 = scalar_lea.vmem [#allocation2], %s241
        %p243 = scmp.lt.s32.totalorder %s20, 1
        %s244 = scalar_select %p243, %s20, 1
        %s245 = smul.addr %s244, 8
        %s246 = scalar_lea.vmem %s0, %s245
        %v248 = vld [vmem:[%s246] sm:$0xff]
        %v249 = vld [vmem:[%s3] sm:$0x1]
        %v251 = vlaneseq
        %v252 = vshrl.u32 %v251, 7
        %v253 = vsub.s32 0, %v252
        %v254 = vrot.slane %v249, %v253
        %v256 = vmul.f32 %v248, %v254
        %v257 = vld [vmem:[%s4] sm:$0x1]
        %v259 = vlaneseq
        %v260 = vshrl.u32 %v259, 7
        %v261 = vsub.s32 0, %v260
        %v262 = vrot.slane %v257, %v261
        %v264 = vadd.f32 %v256, %v262
        %v265 = vmax.f32 %v264, 0.0
        %v266 = vpack.c.bf16 %v265, %v265
        %v267 = vld [vmem:[%s2] sm:$0xf]
        %v268 = vld [vmem:[%s2 + $0x4] sm:$0xf]
        %v269 = vld [vmem:[%s2 + $0x8] sm:$0xf]
        %v270 = vld [vmem:[%s2 + $0xc] sm:$0xf]
        %v271 = vld [vmem:[%s2 + $0x10] sm:$0xf]
        %v272 = vld [vmem:[%s2 + $0x14] sm:$0xf]
        %v273 = vld [vmem:[%s2 + $0x18] sm:$0xf]
        %v274 = vld [vmem:[%s2 + $0x1c] sm:$0xf]
        %v275 = vld [vmem:[%s2 + $0x20] sm:$0xf]
        %v276 = vld [vmem:[%s2 + $0x24] sm:$0xf]
        %v277 = vld [vmem:[%s2 + $0x28] sm:$0xf]
        %v278 = vld [vmem:[%s2 + $0x2c] sm:$0xf]
        %v279 = vld [vmem:[%s2 + $0x30] sm:$0xf]
        %v280 = vld [vmem:[%s2 + $0x34] sm:$0xf]
        %v281 = vld [vmem:[%s2 + $0x38] sm:$0xf]
        %v282 = vld [vmem:[%s2 + $0x3c] sm:$0xf]
        %v299 = vunpack.c.l.b16 %v267
        %v300 = vunpack.c.l.b16 %v268
        %v301 = vunpack.c.l.b16 %v269
        %v302 = vunpack.c.l.b16 %v270
        %v303 = vunpack.c.l.b16 %v271
        %v304 = vunpack.c.l.b16 %v272
        %v305 = vunpack.c.l.b16 %v273
        %v306 = vunpack.c.l.b16 %v274
        %v307 = vunpack.c.l.b16 %v275
        %v308 = vunpack.c.l.b16 %v276
        %v309 = vunpack.c.l.b16 %v277
        %v310 = vunpack.c.l.b16 %v278
        %v311 = vunpack.c.l.b16 %v279
        %v312 = vunpack.c.l.b16 %v280
        %v313 = vunpack.c.l.b16 %v281
        %v314 = vunpack.c.l.b16 %v282
        %v315 = vpack.c.b16 %v300, %v299
        %v316 = vpack.c.b16 %v302, %v301
        %v317 = vpack.c.b16 %v304, %v303
        %v318 = vpack.c.b16 %v306, %v305
        %v319 = vpack.c.b16 %v308, %v307
        %v320 = vpack.c.b16 %v310, %v309
        %v321 = vpack.c.b16 %v312, %v311
        %v322 = vpack.c.b16 %v314, %v313
        %331 = vmatprep.subr.bf16.mxu0 0
        %332 = vmatpush1.bf16.msra.mxu0 %v315
        %333 = vmatprep.subr.bf16.mxu0 0
        %334 = vmatpush1.bf16.msra.mxu0 %v316
        %335 = vmatprep.subr.bf16.mxu0 0
        %336 = vmatpush1.bf16.msra.mxu0 %v317
        %337 = vmatprep.subr.bf16.mxu0 0
        %338 = vmatpush1.bf16.msra.mxu0 %v318
        %339 = vmatprep.subr.bf16.mxu0 0
        %340 = vmatpush1.bf16.msra.mxu0 %v319
        %341 = vmatprep.subr.bf16.mxu0 0
        %342 = vmatpush1.bf16.msra.mxu0 %v320
        %343 = vmatprep.subr.bf16.mxu0 0
        %344 = vmatpush1.bf16.msra.mxu0 %v321
        %345 = vmatprep.subr.bf16.mxu0 0
        %346 = vmatpush1.bf16.msra.mxu0 %v322
        %347 = vmatprep.subr.bf16.mxu0 0
        %348 = vmatpush1.bf16.msra.mxu0 0
        %349 = vmatprep.subr.bf16.mxu0 0
        %350 = vmatpush1.bf16.msra.mxu0 0
        %351 = vmatprep.subr.bf16.mxu0 0
        %352 = vmatpush1.bf16.msra.mxu0 0
        %353 = vmatprep.subr.bf16.mxu0 0
        %354 = vmatpush1.bf16.msra.mxu0 0
        %355 = vmatprep.subr.bf16.mxu0 0
        %356 = vmatpush1.bf16.msra.mxu0 0
        %357 = vmatprep.subr.bf16.mxu0 0
        %358 = vmatpush1.bf16.msra.mxu0 0
        %359 = vmatprep.subr.bf16.mxu0 0
        %360 = vmatpush1.bf16.msra.mxu0 0
        %361 = vmatprep.subr.bf16.mxu0 0
        %362 = vmatpush1.bf16.msra.mxu0 0
        %363 = vmatprep.mubr.bf16.mxu0 0
        %364 = vmatmul.mubr.bf16.gmra.mrb[0].mxu0 %v266
        %v365 = vpop.f32.mrb[0].mxu0
        %v366 = vadd.f32 0.0, %v365
        %v367 = vpop.f32.mrb[0].mxu0
        %v368 = vpop.f32.mrb[0].mxu0
        %v369 = vpop.f32.mrb[0].mxu0
        %370 = vdwg.mxu0
        %v371 = vld [vmem:[%s1] sm:$0xf]
        %v372 = vld [vmem:[%s1 + $0x4] sm:$0xf]
        %v373 = vpack.c.bf16 %v366, %v366
        %s374 = scalar_lea.vmem %s2, 64
        %v375 = vld [vmem:[%s374] sm:$0xf]
        %v376 = vld [vmem:[%s374 + $0x4] sm:$0xf]
        %v377 = vld [vmem:[%s374 + $0x8] sm:$0xf]
        %v378 = vld [vmem:[%s374 + $0xc] sm:$0xf]
        %v379 = vld [vmem:[%s374 + $0x10] sm:$0xf]
        %v380 = vld [vmem:[%s374 + $0x14] sm:$0xf]
        %v381 = vld [vmem:[%s374 + $0x18] sm:$0xf]
        %v382 = vld [vmem:[%s374 + $0x1c] sm:$0xf]
        %v383 = vld [vmem:[%s374 + $0x20] sm:$0xf]
        %v384 = vld [vmem:[%s374 + $0x24] sm:$0xf]
        %v385 = vld [vmem:[%s374 + $0x28] sm:$0xf]
        %v386 = vld [vmem:[%s374 + $0x2c] sm:$0xf]
        %v387 = vld [vmem:[%s374 + $0x30] sm:$0xf]
        %v388 = vld [vmem:[%s374 + $0x34] sm:$0xf]
        %v389 = vld [vmem:[%s374 + $0x38] sm:$0xf]
        %v390 = vld [vmem:[%s374 + $0x3c] sm:$0xf]
        %v407 = vunpack.c.l.b16 %v375
        %v408 = vunpack.c.l.b16 %v376
        %v409 = vunpack.c.l.b16 %v377
        %v410 = vunpack.c.l.b16 %v378
        %v411 = vunpack.c.l.b16 %v379
        %v412 = vunpack.c.l.b16 %v380
        %v413 = vunpack.c.l.b16 %v381
        %v414 = vunpack.c.l.b16 %v382
        %v415 = vunpack.c.l.b16 %v383
        %v416 = vunpack.c.l.b16 %v384
        %v417 = vunpack.c.l.b16 %v385
        %v418 = vunpack.c.l.b16 %v386
        %v419 = vunpack.c.l.b16 %v387
        %v420 = vunpack.c.l.b16 %v388
        %v421 = vunpack.c.l.b16 %v389
        %v422 = vunpack.c.l.b16 %v390
        %v423 = vpack.c.b16 %v408, %v407
        %v424 = vpack.c.b16 %v410, %v409
        %v425 = vpack.c.b16 %v412, %v411
        %v426 = vpack.c.b16 %v414, %v413
        %v427 = vpack.c.b16 %v416, %v415
        %v428 = vpack.c.b16 %v418, %v417
        %v429 = vpack.c.b16 %v420, %v419
        %v430 = vpack.c.b16 %v422, %v421
        %439 = vmatprep.subr.bf16.mxu0 0
        %440 = vmatpush1.bf16.msra.mxu0 %v423
        %441 = vmatprep.subr.bf16.mxu0 0
        %442 = vmatpush1.bf16.msra.mxu0 %v424
        %443 = vmatprep.subr.bf16.mxu0 0
        %444 = vmatpush1.bf16.msra.mxu0 %v425
        %445 = vmatprep.subr.bf16.mxu0 0
        %446 = vmatpush1.bf16.msra.mxu0 %v426
        %447 = vmatprep.subr.bf16.mxu0 0
        %448 = vmatpush1.bf16.msra.mxu0 %v427
        %449 = vmatprep.subr.bf16.mxu0 0
        %450 = vmatpush1.bf16.msra.mxu0 %v428
        %451 = vmatprep.subr.bf16.mxu0 0
        %452 = vmatpush1.bf16.msra.mxu0 %v429
        %453 = vmatprep.subr.bf16.mxu0 0
        %454 = vmatpush1.bf16.msra.mxu0 %v430
        %455 = vmatprep.subr.bf16.mxu0 0
        %456 = vmatpush1.bf16.msra.mxu0 0
        %457 = vmatprep.subr.bf16.mxu0 0
        %458 = vmatpush1.bf16.msra.mxu0 0
        %459 = vmatprep.subr.bf16.mxu0 0
        %460 = vmatpush1.bf16.msra.mxu0 0
        %461 = vmatprep.subr.bf16.mxu0 0
        %462 = vmatpush1.bf16.msra.mxu0 0
        %463 = vmatprep.subr.bf16.mxu0 0
        %464 = vmatpush1.bf16.msra.mxu0 0
        %465 = vmatprep.subr.bf16.mxu0 0
        %466 = vmatpush1.bf16.msra.mxu0 0
        %467 = vmatprep.subr.bf16.mxu0 0
        %468 = vmatpush1.bf16.msra.mxu0 0
        %469 = vmatprep.subr.bf16.mxu0 0
        %470 = vmatpush1.bf16.msra.mxu0 0
        %471 = vmatprep.mubr.bf16.mxu0 0
        %472 = vmatmul.mubr.bf16.gmra.mrb[0].mxu0 %v266
        %v473 = vpop.f32.mrb[0].mxu0
        %v474 = vadd.f32 0.0, %v473
        %v475 = vpop.f32.mrb[0].mxu0
        %v476 = vpop.f32.mrb[0].mxu0
        %v477 = vpop.f32.mrb[0].mxu0
        %478 = vdwg.mxu0
        %s479 = scalar_lea.vmem %s1, 8
        %v480 = vld [vmem:[%s479] sm:$0xf]
        %v481 = vld [vmem:[%s479 + $0x4] sm:$0xf]
        %v482 = vpack.c.bf16 %v474, %v474
        %v485 = vunpack.c.l.b16 %v480
        %v486 = vunpack.c.l.b16 %v481
        %v487 = vpack.c.b16 %v486, %v485
        %vm488 = vcmask 64512
        %v490 = vsel %vm488, %v487, 0
        %vm492 = vcmask 1043456
        %v494 = vsel %vm492, %v482, 0
        %496 = vmatprep.subr.bf16.mxu0 0
        %497 = vmatpush1.bf16.msra.mxu0 %v494
        %498 = vmatprep.subr.bf16.mxu0 0
        %499 = vmatpush1.bf16.msra.mxu0 0
        %500 = vmatprep.subr.bf16.mxu0 0
        %501 = vmatpush1.bf16.msra.mxu0 0
        %502 = vmatprep.subr.bf16.mxu0 0
        %503 = vmatpush1.bf16.msra.mxu0 0
        %504 = vmatprep.subr.bf16.mxu0 0
        %505 = vmatpush1.bf16.msra.mxu0 0
        %506 = vmatprep.subr.bf16.mxu0 0
        %507 = vmatpush1.bf16.msra.mxu0 0
        %508 = vmatprep.subr.bf16.mxu0 0
        %509 = vmatpush1.bf16.msra.mxu0 0
        %510 = vmatprep.subr.bf16.mxu0 0
        %511 = vmatpush1.bf16.msra.mxu0 0
        %512 = vmatprep.subr.bf16.mxu0 0
        %513 = vmatpush1.bf16.msra.mxu0 0
        %514 = vmatprep.subr.bf16.mxu0 0
        %515 = vmatpush1.bf16.msra.mxu0 0
        %516 = vmatprep.subr.bf16.mxu0 0
        %517 = vmatpush1.bf16.msra.mxu0 0
        %518 = vmatprep.subr.bf16.mxu0 0
        %519 = vmatpush1.bf16.msra.mxu0 0
        %520 = vmatprep.subr.bf16.mxu0 0
        %521 = vmatpush1.bf16.msra.mxu0 0
        %522 = vmatprep.subr.bf16.mxu0 0
        %523 = vmatpush1.bf16.msra.mxu0 0
        %524 = vmatprep.subr.bf16.mxu0 0
        %525 = vmatpush1.bf16.msra.mxu0 0
        %526 = vmatprep.subr.bf16.mxu0 0
        %527 = vmatpush1.bf16.msra.mxu0 0
        %528 = vmatprep.mubr.bf16.mxu0 0
        %529 = vmatmul.mubr.bf16.gmra.mrb[0].mxu0 %v490
        %v530 = vpop.f32.mrb[0].mxu0
        %v531 = vadd.f32 0.0, %v530
        %v532 = vpop.f32.mrb[0].mxu0
        %v533 = vpop.f32.mrb[0].mxu0
        %v534 = vadd.f32 0.0, %v533
        %v535 = vpop.f32.mrb[0].mxu0
        %536 = vdwg.mxu0
        %v539 = vunpack.c.l.b16 %v371
        %v540 = vunpack.c.l.b16 %v372
        %v541 = vpack.c.b16 %v540, %v539
        %v543 = vsel %vm488, %v541, 0
        %v546 = vsel %vm492, %v373, 0
        %548 = vmatprep.subr.bf16.mxu0 0
        %549 = vmatpush1.bf16.msra.mxu0 %v546
        %550 = vmatprep.subr.bf16.mxu0 0
        %551 = vmatpush1.bf16.msra.mxu0 0
        %552 = vmatprep.subr.bf16.mxu0 0
        %553 = vmatpush1.bf16.msra.mxu0 0
        %554 = vmatprep.subr.bf16.mxu0 0
        %555 = vmatpush1.bf16.msra.mxu0 0
        %556 = vmatprep.subr.bf16.mxu0 0
        %557 = vmatpush1.bf16.msra.mxu0 0
        %558 = vmatprep.subr.bf16.mxu0 0
        %559 = vmatpush1.bf16.msra.mxu0 0
        %560 = vmatprep.subr.bf16.mxu0 0
        %561 = vmatpush1.bf16.msra.mxu0 0
        %562 = vmatprep.subr.bf16.mxu0 0
        %563 = vmatpush1.bf16.msra.mxu0 0
        %564 = vmatprep.subr.bf16.mxu0 0
        %565 = vmatpush1.bf16.msra.mxu0 0
        %566 = vmatprep.subr.bf16.mxu0 0
        %567 = vmatpush1.bf16.msra.mxu0 0
        %568 = vmatprep.subr.bf16.mxu0 0
        %569 = vmatpush1.bf16.msra.mxu0 0
        %570 = vmatprep.subr.bf16.mxu0 0
        %571 = vmatpush1.bf16.msra.mxu0 0
        %572 = vmatprep.subr.bf16.mxu0 0
        %573 = vmatpush1.bf16.msra.mxu0 0
        %574 = vmatprep.subr.bf16.mxu0 0
        %575 = vmatpush1.bf16.msra.mxu0 0
        %576 = vmatprep.subr.bf16.mxu0 0
        %577 = vmatpush1.bf16.msra.mxu0 0
        %578 = vmatprep.subr.bf16.mxu0 0
        %579 = vmatpush1.bf16.msra.mxu0 0
        %580 = vmatprep.mubr.bf16.mxu0 0
        %581 = vmatmul.mubr.bf16.gmra.mrb[0].mxu0 %v543
        %v582 = vpop.f32.mrb[0].mxu0
        %v583 = vadd.f32 %v531, %v582
        %v584 = vpop.f32.mrb[0].mxu0
        %v585 = vpop.f32.mrb[0].mxu0
        %v586 = vadd.f32 %v534, %v585
        %v587 = vpop.f32.mrb[0].mxu0
        %588 = vdwg.mxu0
        %s589 = scalar_lea.vmem %s2, 128
        %v590 = vld [vmem:[%s589] sm:$0xf]
        %v591 = vld [vmem:[%s589 + $0x4] sm:$0xf]
        %v592 = vld [vmem:[%s589 + $0x8] sm:$0xf]
        %v593 = vld [vmem:[%s589 + $0xc] sm:$0xf]
        %v594 = vld [vmem:[%s589 + $0x10] sm:$0xf]
        %v595 = vld [vmem:[%s589 + $0x14] sm:$0xf]
        %v596 = vld [vmem:[%s589 + $0x18] sm:$0xf]
        %v597 = vld [vmem:[%s589 + $0x1c] sm:$0xf]
        %v598 = vld [vmem:[%s589 + $0x20] sm:$0xf]
        %v599 = vld [vmem:[%s589 + $0x24] sm:$0xf]
        %v600 = vld [vmem:[%s589 + $0x28] sm:$0xf]
        %v601 = vld [vmem:[%s589 + $0x2c] sm:$0xf]
        %v602 = vld [vmem:[%s589 + $0x30] sm:$0xf]
        %v603 = vld [vmem:[%s589 + $0x34] sm:$0xf]
        %v604 = vld [vmem:[%s589 + $0x38] sm:$0xf]
        %v605 = vld [vmem:[%s589 + $0x3c] sm:$0xf]
        %v622 = vunpack.c.l.b16 %v590
        %v623 = vunpack.c.l.b16 %v591
        %v624 = vunpack.c.l.b16 %v592
        %v625 = vunpack.c.l.b16 %v593
        %v626 = vunpack.c.l.b16 %v594
        %v627 = vunpack.c.l.b16 %v595
        %v628 = vunpack.c.l.b16 %v596
        %v629 = vunpack.c.l.b16 %v597
        %v630 = vunpack.c.l.b16 %v598
        %v631 = vunpack.c.l.b16 %v599
        %v632 = vunpack.c.l.b16 %v600
        %v633 = vunpack.c.l.b16 %v601
        %v634 = vunpack.c.l.b16 %v602
        %v635 = vunpack.c.l.b16 %v603
        %v636 = vunpack.c.l.b16 %v604
        %v637 = vunpack.c.l.b16 %v605
        %v638 = vpack.c.b16 %v623, %v622
        %v639 = vpack.c.b16 %v625, %v624
        %v640 = vpack.c.b16 %v627, %v626
        %v641 = vpack.c.b16 %v629, %v628
        %v642 = vpack.c.b16 %v631, %v630
        %v643 = vpack.c.b16 %v633, %v632
        %v644 = vpack.c.b16 %v635, %v634
        %v645 = vpack.c.b16 %v637, %v636
        %654 = vmatprep.subr.bf16.mxu0 0
        %655 = vmatpush1.bf16.msra.mxu0 %v638
        %656 = vmatprep.subr.bf16.mxu0 0
        %657 = vmatpush1.bf16.msra.mxu0 %v639
        %658 = vmatprep.subr.bf16.mxu0 0
        %659 = vmatpush1.bf16.msra.mxu0 %v640
        %660 = vmatprep.subr.bf16.mxu0 0
        %661 = vmatpush1.bf16.msra.mxu0 %v641
        %662 = vmatprep.subr.bf16.mxu0 0
        %663 = vmatpush1.bf16.msra.mxu0 %v642
        %664 = vmatprep.subr.bf16.mxu0 0
        %665 = vmatpush1.bf16.msra.mxu0 %v643
        %666 = vmatprep.subr.bf16.mxu0 0
        %667 = vmatpush1.bf16.msra.mxu0 %v644
        %668 = vmatprep.subr.bf16.mxu0 0
        %669 = vmatpush1.bf16.msra.mxu0 %v645
        %670 = vmatprep.subr.bf16.mxu0 0
        %671 = vmatpush1.bf16.msra.mxu0 0
        %672 = vmatprep.subr.bf16.mxu0 0
        %673 = vmatpush1.bf16.msra.mxu0 0
        %674 = vmatprep.subr.bf16.mxu0 0
        %675 = vmatpush1.bf16.msra.mxu0 0
        %676 = vmatprep.subr.bf16.mxu0 0
        %677 = vmatpush1.bf16.msra.mxu0 0
        %678 = vmatprep.subr.bf16.mxu0 0
        %679 = vmatpush1.bf16.msra.mxu0 0
        %680 = vmatprep.subr.bf16.mxu0 0
        %681 = vmatpush1.bf16.msra.mxu0 0
        %682 = vmatprep.subr.bf16.mxu0 0
        %683 = vmatpush1.bf16.msra.mxu0 0
        %684 = vmatprep.subr.bf16.mxu0 0
        %685 = vmatpush1.bf16.msra.mxu0 0
        %686 = vmatprep.mubr.bf16.mxu0 0
        %687 = vmatmul.mubr.bf16.gmra.mrb[0].mxu0 %v266
        %v688 = vpop.f32.mrb[0].mxu0
        %v689 = vadd.f32 0.0, %v688
        %v690 = vpop.f32.mrb[0].mxu0
        %v691 = vpop.f32.mrb[0].mxu0
        %v692 = vpop.f32.mrb[0].mxu0
        %693 = vdwg.mxu0
        %s694 = scalar_lea.vmem %s1, 16
        %v695 = vld [vmem:[%s694] sm:$0xf]
        %v696 = vld [vmem:[%s694 + $0x4] sm:$0xf]
        %v697 = vpack.c.bf16 %v689, %v689
        %v700 = vunpack.c.l.b16 %v695
        %v701 = vunpack.c.l.b16 %v696
        %v702 = vpack.c.b16 %v701, %v700
        %v704 = vsel %vm488, %v702, 0
        %v707 = vsel %vm492, %v697, 0
        %709 = vmatprep.subr.bf16.mxu0 0
        %710 = vmatpush1.bf16.msra.mxu0 %v707
        %711 = vmatprep.subr.bf16.mxu0 0
        %712 = vmatpush1.bf16.msra.mxu0 0
        %713 = vmatprep.subr.bf16.mxu0 0
        %714 = vmatpush1.bf16.msra.mxu0 0
        %715 = vmatprep.subr.bf16.mxu0 0
        %716 = vmatpush1.bf16.msra.mxu0 0
        %717 = vmatprep.subr.bf16.mxu0 0
        %718 = vmatpush1.bf16.msra.mxu0 0
        %719 = vmatprep.subr.bf16.mxu0 0
        %720 = vmatpush1.bf16.msra.mxu0 0
        %721 = vmatprep.subr.bf16.mxu0 0
        %722 = vmatpush1.bf16.msra.mxu0 0
        %723 = vmatprep.subr.bf16.mxu0 0
        %724 = vmatpush1.bf16.msra.mxu0 0
        %725 = vmatprep.subr.bf16.mxu0 0
        %726 = vmatpush1.bf16.msra.mxu0 0
        %727 = vmatprep.subr.bf16.mxu0 0
        %728 = vmatpush1.bf16.msra.mxu0 0
        %729 = vmatprep.subr.bf16.mxu0 0
        %730 = vmatpush1.bf16.msra.mxu0 0
        %731 = vmatprep.subr.bf16.mxu0 0
        %732 = vmatpush1.bf16.msra.mxu0 0
        %733 = vmatprep.subr.bf16.mxu0 0
        %734 = vmatpush1.bf16.msra.mxu0 0
        %735 = vmatprep.subr.bf16.mxu0 0
        %736 = vmatpush1.bf16.msra.mxu0 0
        %737 = vmatprep.subr.bf16.mxu0 0
        %738 = vmatpush1.bf16.msra.mxu0 0
        %739 = vmatprep.subr.bf16.mxu0 0
        %740 = vmatpush1.bf16.msra.mxu0 0
        %741 = vmatprep.mubr.bf16.mxu0 0
        %742 = vmatmul.mubr.bf16.gmra.mrb[0].mxu0 %v704
        %v743 = vpop.f32.mrb[0].mxu0
        %v744 = vadd.f32 0.0, %v743
        %v745 = vpop.f32.mrb[0].mxu0
        %v746 = vpop.f32.mrb[0].mxu0
        %v747 = vadd.f32 0.0, %v746
        %v748 = vpop.f32.mrb[0].mxu0
        %749 = vdwg.mxu0
        %v750 = vadd.f32 %v583, %v744
        %v751 = vadd.f32 %v586, %v747
        %v752 = vld [vmem:[%s5] sm:$0x1]
        %v754 = vlaneseq
        %v755 = vshrl.u32 %v754, 7
        %v756 = vsub.s32 0, %v755
        %v757 = vrot.slane %v752, %v756
        %v759 = vadd.f32 %v750, %v757
        %v760 = vadd.f32 %v751, %v757
        %v761 = vxor.u32 %v759, 2147483648
        %v762 = vxor.u32 %v760, 2147483648
        %v763 = vmul.f32 %v761, 1.442695
        %v764 = vpow.pop %v763
        %v765 = vmul.f32 %v762, 1.442695
        %v766 = vpow.pop %v765
        %v767 = vadd.f32 %v764, 1.0
        %v768 = vadd.f32 %v766, 1.0
        %v769 = vrcp.pop %v767
        %v770 = vmul.f32 1.0, %v769
        %v771 = vrcp.pop %v768
        %v772 = vmul.f32 1.0, %v771
        %vm773 = vcmask 130048
        %774 = vst.msk [vmem:[%s242] sm:$0xff] %vm773, %v770
        %775 = vst.msk [vmem:[%s242 + $0x8] sm:$0xff] %vm773, %v772
        %s776 = sand.u32 %s159, 1
        %s777 = scalar_lea.sflag [#allocation3], %s776
        %s778 = sand.u32 %s159, 1
        %s779 = smul.addr %s778, 16
        %s780 = scalar_lea.vmem [#allocation2], %s779
        // Predicated region
        $region45: #{autoencoder_forward.11} parent=43 // pred_check
          %p781 = pneg %p169
        $region46: #{autoencoder_forward.11} parent=43 // pred_check_branch
          %783 = sbr.rel (%p781) target = $region48
        $region47: #{autoencoder_forward.11} parent=43 // pred_region
          %s785 = ssub.s32 256, 256
          %786 = vsyncadd %s777, %s785
          %s787 = smul.addr %s20, 2
          %s788 = smul.addr %s787, 128
          %s789 = scalar_lea.hbm %s6, %s788
          %s790 = sshll.u32 %s780, 4
          %s791 = int_to_ptr.vmem [resolvable:$true] %s790
          %796 = dma.vmem_to_hbm [thread:$0]  %s791, 256, %s789, %s777, 128, 128, 8
        $region48: #{autoencoder_forward.11} parent=43 // pred_fallthru
          _
      $region44: #{autoencoder_forward.11} parent=5 // pred_fallthru
        _
      %p797 = scmp.le.s32.totalorder 2, %s15
      // Predicated region
      $region49: #{autoencoder_forward.11} parent=5 // pred_check
        %p798 = pneg %p797
      $region50: #{autoencoder_forward.11} parent=5 // pred_check_branch
        %800 = sbr.rel (%p798) target = $region52
      $region51: #{autoencoder_forward.11} parent=5 // pred_region
        %s801 = ssub.s32 %s15, 2
        // Predicated region
        $region53: #{autoencoder_forward.11} parent=51 // pred_check
          %p802 = pneg %p175
        $region54: #{autoencoder_forward.11} parent=51 // pred_check_branch
          %804 = sbr.rel (%p802) target = $region56
        $region55: #{autoencoder_forward.11} parent=51 // pred_region
          %s805 = sand.u32 %s160, 1
          %s806 = scalar_lea.sflag [#allocation3], %s805
          %s807 = sand.u32 %s160, 1
          %s808 = smul.addr %s807, 16
          %s809 = scalar_lea.vmem [#allocation2], %s808
          %810 = dma.done %s806, 256
        $region56: #{autoencoder_forward.11} parent=51 // pred_fallthru
          _
      $region52: #{autoencoder_forward.11} parent=5 // pred_fallthru
        _
    $region6: #{autoencoder_forward.11} parent=1 // loop_footer
      %s19 = sadd.s32 1, %s15
    $region7: #{autoencoder_forward.11} parent=1 // loop_footer_branch
      %14 = sbr.rel target = $region3
    $region8: #{autoencoder_forward.11} parent=1 // loop_exit
      _
    %811 = vsyncpa [#allocation3], 1
    %s812 = scalar_lea.sflag [#allocation3], 1
    %813 = vsyncpa %s812, 1

</llo_original>
